<compile_context>
chip_gen: v7x
topology: tpu7x:2x2x1
jax: 0.10.0
libtpu: 0.0.40
codegen_flags: <defaults>
</compile_context>

<pallas_src>
import jax
import jax.numpy as jnp
from jax.experimental import pallas as pl
from jax.experimental.pallas import tpu as pltpu

EPS = 1e-5  # PyTorch default eps for BatchNorm2d / InstanceNorm2d

_COMPILER_PARAMS = pltpu.CompilerParams(
    dimension_semantics=("parallel",),        # batch axis: independent per sample
    vmem_limit_bytes=32 * 1024 * 1024,        # explicit budget, fits v5e/v6e/v7x
)


# --------------------------------------------------------------------------- #
# Kernels (all NHWC, one batch sample per grid step)                           #
# --------------------------------------------------------------------------- #
def _conv1_kernel(x_ref, w1_ref, o1_ref, st1_ref):
    """conv1 (1x1 == channel matmul) + per-sample sum/sumsq for bn1 (BN half)."""
    _, H, W, Cin = x_ref.shape
    P = w1_ref.shape[1]
    HW = H * W
    x = x_ref[...].reshape(HW, Cin).astype(jnp.bfloat16)
    o1 = jnp.dot(x, w1_ref[...], preferred_element_type=jnp.float32)     # (HW,P) f32
    o1_ref[...] = o1.reshape(1, H, W, P).astype(o1_ref.dtype)
    st1_ref[...] = jnp.concatenate(
        [jnp.sum(o1, axis=0, keepdims=True),
         jnp.sum(o1 * o1, axis=0, keepdims=True)], axis=0).reshape(1, 2, P)


def _ibn_conv2_kernel(o1_ref, g1_ref, b1_ref, sc1_ref, bi1_ref, w2_ref,
                      o2_ref, st2_ref, pad_ref):
    """IBN + ReLU + conv2 (3x3, pad 1, fused K=9P matmul) + bn2 partial stats."""
    _, H, W, P = o1_ref.shape
    HW = H * W
    half = P // 2

    o1 = o1_ref[...].reshape(HW, P).astype(jnp.float32)

    # ---- IBN: per-sample InstanceNorm stats (one pass: sum & sumsq) --------
    inv_hw = 1.0 / HW
    mean_in = jnp.sum(o1, axis=0, keepdims=True) * inv_hw                # (1,P)
    msq_in = jnp.sum(o1 * o1, axis=0, keepdims=True) * inv_hw
    var_in = jnp.maximum(msq_in - mean_in * mean_in, 0.0)
    in_scale = g1_ref[...] * jax.lax.rsqrt(var_in + EPS)
    in_bias = b1_ref[...] - mean_in * in_scale
    # Select IN-vs-BN on the (1,P) stat vectors only; one FMA over the big tensor.
    ch = jax.lax.broadcasted_iota(jnp.int32, (1, P), 1)
    scale = jnp.where(ch < half, in_scale, sc1_ref[...])
    bias = jnp.where(ch < half, in_bias, bi1_ref[...])
    y1 = jnp.maximum(o1 * scale + bias, 0.0).astype(jnp.bfloat16)        # (HW,P)

    # ---- conv2: zero only the 1-px halo, write interior, single im2col dot --
    zrow = jnp.zeros((1, W + 2, P), pad_ref.dtype)
    zcol = jnp.zeros((H + 2, 1, P), pad_ref.dtype)
    pad_ref[0:1, :, :] = zrow
    pad_ref[H + 1:H + 2, :, :] = zrow
    pad_ref[:, 0:1, :] = zcol
    pad_ref[:, W + 1:W + 2, :] = zcol
    pad_ref[1:H + 1, 1:W + 1, :] = y1.reshape(H, W, P)

    patches = jnp.concatenate(
        [pad_ref[kh:kh + H, kw:kw + W, :] for kh in range(3) for kw in range(3)],
        axis=-1).reshape(HW, 9 * P)                                      # (HW,9P) bf16
    o2 = jnp.dot(patches, w2_ref[...], preferred_element_type=jnp.float32)
    o2_ref[...] = o2.reshape(1, H, W, P).astype(o2_ref.dtype)
    st2_ref[...] = jnp.concatenate(
        [jnp.sum(o2, axis=0, keepdims=True),
         jnp.sum(o2 * o2, axis=0, keepdims=True)], axis=0).reshape(1, 2, P)


def _bn2_conv3_kernel(o2_ref, sc2_ref, bi2_ref, w3_ref, o3_ref, st3_ref):
    """bn2 (fused scale/bias) + ReLU + conv3 (1x1) + bn3 partial stats."""
    _, H, W, P = o2_ref.shape
    Cout = w3_ref.shape[1]
    HW = H * W
    o2 = o2_ref[...].reshape(HW, P).astype(jnp.float32)
    y2 = jnp.maximum(o2 * sc2_ref[...] + bi2_ref[...], 0.0).astype(jnp.bfloat16)
    o3 = jnp.dot(y2, w3_ref[...], preferred_element_type=jnp.float32)    # (HW,Cout)
    o3_ref[...] = o3.reshape(1, H, W, Cout).astype(o3_ref.dtype)
    st3_ref[...] = jnp.concatenate(
        [jnp.sum(o3, axis=0, keepdims=True),
         jnp.sum(o3 * o3, axis=0, keepdims=True)], axis=0).reshape(1, 2, Cout)


def _bn3_residual_kernel(o3_ref, x_ref, sc3_ref, bi3_ref, out_ref):
    """bn3 (fused scale/bias) + residual add + final ReLU."""
    _, H, W, C = o3_ref.shape
    o3 = o3_ref[...].astype(jnp.float32)
    res = x_ref[...].astype(jnp.float32)
    sc = sc3_ref[...].reshape(1, 1, 1, C)
    bi = bi3_ref[...].reshape(1, 1, 1, C)
    out_ref[...] = jnp.maximum(o3 * sc + bi + res, 0.0).astype(out_ref.dtype)


# --------------------------------------------------------------------------- #
# Wrapper                                                                      #
# --------------------------------------------------------------------------- #
def _sample_spec(shape):
    """Per-sample activation block (1, H, W, C) at batch index n."""
    return pl.BlockSpec((1,) + tuple(shape[1:]),
                        lambda n: (n,) + (0,) * (len(shape) - 1))


def _full_spec(shape):
    """Whole-array block (weights / per-channel vectors), resident across grid."""
    return pl.BlockSpec(tuple(shape), lambda n: (0,) * len(shape))


def _bn_scale_bias(stats, gamma, beta, count):
    """Fuse batch-wide (training-mode, biased-var) BN into per-channel scale/bias.

    stats: (N, 2, C) per-sample [sum, sumsq] from the producer kernel (f32 acc).
    """
    s = jnp.sum(stats[:, 0, :], axis=0)
    sq = jnp.sum(stats[:, 1, :], axis=0)
    mean = s / count
    var = jnp.maximum(sq / count - mean * mean, 0.0)
    scale = gamma.reshape(-1) * jax.lax.rsqrt(var + EPS)
    bias = beta.reshape(-1) - mean * scale
    return scale.reshape(1, -1), bias.reshape(1, -1)


@jax.jit
def bottleneck_ibn_nhwc(x, params):
    """NHWC-native forward of Bottleneck_IBN (stride=1, downsample=None)."""
    N, H, W, Cin = x.shape
    P = params["w1"].shape[1]
    Cout = params["w3"].shape[1]
    assert Cin == Cout, "downsample=None requires inplanes == planes * 4"
    count = N * H * W

    # Weights pre-cast to bf16 once (MXU operands); w2 flattened HWIO -> (9P, P).
    w1 = params["w1"].astype(jnp.bfloat16)
    w2 = params["w2"].astype(jnp.bfloat16).reshape(9 * P, P)
    w3 = params["w3"].astype(jnp.bfloat16)
    g1, b1 = params["g1"], params["b1"]

    # ---- stage 1: conv1 + bn1 partial stats --------------------------------
    o1, st1 = pl.pallas_call(
        _conv1_kernel,
        grid=(N,),
        in_specs=[_sample_spec((N, H, W, Cin)), _full_spec((Cin, P))],
        out_specs=(_sample_spec((N, H, W, P)),
                   pl.BlockSpec((1, 2, P), lambda n: (n, 0, 0))),
        out_shape=(jax.ShapeDtypeStruct((N, H, W, P), jnp.bfloat16),
                   jax.ShapeDtypeStruct((N, 2, P), jnp.float32)),
        compiler_params=_COMPILER_PARAMS,
    )(x, w1)

    # bn1 (BatchNorm half) fused scale/bias; first-half entries are overridden
    # in-kernel by the per-sample InstanceNorm stats.
    sc1, bi1 = _bn_scale_bias(st1, g1, b1, count)

    # ---- stage 2: IBN + ReLU + conv2(3x3) + bn2 partial stats ---------------
    o2, st2 = pl.pallas_call(
        _ibn_conv2_kernel,
        grid=(N,),
        in_specs=[_sample_spec((N, H, W, P)),
                  _full_spec((1, P)), _full_spec((1, P)),
                  _full_spec((1, P)), _full_spec((1, P)),
                  _full_spec((9 * P, P))],
        out_specs=(_sample_spec((N, H, W, P)),
                   pl.BlockSpec((1, 2, P), lambda n: (n, 0, 0))),
        out_shape=(jax.ShapeDtypeStruct((N, H, W, P), jnp.bfloat16),
                   jax.ShapeDtypeStruct((N, 2, P), jnp.float32)),
        scratch_shapes=[pltpu.VMEM((H + 2, W + 2, P), jnp.bfloat16)],
        compiler_params=_COMPILER_PARAMS,
    )(o1, g1, b1, sc1, bi1, w2)

    sc2, bi2 = _bn_scale_bias(st2, params["g2"], params["b2"], count)

    # ---- stage 3: bn2 + ReLU + conv3(1x1) + bn3 partial stats ---------------
    o3, st3 = pl.pallas_call(
        _bn2_conv3_kernel,
        grid=(N,),
        in_specs=[_sample_spec((N, H, W, P)),
                  _full_spec((1, P)), _full_spec((1, P)),
                  _full_spec((P, Cout))],
        out_specs=(_sample_spec((N, H, W, Cout)),
                   pl.BlockSpec((1, 2, Cout), lambda n: (n, 0, 0))),
        out_shape=(jax.ShapeDtypeStruct((N, H, W, Cout), jnp.bfloat16),
                   jax.ShapeDtypeStruct((N, 2, Cout), jnp.float32)),
        compiler_params=_COMPILER_PARAMS,
    )(o2, sc2, bi2, w3)

    sc3, bi3 = _bn_scale_bias(st3, params["g3"], params["b3"], count)

    # ---- stage 4: bn3 + residual + ReLU -------------------------------------
    out = pl.pallas_call(
        _bn3_residual_kernel,
        grid=(N,),
        in_specs=[_sample_spec((N, H, W, Cout)),
                  _sample_spec((N, H, W, Cin)),
                  _full_spec((1, Cout)), _full_spec((1, Cout))],
        out_specs=_sample_spec((N, H, W, Cout)),
        out_shape=jax.ShapeDtypeStruct((N, H, W, Cout), x.dtype),
        compiler_params=_COMPILER_PARAMS,
    )(o3, x, sc3, bi3)
    return out


def bottleneck_ibn_nchw(x_nchw, params):
    """PyTorch-interface (NCHW) parity wrapper.

    A real NHWC model should call bottleneck_ibn_nhwc directly and keep
    activations NHWC across blocks to avoid these two extra HBM passes.
    """
    x = jnp.transpose(x_nchw, (0, 2, 3, 1))
    y = bottleneck_ibn_nhwc(x, params)
    return jnp.transpose(y, (0, 3, 1, 2))


# --------------------------------------------------------------------------- #
# Demo                                                                         #
# --------------------------------------------------------------------------- #
if __name__ == "__main__":
    # Bottleneck_IBN(inplanes=64, planes=16, ibn=True, stride=1, downsample=None)
    N, inplanes, planes, H, W = 2, 64, 16, 16, 16
    Cout = planes * 4  # expansion = 4 (== inplanes, required for identity residual)

    key = jax.random.PRNGKey(0)
    ks = jax.random.split(key, 4)

    def conv_init(k, shape, fan_in):
        # deterministic kaiming-style init (synthetic weights, no checkpoint)
        return jax.random.normal(k, shape, jnp.float32) * (2.0 / fan_in) ** 0.5

    params = {
        # conv1: torch (P, Cin, 1, 1) -> kernel layout (Cin, P)
        "w1": conv_init(ks[0], (inplanes, planes), inplanes),
        # IBN affine params: [IN gamma/beta (half) | BN gamma/beta (rest)]
        "g1": jnp.ones((1, planes), jnp.float32),
        "b1": jnp.zeros((1, planes), jnp.float32),
        # conv2: torch (P, P, 3, 3) -> kernel layout HWIO (3, 3, P, P)
        "w2": conv_init(ks[1], (3, 3, planes, planes), 9 * planes),
        "g2": jnp.ones((1, planes), jnp.float32),
        "b2": jnp.zeros((1, planes), jnp.float32),
        # conv3: torch (4P, P, 1, 1) -> kernel layout (P, 4P)
        "w3": conv_init(ks[2], (planes, Cout), planes),
        "g3": jnp.ones((1, Cout), jnp.float32),
        "b3": jnp.zeros((1, Cout), jnp.float32),
    }

    x = jax.random.normal(ks[3], (N, inplanes, H, W), jnp.float32)  # NCHW input

    y = bottleneck_ibn_nchw(x, params)
    jax.block_until_ready(y)
    assert y.shape == (N, Cout, H, W)
    assert bool(jnp.all(jnp.isfinite(y)))
    assert bool(jnp.all(y >= 0.0))  # final ReLU
    # TODO(synk): BatchNorm running-mean/var buffer updates (training-time state)
    # are not modeled; only the forward activation is produced.
    print("KERNEL_OK")
</pallas_src>

<mosaic_0001>
module attributes {stable_mosaic.version = 11 : i64} {
  func.func @_conv1_kernel(%arg0: i32, %arg1: memref<1x16x16x64xf32, #tpu.memory_space<vmem>>, %arg2: memref<64x16xbf16, #tpu.memory_space<vmem>>, %arg3: memref<1x16x16x16xbf16, #tpu.memory_space<vmem>>, %arg4: memref<1x2x16xf32, #tpu.memory_space<vmem>>) attributes {dimension_semantics = [#tpu.dimension_semantics<parallel>], iteration_bounds = array<i64: 2>, scalar_prefetch = 0 : i64, scratch_operands = 0 : i64, tpu.core_type = #tpu.core_type<tc>, window_params = [{transform_indices = @transform_0, window_bounds = array<i64: 1, 16, 16, 64>}, {pipeline_mode = #tpu.pipeline_mode<synchronous>, transform_indices = @transform_1, window_bounds = array<i64: 64, 16>}, {transform_indices = @transform_2, window_bounds = array<i64: 1, 16, 16, 16>}, {transform_indices = @transform_3, window_bounds = array<i64: 1, 2, 16>}]} {
    %c0 = arith.constant 0 : index
    %c0_0 = arith.constant 0 : index
    %c0_1 = arith.constant 0 : index
    %c0_2 = arith.constant 0 : index
    %0 = vector.load %arg1[%c0, %c0_0, %c0_1, %c0_2] : memref<1x16x16x64xf32, #tpu.memory_space<vmem>>, vector<1x16x16x64xf32>
    %1 = vector.shape_cast %0 : vector<1x16x16x64xf32> to vector<256x64xf32>
    %2 = arith.truncf %1 : vector<256x64xf32> to vector<256x64xbf16>
    %c0_3 = arith.constant 0 : index
    %c0_4 = arith.constant 0 : index
    %3 = vector.load %arg2[%c0_3, %c0_4] : memref<64x16xbf16, #tpu.memory_space<vmem>>, vector<64x16xbf16>
    %cst = arith.constant dense<0.000000e+00> : vector<256x16xf32>
    %4 = tpu.matmul %2, %3, %cst {dimension_numbers = #tpu.dot_dimension_numbers<[1], [0], [0], [1], [0, 0, 1, 1], [], []>} : vector<256x64xbf16>, vector<64x16xbf16>, vector<256x16xf32> -> vector<256x16xf32>
    %5 = vector.shape_cast %4 : vector<256x16xf32> to vector<1x16x16x16xf32>
    %6 = arith.truncf %5 : vector<1x16x16x16xf32> to vector<1x16x16x16xbf16>
    %c0_5 = arith.constant 0 : index
    %c0_6 = arith.constant 0 : index
    %c0_7 = arith.constant 0 : index
    %c0_8 = arith.constant 0 : index
    %7 = vector.load %arg3[%c0_5, %c0_6, %c0_7, %c0_8] : memref<1x16x16x16xbf16, #tpu.memory_space<vmem>>, vector<1x16x16x16xbf16>
    tpu.vector_store %arg3[%c0_5, %c0_6, %c0_7, %c0_8], %6 {strides = array<i32>} : memref<1x16x16x16xbf16, #tpu.memory_space<vmem>>, vector<1x16x16x16xbf16>,
    %cst_9 = arith.constant dense<0.000000e+00> : vector<16xf32>
    %8 = vector.multi_reduction <add>, %4, %cst_9 [0] : vector<256x16xf32> to vector<16xf32>
    %9 = vector.shape_cast %8 : vector<16xf32> to vector<1x16xf32>
    %10 = arith.mulf %4, %4 : vector<256x16xf32>
    %cst_10 = arith.constant dense<0.000000e+00> : vector<16xf32>
    %11 = vector.multi_reduction <add>, %10, %cst_10 [0] : vector<256x16xf32> to vector<16xf32>
    %12 = vector.shape_cast %11 : vector<16xf32> to vector<1x16xf32>
    %13 = tpu.concatenate %9, %12 in 0 : vector<1x16xf32>, vector<1x16xf32> -> vector<2x16xf32>
    %14 = vector.shape_cast %13 : vector<2x16xf32> to vector<1x2x16xf32>
    %c0_11 = arith.constant 0 : index
    %c0_12 = arith.constant 0 : index
    %c0_13 = arith.constant 0 : index
    %15 = vector.load %arg4[%c0_11, %c0_12, %c0_13] : memref<1x2x16xf32, #tpu.memory_space<vmem>>, vector<1x2x16xf32>
    tpu.vector_store %arg4[%c0_11, %c0_12, %c0_13], %14 {strides = array<i32>} : memref<1x2x16xf32, #tpu.memory_space<vmem>>, vector<1x2x16xf32>,
    return
  }
  func.func @transform_0(%arg0: i32) -> (i32, i32, i32, i32) {
    %c0_i32 = arith.constant 0 : i32
    %c0_i32_0 = arith.constant 0 : i32
    %c0_i32_1 = arith.constant 0 : i32
    %c0_i32_2 = arith.constant 0 : i32
    return %arg0, %c0_i32, %c0_i32_0, %c0_i32_1 : i32, i32, i32, i32
  }
  func.func @transform_1(%arg0: i32) -> (i32, i32) {
    %c0_i32 = arith.constant 0 : i32
    %c0_i32_0 = arith.constant 0 : i32
    %c0_i32_1 = arith.constant 0 : i32
    return %c0_i32, %c0_i32_0 : i32, i32
  }
  func.func @transform_2(%arg0: i32) -> (i32, i32, i32, i32) {
    %c0_i32 = arith.constant 0 : i32
    %c0_i32_0 = arith.constant 0 : i32
    %c0_i32_1 = arith.constant 0 : i32
    %c0_i32_2 = arith.constant 0 : i32
    return %arg0, %c0_i32, %c0_i32_0, %c0_i32_1 : i32, i32, i32, i32
  }
  func.func @transform_3(%arg0: i32) -> (i32, i32, i32) {
    %c0_i32 = arith.constant 0 : i32
    %c0_i32_0 = arith.constant 0 : i32
    %c0_i32_1 = arith.constant 0 : i32
    return %arg0, %c0_i32, %c0_i32_0 : i32, i32, i32
  }
}

module attributes {stable_mosaic.version = 11 : i64} {
  func.func @_ibn_conv2_kernel(%arg0: i32, %arg1: memref<1x16x16x16xbf16, #tpu.memory_space<vmem>>, %arg2: memref<1x16xf32, #tpu.memory_space<vmem>>, %arg3: memref<1x16xf32, #tpu.memory_space<vmem>>, %arg4: memref<1x16xf32, #tpu.memory_space<vmem>>, %arg5: memref<1x16xf32, #tpu.memory_space<vmem>>, %arg6: memref<144x16xbf16, #tpu.memory_space<vmem>>, %arg7: memref<1x16x16x16xbf16, #tpu.memory_space<vmem>>, %arg8: memref<1x2x16xf32, #tpu.memory_space<vmem>>, %arg9: memref<18x18x16xbf16, #tpu.memory_space<vmem>>) attributes {dimension_semantics = [#tpu.dimension_semantics<parallel>], iteration_bounds = array<i64: 2>, scalar_prefetch = 0 : i64, scratch_operands = 1 : i64, tpu.core_type = #tpu.core_type<tc>, window_params = [{transform_indices = @transform_0, window_bounds = array<i64: 1, 16, 16, 16>}, {pipeline_mode = #tpu.pipeline_mode<synchronous>, transform_indices = @transform_1, window_bounds = array<i64: 1, 16>}, {pipeline_mode = #tpu.pipeline_mode<synchronous>, transform_indices = @transform_2, window_bounds = array<i64: 1, 16>}, {pipeline_mode = #tpu.pipeline_mode<synchronous>, transform_indices = @transform_3, window_bounds = array<i64: 1, 16>}, {pipeline_mode = #tpu.pipeline_mode<synchronous>, transform_indices = @transform_4, window_bounds = array<i64: 1, 16>}, {pipeline_mode = #tpu.pipeline_mode<synchronous>, transform_indices = @transform_5, window_bounds = array<i64: 144, 16>}, {transform_indices = @transform_6, window_bounds = array<i64: 1, 16, 16, 16>}, {transform_indices = @transform_7, window_bounds = array<i64: 1, 2, 16>}]} {
    %c0 = arith.constant 0 : index
    %c0_0 = arith.constant 0 : index
    %c0_1 = arith.constant 0 : index
    %c0_2 = arith.constant 0 : index
    %0 = vector.load %arg1[%c0, %c0_0, %c0_1, %c0_2] : memref<1x16x16x16xbf16, #tpu.memory_space<vmem>>, vector<1x16x16x16xbf16>
    %1 = vector.shape_cast %0 : vector<1x16x16x16xbf16> to vector<256x16xbf16>
    %2 = arith.extf %1 : vector<256x16xbf16> to vector<256x16xf32>
    %cst = arith.constant dense<0.000000e+00> : vector<16xf32>
    %3 = vector.multi_reduction <add>, %2, %cst [0] : vector<256x16xf32> to vector<16xf32>
    %4 = vector.shape_cast %3 : vector<16xf32> to vector<1x16xf32>
    %cst_3 = arith.constant 3.906250e-03 : f32
    %5 = vector.broadcast %cst_3 : f32 to vector<1x16xf32>
    %6 = arith.mulf %4, %5 : vector<1x16xf32>
    %7 = arith.mulf %2, %2 : vector<256x16xf32>
    %cst_4 = arith.constant dense<0.000000e+00> : vector<16xf32>
    %8 = vector.multi_reduction <add>, %7, %cst_4 [0] : vector<256x16xf32> to vector<16xf32>
    %9 = vector.shape_cast %8 : vector<16xf32> to vector<1x16xf32>
    %cst_5 = arith.constant 3.906250e-03 : f32
    %10 = vector.broadcast %cst_5 : f32 to vector<1x16xf32>
    %11 = arith.mulf %9, %10 : vector<1x16xf32>
    %12 = arith.mulf %6, %6 : vector<1x16xf32>
    %13 = arith.subf %11, %12 : vector<1x16xf32>
    %cst_6 = arith.constant 0.000000e+00 : f32
    %14 = vector.broadcast %cst_6 : f32 to vector<1x16xf32>
    %15 = arith.maximumf %13, %14 : vector<1x16xf32>
    %c0_7 = arith.constant 0 : index
    %c0_8 = arith.constant 0 : index
    %16 = vector.load %arg2[%c0_7, %c0_8] : memref<1x16xf32, #tpu.memory_space<vmem>>, vector<1x16xf32>
    %cst_9 = arith.constant 9.99999974E-6 : f32
    %17 = vector.broadcast %cst_9 : f32 to vector<1x16xf32>
    %18 = arith.addf %15, %17 : vector<1x16xf32>
    %19 = math.rsqrt %18 : vector<1x16xf32>
    %20 = arith.mulf %16, %19 : vector<1x16xf32>
    %c0_10 = arith.constant 0 : index
    %c0_11 = arith.constant 0 : index
    %21 = vector.load %arg3[%c0_10, %c0_11] : memref<1x16xf32, #tpu.memory_space<vmem>>, vector<1x16xf32>
    %22 = arith.mulf %6, %20 : vector<1x16xf32>
    %23 = arith.subf %21, %22 : vector<1x16xf32>
    %24 = tpu.iota {dimensions = array<i32: 1>} : vector<1x16xi32>
    %c8_i32 = arith.constant 8 : i32
    %25 = vector.broadcast %c8_i32 : i32 to vector<1x16xi32>
    %26 = arith.cmpi slt, %24, %25 : vector<1x16xi32>
    %c0_12 = arith.constant 0 : index
    %c0_13 = arith.constant 0 : index
    %27 = vector.load %arg4[%c0_12, %c0_13] : memref<1x16xf32, #tpu.memory_space<vmem>>, vector<1x16xf32>
    %28 = arith.select %26, %20, %27 : vector<1x16xi1>, vector<1x16xf32>
    %c8_i32_14 = arith.constant 8 : i32
    %29 = vector.broadcast %c8_i32_14 : i32 to vector<1x16xi32>
    %30 = arith.cmpi slt, %24, %29 : vector<1x16xi32>
    %c0_15 = arith.constant 0 : index
    %c0_16 = arith.constant 0 : index
    %31 = vector.load %arg5[%c0_15, %c0_16] : memref<1x16xf32, #tpu.memory_space<vmem>>, vector<1x16xf32>
    %32 = arith.select %30, %23, %31 : vector<1x16xi1>, vector<1x16xf32>
    %33 = vector.broadcast %28 : vector<1x16xf32> to vector<256x16xf32>
    %34 = arith.mulf %2, %33 : vector<256x16xf32>
    %35 = vector.broadcast %32 : vector<1x16xf32> to vector<256x16xf32>
    %36 = arith.addf %34, %35 : vector<256x16xf32>
    %cst_17 = arith.constant 0.000000e+00 : f32
    %37 = vector.broadcast %cst_17 : f32 to vector<256x16xf32>
    %38 = arith.maximumf %36, %37 : vector<256x16xf32>
    %39 = arith.truncf %38 : vector<256x16xf32> to vector<256x16xbf16>
    %cst_18 = arith.constant 0.000000e+00 : bf16
    %40 = vector.broadcast %cst_18 : bf16 to vector<1x18x16xbf16>
    %cst_19 = arith.constant 0.000000e+00 : bf16
    %41 = vector.broadcast %cst_19 : bf16 to vector<18x1x16xbf16>
    %c0_20 = arith.constant 0 : index
    %c0_21 = arith.constant 0 : index
    %c0_22 = arith.constant 0 : index
    %42 = vector.load %arg9[%c0_20, %c0_21, %c0_22] : memref<18x18x16xbf16, #tpu.memory_space<vmem>>, vector<1x18x16xbf16>
    tpu.vector_store %arg9[%c0_20, %c0_21, %c0_22], %40 {strides = array<i32>} : memref<18x18x16xbf16, #tpu.memory_space<vmem>>, vector<1x18x16xbf16>,
    %c17 = arith.constant 17 : index
    %c0_23 = arith.constant 0 : index
    %c0_24 = arith.constant 0 : index
    %43 = vector.load %arg9[%c17, %c0_23, %c0_24] : memref<18x18x16xbf16, #tpu.memory_space<vmem>>, vector<1x18x16xbf16>
    tpu.vector_store %arg9[%c17, %c0_23, %c0_24], %40 {strides = array<i32>} : memref<18x18x16xbf16, #tpu.memory_space<vmem>>, vector<1x18x16xbf16>,
    %c0_25 = arith.constant 0 : index
    %c0_26 = arith.constant 0 : index
    %c0_27 = arith.constant 0 : index
    %44 = vector.load %arg9[%c0_25, %c0_26, %c0_27] : memref<18x18x16xbf16, #tpu.memory_space<vmem>>, vector<18x1x16xbf16>
    tpu.vector_store %arg9[%c0_25, %c0_26, %c0_27], %41 {strides = array<i32>} : memref<18x18x16xbf16, #tpu.memory_space<vmem>>, vector<18x1x16xbf16>,
    %c0_28 = arith.constant 0 : index
    %c17_29 = arith.constant 17 : index
    %c0_30 = arith.constant 0 : index
    %45 = vector.load %arg9[%c0_28, %c17_29, %c0_30] : memref<18x18x16xbf16, #tpu.memory_space<vmem>>, vector<18x1x16xbf16>
    tpu.vector_store %arg9[%c0_28, %c17_29, %c0_30], %41 {strides = array<i32>} : memref<18x18x16xbf16, #tpu.memory_space<vmem>>, vector<18x1x16xbf16>,
    %46 = vector.shape_cast %39 : vector<256x16xbf16> to vector<16x16x16xbf16>
    %c1 = arith.constant 1 : index
    %c1_31 = arith.constant 1 : index
    %c0_32 = arith.constant 0 : index
    %47 = vector.load %arg9[%c1, %c1_31, %c0_32] : memref<18x18x16xbf16, #tpu.memory_space<vmem>>, vector<16x16x16xbf16>
    tpu.vector_store %arg9[%c1, %c1_31, %c0_32], %46 {strides = array<i32>} : memref<18x18x16xbf16, #tpu.memory_space<vmem>>, vector<16x16x16xbf16>,
    %c0_33 = arith.constant 0 : index
    %c0_34 = arith.constant 0 : index
    %c0_35 = arith.constant 0 : index
    %48 = vector.load %arg9[%c0_33, %c0_34, %c0_35] : memref<18x18x16xbf16, #tpu.memory_space<vmem>>, vector<16x16x16xbf16>
    %c0_36 = arith.constant 0 : index
    %c1_37 = arith.constant 1 : index
    %c0_38 = arith.constant 0 : index
    %49 = vector.load %arg9[%c0_36, %c1_37, %c0_38] : memref<18x18x16xbf16, #tpu.memory_space<vmem>>, vector<16x16x16xbf16>
    %c0_39 = arith.constant 0 : index
    %c2 = arith.constant 2 : index
    %c0_40 = arith.constant 0 : index
    %50 = vector.load %arg9[%c0_39, %c2, %c0_40] : memref<18x18x16xbf16, #tpu.memory_space<vmem>>, vector<16x16x16xbf16>
    %c1_41 = arith.constant 1 : index
    %c0_42 = arith.constant 0 : index
    %c0_43 = arith.constant 0 : index
    %51 = vector.load %arg9[%c1_41, %c0_42, %c0_43] : memref<18x18x16xbf16, #tpu.memory_space<vmem>>, vector<16x16x16xbf16>
    %c1_44 = arith.constant 1 : index
    %c1_45 = arith.constant 1 : index
    %c0_46 = arith.constant 0 : index
    %52 = vector.load %arg9[%c1_44, %c1_45, %c0_46] : memref<18x18x16xbf16, #tpu.memory_space<vmem>>, vector<16x16x16xbf16>
    %c1_47 = arith.constant 1 : index
    %c2_48 = arith.constant 2 : index
    %c0_49 = arith.constant 0 : index
    %53 = vector.load %arg9[%c1_47, %c2_48, %c0_49] : memref<18x18x16xbf16, #tpu.memory_space<vmem>>, vector<16x16x16xbf16>
    %c2_50 = arith.constant 2 : index
    %c0_51 = arith.constant 0 : index
    %c0_52 = arith.constant 0 : index
    %54 = vector.load %arg9[%c2_50, %c0_51, %c0_52] : memref<18x18x16xbf16, #tpu.memory_space<vmem>>, vector<16x16x16xbf16>
    %c2_53 = arith.constant 2 : index
    %c1_54 = arith.constant 1 : index
    %c0_55 = arith.constant 0 : index
    %55 = vector.load %arg9[%c2_53, %c1_54, %c0_55] : memref<18x18x16xbf16, #tpu.memory_space<vmem>>, vector<16x16x16xbf16>
    %c2_56 = arith.constant 2 : index
    %c2_57 = arith.constant 2 : index
    %c0_58 = arith.constant 0 : index
    %56 = vector.load %arg9[%c2_56, %c2_57, %c0_58] : memref<18x18x16xbf16, #tpu.memory_space<vmem>>, vector<16x16x16xbf16>
    %57 = tpu.concatenate %48, %49, %50, %51, %52, %53, %54, %55, %56 in 2 : vector<16x16x16xbf16>, vector<16x16x16xbf16>, vector<16x16x16xbf16>, vector<16x16x16xbf16>, vector<16x16x16xbf16>, vector<16x16x16xbf16>, vector<16x16x16xbf16>, vector<16x16x16xbf16>, vector<16x16x16xbf16> -> vector<16x16x144xbf16>
    %58 = vector.shape_cast %57 : vector<16x16x144xbf16> to vector<256x144xbf16>
    %c0_59 = arith.constant 0 : index
    %c0_60 = arith.constant 0 : index
    %59 = vector.load %arg6[%c0_59, %c0_60] : memref<144x16xbf16, #tpu.memory_space<vmem>>, vector<144x16xbf16>
    %cst_61 = arith.constant dense<0.000000e+00> : vector<256x16xf32>
    %60 = tpu.matmul %58, %59, %cst_61 {dimension_numbers = #tpu.dot_dimension_numbers<[1], [0], [0], [1], [0, 0, 1, 1], [], []>} : vector<256x144xbf16>, vector<144x16xbf16>, vector<256x16xf32> -> vector<256x16xf32>
    %61 = vector.shape_cast %60 : vector<256x16xf32> to vector<1x16x16x16xf32>
    %62 = arith.truncf %61 : vector<1x16x16x16xf32> to vector<1x16x16x16xbf16>
    %c0_62 = arith.constant 0 : index
    %c0_63 = arith.constant 0 : index
    %c0_64 = arith.constant 0 : index
    %c0_65 = arith.constant 0 : index
    %63 = vector.load %arg7[%c0_62, %c0_63, %c0_64, %c0_65] : memref<1x16x16x16xbf16, #tpu.memory_space<vmem>>, vector<1x16x16x16xbf16>
    tpu.vector_store %arg7[%c0_62, %c0_63, %c0_64, %c0_65], %62 {strides = array<i32>} : memref<1x16x16x16xbf16, #tpu.memory_space<vmem>>, vector<1x16x16x16xbf16>,
    %cst_66 = arith.constant dense<0.000000e+00> : vector<16xf32>
    %64 = vector.multi_reduction <add>, %60, %cst_66 [0] : vector<256x16xf32> to vector<16xf32>
    %65 = vector.shape_cast %64 : vector<16xf32> to vector<1x16xf32>
    %66 = arith.mulf %60, %60 : vector<256x16xf32>
    %cst_67 = arith.constant dense<0.000000e+00> : vector<16xf32>
    %67 = vector.multi_reduction <add>, %66, %cst_67 [0] : vector<256x16xf32> to vector<16xf32>
    %68 = vector.shape_cast %67 : vector<16xf32> to vector<1x16xf32>
    %69 = tpu.concatenate %65, %68 in 0 : vector<1x16xf32>, vector<1x16xf32> -> vector<2x16xf32>
    %70 = vector.shape_cast %69 : vector<2x16xf32> to vector<1x2x16xf32>
    %c0_68 = arith.constant 0 : index
    %c0_69 = arith.constant 0 : index
    %c0_70 = arith.constant 0 : index
    %71 = vector.load %arg8[%c0_68, %c0_69, %c0_70] : memref<1x2x16xf32, #tpu.memory_space<vmem>>, vector<1x2x16xf32>
    tpu.vector_store %arg8[%c0_68, %c0_69, %c0_70], %70 {strides = array<i32>} : memref<1x2x16xf32, #tpu.memory_space<vmem>>, vector<1x2x16xf32>,
    return
  }
  func.func @transform_0(%arg0: i32) -> (i32, i32, i32, i32) {
    %c0_i32 = arith.constant 0 : i32
    %c0_i32_0 = arith.constant 0 : i32
    %c0_i32_1 = arith.constant 0 : i32
    %c0_i32_2 = arith.constant 0 : i32
    return %arg0, %c0_i32, %c0_i32_0, %c0_i32_1 : i32, i32, i32, i32
  }
  func.func @transform_1(%arg0: i32) -> (i32, i32) {
    %c0_i32 = arith.constant 0 : i32
    %c0_i32_0 = arith.constant 0 : i32
    %c0_i32_1 = arith.constant 0 : i32
    return %c0_i32, %c0_i32_0 : i32, i32
  }
  func.func @transform_2(%arg0: i32) -> (i32, i32) {
    %c0_i32 = arith.constant 0 : i32
    %c0_i32_0 = arith.constant 0 : i32
    %c0_i32_1 = arith.constant 0 : i32
    return %c0_i32, %c0_i32_0 : i32, i32
  }
  func.func @transform_3(%arg0: i32) -> (i32, i32) {
    %c0_i32 = arith.constant 0 : i32
    %c0_i32_0 = arith.constant 0 : i32
    %c0_i32_1 = arith.constant 0 : i32
    return %c0_i32, %c0_i32_0 : i32, i32
  }
  func.func @transform_4(%arg0: i32) -> (i32, i32) {
    %c0_i32 = arith.constant 0 : i32
    %c0_i32_0 = arith.constant 0 : i32
    %c0_i32_1 = arith.constant 0 : i32
    return %c0_i32, %c0_i32_0 : i32, i32
  }
  func.func @transform_5(%arg0: i32) -> (i32, i32) {
    %c0_i32 = arith.constant 0 : i32
    %c0_i32_0 = arith.constant 0 : i32
    %c0_i32_1 = arith.constant 0 : i32
    return %c0_i32, %c0_i32_0 : i32, i32
  }
  func.func @transform_6(%arg0: i32) -> (i32, i32, i32, i32) {
    %c0_i32 = arith.constant 0 : i32
    %c0_i32_0 = arith.constant 0 : i32
    %c0_i32_1 = arith.constant 0 : i32
    %c0_i32_2 = arith.constant 0 : i32
    return %arg0, %c0_i32, %c0_i32_0, %c0_i32_1 : i32, i32, i32, i32
  }
  func.func @transform_7(%arg0: i32) -> (i32, i32, i32) {
    %c0_i32 = arith.constant 0 : i32
    %c0_i32_0 = arith.constant 0 : i32
    %c0_i32_1 = arith.constant 0 : i32
    return %arg0, %c0_i32, %c0_i32_0 : i32, i32, i32
  }
}

module attributes {stable_mosaic.version = 11 : i64} {
  func.func @_bn2_conv3_kernel(%arg0: i32, %arg1: memref<1x16x16x16xbf16, #tpu.memory_space<vmem>>, %arg2: memref<1x16xf32, #tpu.memory_space<vmem>>, %arg3: memref<1x16xf32, #tpu.memory_space<vmem>>, %arg4: memref<16x64xbf16, #tpu.memory_space<vmem>>, %arg5: memref<1x16x16x64xbf16, #tpu.memory_space<vmem>>, %arg6: memref<1x2x64xf32, #tpu.memory_space<vmem>>) attributes {dimension_semantics = [#tpu.dimension_semantics<parallel>], iteration_bounds = array<i64: 2>, scalar_prefetch = 0 : i64, scratch_operands = 0 : i64, tpu.core_type = #tpu.core_type<tc>, window_params = [{transform_indices = @transform_0, window_bounds = array<i64: 1, 16, 16, 16>}, {pipeline_mode = #tpu.pipeline_mode<synchronous>, transform_indices = @transform_1, window_bounds = array<i64: 1, 16>}, {pipeline_mode = #tpu.pipeline_mode<synchronous>, transform_indices = @transform_2, window_bounds = array<i64: 1, 16>}, {pipeline_mode = #tpu.pipeline_mode<synchronous>, transform_indices = @transform_3, window_bounds = array<i64: 16, 64>}, {transform_indices = @transform_4, window_bounds = array<i64: 1, 16, 16, 64>}, {transform_indices = @transform_5, window_bounds = array<i64: 1, 2, 64>}]} {
    %c0 = arith.constant 0 : index
    %c0_0 = arith.constant 0 : index
    %c0_1 = arith.constant 0 : index
    %c0_2 = arith.constant 0 : index
    %0 = vector.load %arg1[%c0, %c0_0, %c0_1, %c0_2] : memref<1x16x16x16xbf16, #tpu.memory_space<vmem>>, vector<1x16x16x16xbf16>
    %1 = vector.shape_cast %0 : vector<1x16x16x16xbf16> to vector<256x16xbf16>
    %2 = arith.extf %1 : vector<256x16xbf16> to vector<256x16xf32>
    %c0_3 = arith.constant 0 : index
    %c0_4 = arith.constant 0 : index
    %3 = vector.load %arg2[%c0_3, %c0_4] : memref<1x16xf32, #tpu.memory_space<vmem>>, vector<1x16xf32>
    %4 = vector.broadcast %3 : vector<1x16xf32> to vector<256x16xf32>
    %5 = arith.mulf %2, %4 : vector<256x16xf32>
    %c0_5 = arith.constant 0 : index
    %c0_6 = arith.constant 0 : index
    %6 = vector.load %arg3[%c0_5, %c0_6] : memref<1x16xf32, #tpu.memory_space<vmem>>, vector<1x16xf32>
    %7 = vector.broadcast %6 : vector<1x16xf32> to vector<256x16xf32>
    %8 = arith.addf %5, %7 : vector<256x16xf32>
    %cst = arith.constant 0.000000e+00 : f32
    %9 = vector.broadcast %cst : f32 to vector<256x16xf32>
    %10 = arith.maximumf %8, %9 : vector<256x16xf32>
    %11 = arith.truncf %10 : vector<256x16xf32> to vector<256x16xbf16>
    %c0_7 = arith.constant 0 : index
    %c0_8 = arith.constant 0 : index
    %12 = vector.load %arg4[%c0_7, %c0_8] : memref<16x64xbf16, #tpu.memory_space<vmem>>, vector<16x64xbf16>
    %cst_9 = arith.constant dense<0.000000e+00> : vector<256x64xf32>
    %13 = tpu.matmul %11, %12, %cst_9 {dimension_numbers = #tpu.dot_dimension_numbers<[1], [0], [0], [1], [0, 0, 1, 1], [], []>} : vector<256x16xbf16>, vector<16x64xbf16>, vector<256x64xf32> -> vector<256x64xf32>
    %14 = vector.shape_cast %13 : vector<256x64xf32> to vector<1x16x16x64xf32>
    %15 = arith.truncf %14 : vector<1x16x16x64xf32> to vector<1x16x16x64xbf16>
    %c0_10 = arith.constant 0 : index
    %c0_11 = arith.constant 0 : index
    %c0_12 = arith.constant 0 : index
    %c0_13 = arith.constant 0 : index
    %16 = vector.load %arg5[%c0_10, %c0_11, %c0_12, %c0_13] : memref<1x16x16x64xbf16, #tpu.memory_space<vmem>>, vector<1x16x16x64xbf16>
    tpu.vector_store %arg5[%c0_10, %c0_11, %c0_12, %c0_13], %15 {strides = array<i32>} : memref<1x16x16x64xbf16, #tpu.memory_space<vmem>>, vector<1x16x16x64xbf16>,
    %cst_14 = arith.constant dense<0.000000e+00> : vector<64xf32>
    %17 = vector.multi_reduction <add>, %13, %cst_14 [0] : vector<256x64xf32> to vector<64xf32>
    %18 = vector.shape_cast %17 : vector<64xf32> to vector<1x64xf32>
    %19 = arith.mulf %13, %13 : vector<256x64xf32>
    %cst_15 = arith.constant dense<0.000000e+00> : vector<64xf32>
    %20 = vector.multi_reduction <add>, %19, %cst_15 [0] : vector<256x64xf32> to vector<64xf32>
    %21 = vector.shape_cast %20 : vector<64xf32> to vector<1x64xf32>
    %22 = tpu.concatenate %18, %21 in 0 : vector<1x64xf32>, vector<1x64xf32> -> vector<2x64xf32>
    %23 = vector.shape_cast %22 : vector<2x64xf32> to vector<1x2x64xf32>
    %c0_16 = arith.constant 0 : index
    %c0_17 = arith.constant 0 : index
    %c0_18 = arith.constant 0 : index
    %24 = vector.load %arg6[%c0_16, %c0_17, %c0_18] : memref<1x2x64xf32, #tpu.memory_space<vmem>>, vector<1x2x64xf32>
    tpu.vector_store %arg6[%c0_16, %c0_17, %c0_18], %23 {strides = array<i32>} : memref<1x2x64xf32, #tpu.memory_space<vmem>>, vector<1x2x64xf32>,
    return
  }
  func.func @transform_0(%arg0: i32) -> (i32, i32, i32, i32) {
    %c0_i32 = arith.constant 0 : i32
    %c0_i32_0 = arith.constant 0 : i32
    %c0_i32_1 = arith.constant 0 : i32
    %c0_i32_2 = arith.constant 0 : i32
    return %arg0, %c0_i32, %c0_i32_0, %c0_i32_1 : i32, i32, i32, i32
  }
  func.func @transform_1(%arg0: i32) -> (i32, i32) {
    %c0_i32 = arith.constant 0 : i32
    %c0_i32_0 = arith.constant 0 : i32
    %c0_i32_1 = arith.constant 0 : i32
    return %c0_i32, %c0_i32_0 : i32, i32
  }
  func.func @transform_2(%arg0: i32) -> (i32, i32) {
    %c0_i32 = arith.constant 0 : i32
    %c0_i32_0 = arith.constant 0 : i32
    %c0_i32_1 = arith.constant 0 : i32
    return %c0_i32, %c0_i32_0 : i32, i32
  }
  func.func @transform_3(%arg0: i32) -> (i32, i32) {
    %c0_i32 = arith.constant 0 : i32
    %c0_i32_0 = arith.constant 0 : i32
    %c0_i32_1 = arith.constant 0 : i32
    return %c0_i32, %c0_i32_0 : i32, i32
  }
  func.func @transform_4(%arg0: i32) -> (i32, i32, i32, i32) {
    %c0_i32 = arith.constant 0 : i32
    %c0_i32_0 = arith.constant 0 : i32
    %c0_i32_1 = arith.constant 0 : i32
    %c0_i32_2 = arith.constant 0 : i32
    return %arg0, %c0_i32, %c0_i32_0, %c0_i32_1 : i32, i32, i32, i32
  }
  func.func @transform_5(%arg0: i32) -> (i32, i32, i32) {
    %c0_i32 = arith.constant 0 : i32
    %c0_i32_0 = arith.constant 0 : i32
    %c0_i32_1 = arith.constant 0 : i32
    return %arg0, %c0_i32, %c0_i32_0 : i32, i32, i32
  }
}

module attributes {stable_mosaic.version = 11 : i64} {
  func.func @_bn3_residual_kernel(%arg0: i32, %arg1: memref<1x16x16x64xbf16, #tpu.memory_space<vmem>>, %arg2: memref<1x16x16x64xf32, #tpu.memory_space<vmem>>, %arg3: memref<1x64xf32, #tpu.memory_space<vmem>>, %arg4: memref<1x64xf32, #tpu.memory_space<vmem>>, %arg5: memref<1x16x16x64xf32, #tpu.memory_space<vmem>>) attributes {dimension_semantics = [#tpu.dimension_semantics<parallel>], iteration_bounds = array<i64: 2>, scalar_prefetch = 0 : i64, scratch_operands = 0 : i64, tpu.core_type = #tpu.core_type<tc>, window_params = [{transform_indices = @transform_0, window_bounds = array<i64: 1, 16, 16, 64>}, {transform_indices = @transform_1, window_bounds = array<i64: 1, 16, 16, 64>}, {pipeline_mode = #tpu.pipeline_mode<synchronous>, transform_indices = @transform_2, window_bounds = array<i64: 1, 64>}, {pipeline_mode = #tpu.pipeline_mode<synchronous>, transform_indices = @transform_3, window_bounds = array<i64: 1, 64>}, {transform_indices = @transform_4, window_bounds = array<i64: 1, 16, 16, 64>}]} {
    %c0 = arith.constant 0 : index
    %c0_0 = arith.constant 0 : index
    %c0_1 = arith.constant 0 : index
    %c0_2 = arith.constant 0 : index
    %0 = vector.load %arg1[%c0, %c0_0, %c0_1, %c0_2] : memref<1x16x16x64xbf16, #tpu.memory_space<vmem>>, vector<1x16x16x64xbf16>
    %1 = arith.extf %0 : vector<1x16x16x64xbf16> to vector<1x16x16x64xf32>
    %c0_3 = arith.constant 0 : index
    %c0_4 = arith.constant 0 : index
    %c0_5 = arith.constant 0 : index
    %c0_6 = arith.constant 0 : index
    %2 = vector.load %arg2[%c0_3, %c0_4, %c0_5, %c0_6] : memref<1x16x16x64xf32, #tpu.memory_space<vmem>>, vector<1x16x16x64xf32>
    %c0_7 = arith.constant 0 : index
    %c0_8 = arith.constant 0 : index
    %3 = vector.load %arg3[%c0_7, %c0_8] : memref<1x64xf32, #tpu.memory_space<vmem>>, vector<1x64xf32>
    %4 = vector.shape_cast %3 : vector<1x64xf32> to vector<1x1x1x64xf32>
    %c0_9 = arith.constant 0 : index
    %c0_10 = arith.constant 0 : index
    %5 = vector.load %arg4[%c0_9, %c0_10] : memref<1x64xf32, #tpu.memory_space<vmem>>, vector<1x64xf32>
    %6 = vector.shape_cast %5 : vector<1x64xf32> to vector<1x1x1x64xf32>
    %7 = vector.broadcast %4 : vector<1x1x1x64xf32> to vector<1x16x16x64xf32>
    %8 = arith.mulf %1, %7 : vector<1x16x16x64xf32>
    %9 = vector.broadcast %6 : vector<1x1x1x64xf32> to vector<1x16x16x64xf32>
    %10 = arith.addf %8, %9 : vector<1x16x16x64xf32>
    %11 = arith.addf %10, %2 : vector<1x16x16x64xf32>
    %cst = arith.constant 0.000000e+00 : f32
    %12 = vector.broadcast %cst : f32 to vector<1x16x16x64xf32>
    %13 = arith.maximumf %11, %12 : vector<1x16x16x64xf32>
    %c0_11 = arith.constant 0 : index
    %c0_12 = arith.constant 0 : index
    %c0_13 = arith.constant 0 : index
    %c0_14 = arith.constant 0 : index
    %14 = vector.load %arg5[%c0_11, %c0_12, %c0_13, %c0_14] : memref<1x16x16x64xf32, #tpu.memory_space<vmem>>, vector<1x16x16x64xf32>
    tpu.vector_store %arg5[%c0_11, %c0_12, %c0_13, %c0_14], %13 {strides = array<i32>} : memref<1x16x16x64xf32, #tpu.memory_space<vmem>>, vector<1x16x16x64xf32>,
    return
  }
  func.func @transform_0(%arg0: i32) -> (i32, i32, i32, i32) {
    %c0_i32 = arith.constant 0 : i32
    %c0_i32_0 = arith.constant 0 : i32
    %c0_i32_1 = arith.constant 0 : i32
    %c0_i32_2 = arith.constant 0 : i32
    return %arg0, %c0_i32, %c0_i32_0, %c0_i32_1 : i32, i32, i32, i32
  }
  func.func @transform_1(%arg0: i32) -> (i32, i32, i32, i32) {
    %c0_i32 = arith.constant 0 : i32
    %c0_i32_0 = arith.constant 0 : i32
    %c0_i32_1 = arith.constant 0 : i32
    %c0_i32_2 = arith.constant 0 : i32
    return %arg0, %c0_i32, %c0_i32_0, %c0_i32_1 : i32, i32, i32, i32
  }
  func.func @transform_2(%arg0: i32) -> (i32, i32) {
    %c0_i32 = arith.constant 0 : i32
    %c0_i32_0 = arith.constant 0 : i32
    %c0_i32_1 = arith.constant 0 : i32
    return %c0_i32, %c0_i32_0 : i32, i32
  }
  func.func @transform_3(%arg0: i32) -> (i32, i32) {
    %c0_i32 = arith.constant 0 : i32
    %c0_i32_0 = arith.constant 0 : i32
    %c0_i32_1 = arith.constant 0 : i32
    return %c0_i32, %c0_i32_0 : i32, i32
  }
  func.func @transform_4(%arg0: i32) -> (i32, i32, i32, i32) {
    %c0_i32 = arith.constant 0 : i32
    %c0_i32_0 = arith.constant 0 : i32
    %c0_i32_1 = arith.constant 0 : i32
    %c0_i32_2 = arith.constant 0 : i32
    return %arg0, %c0_i32, %c0_i32_0, %c0_i32_1 : i32, i32, i32, i32
  }
}

</mosaic_0001>

<llo_original>
// kernel: bottleneck_ibn_nhwc.7
$region0: #{bottleneck_ibn_nhwc.7}
  #allocation0 [shape = 'u32[]', space=smem, size = 0x4, offset = 0x4, fixed_abs, tag = 'smem constant byte address 0x4 - core index']
  #allocation1 [shape = 'u32[144,128]{1,0:T(1,128)}', space=vmem, size = 0x12000, scoped, tag = 'internal scratch']
  %s0 = inlined_call_operand.vmem [shape: bf16[2,16,16,64], index: 0, kind: input, shape index: {}]
  %s1 = inlined_call_operand.vmem [shape: f32[2,16,16,64], index: 1, kind: input, shape index: {}]
  %s2 = inlined_call_operand.vmem [shape: f32[1,64], index: 2, kind: input, shape index: {}]
  %s3 = inlined_call_operand.vmem [shape: f32[1,64], index: 3, kind: input, shape index: {}]
  %s4 = inlined_call_operand.hbm [shape: f32[2,16,16,64], index: 4, kind: output, shape index: {}]
  %s5 = sld [smem:[#allocation0]]
  $region49: #{bottleneck_ibn_nhwc.7} parent=0
    _
  %s7 = ssub.s32 1, %s5
  %s8 = scalar_select 0, %s7, %s5
  $region1: #{bottleneck_ibn_nhwc.7} parent=0
    #allocation2 [shape = 'u8[262144]{0}', space=vmem, size = 0x40000, scoped, tag = 'output window, operand 0']
    #allocation3 [shape = 's32[2]{0}', space=sflag, size = 0x8, scoped, tag = 'scoped memory for bottleneck_ibn_nhwc.7']
    %9 = vsyncpa [#allocation3], 0
    %s10 = scalar_lea.sflag [#allocation3], 1
    %11 = vsyncpa %s10, 0
    loop: start=0, step=1, limit=4
    $region2: #{bottleneck_ibn_nhwc.7} parent=1 // loop_pre_header
      _
    $region3: #{bottleneck_ibn_nhwc.7} parent=1 // loop_header
      %s13 = sphi 0, %s17
      %p14 = scmp.ge.s32.totalorder %s13, 4
      %s23 = sphi 0, %s25
      %s26 = sphi 0, %s23
      %s27 = sphi 0, %s26
      %s43 = sphi 0, %s27
      %s49 = sphi 0, %s51
      %s52 = sphi 0, %s49
      %s53 = sphi 0, %s52
      %s69 = sphi 0, %s53
      %s73 = sphi 0, %s73
      %s75 = sphi 0, %s73
      %s76 = sphi 0, %s75
      %s90 = sphi 0, %s76
      %s94 = sphi 0, %s94
      %s96 = sphi 0, %s94
      %s97 = sphi 0, %s96
      %s111 = sphi 0, %s97
      %s117 = sphi 0, %s119
      %s120 = sphi 0, %s117
      %s121 = sphi 0, %s120
      %s137 = sphi 0, %s121
    $region4: #{bottleneck_ibn_nhwc.7} parent=1 // loop_header_branch
      %16 = sbr.rel (%p14) target = $region8
    $region5: #{bottleneck_ibn_nhwc.7} parent=1 // loop_body
      %s18 = ssub.s32 %s13, 1
      %s19 = ssub.s32 %s13, 2
      %s20 = sadd.s32 %s13, 1
      %s21 = ssub.s32 %s13, %s20
      %p22 = scmp.eq.s32.totalorder %s21, 0
      %s24 = sadd.s32 %s23, 1
      %s25 = scalar_select %p22, %s23, %s24
      %p28 = pneg %p22
      %p29 = scmp.eq.s32.totalorder %s13, 1
      %p30 = por %p28, %p29
      %p31 = scmp.ne.s32.totalorder %s23, %s26
      %p32 = scmp.eq.s32.totalorder %s13, 0
      %p33 = por %p31, %p32
      %p34 = scmp.ne.s32.totalorder %s23, %s26
      %p35 = scmp.eq.s32.totalorder %s18, 1
      %p36 = por %p34, %p35
      %p37 = scmp.ne.s32.totalorder %s26, %s27
      %p38 = scmp.eq.s32.totalorder %s18, 0
      %p39 = por %p37, %p38
      %p40 = scmp.ne.s32.totalorder %s26, %s27
      %p41 = scmp.eq.s32.totalorder %s19, 1
      %p42 = por %p40, %p41
      %p44 = scmp.ne.s32.totalorder %s27, %s43
      %p45 = scmp.eq.s32.totalorder %s19, 0
      %p46 = por %p44, %p45
      %s47 = ssub.s32 %s13, %s20
      %p48 = scmp.eq.s32.totalorder %s47, 0
      %s50 = sadd.s32 %s49, 1
      %s51 = scalar_select %p48, %s49, %s50
      %p54 = pneg %p48
      %p55 = scmp.eq.s32.totalorder %s13, 1
      %p56 = por %p54, %p55
      %p57 = scmp.ne.s32.totalorder %s49, %s52
      %p58 = scmp.eq.s32.totalorder %s13, 0
      %p59 = por %p57, %p58
      %p60 = scmp.ne.s32.totalorder %s49, %s52
      %p61 = scmp.eq.s32.totalorder %s18, 1
      %p62 = por %p60, %p61
      %p63 = scmp.ne.s32.totalorder %s52, %s53
      %p64 = scmp.eq.s32.totalorder %s18, 0
      %p65 = por %p63, %p64
      %p66 = scmp.ne.s32.totalorder %s52, %s53
      %p67 = scmp.eq.s32.totalorder %s19, 1
      %p68 = por %p66, %p67
      %p70 = scmp.ne.s32.totalorder %s53, %s69
      %p71 = scmp.eq.s32.totalorder %s19, 0
      %p72 = por %p70, %p71
      %s74 = sadd.s32 %s73, 1
      %p77 = scmp.eq.s32.totalorder %s13, 1
      %p78 = scmp.ne.s32.totalorder %s73, %s75
      %p79 = scmp.eq.s32.totalorder %s13, 0
      %p80 = por %p78, %p79
      %p81 = scmp.ne.s32.totalorder %s73, %s75
      %p82 = scmp.eq.s32.totalorder %s18, 1
      %p83 = por %p81, %p82
      %p84 = scmp.ne.s32.totalorder %s75, %s76
      %p85 = scmp.eq.s32.totalorder %s18, 0
      %p86 = por %p84, %p85
      %p87 = scmp.ne.s32.totalorder %s75, %s76
      %p88 = scmp.eq.s32.totalorder %s19, 1
      %p89 = por %p87, %p88
      %p91 = scmp.ne.s32.totalorder %s76, %s90
      %p92 = scmp.eq.s32.totalorder %s19, 0
      %p93 = por %p91, %p92
      %s95 = sadd.s32 %s94, 1
      %p98 = scmp.eq.s32.totalorder %s13, 1
      %p99 = scmp.ne.s32.totalorder %s94, %s96
      %p100 = scmp.eq.s32.totalorder %s13, 0
      %p101 = por %p99, %p100
      %p102 = scmp.ne.s32.totalorder %s94, %s96
      %p103 = scmp.eq.s32.totalorder %s18, 1
      %p104 = por %p102, %p103
      %p105 = scmp.ne.s32.totalorder %s96, %s97
      %p106 = scmp.eq.s32.totalorder %s18, 0
      %p107 = por %p105, %p106
      %p108 = scmp.ne.s32.totalorder %s96, %s97
      %p109 = scmp.eq.s32.totalorder %s19, 1
      %p110 = por %p108, %p109
      %p112 = scmp.ne.s32.totalorder %s97, %s111
      %p113 = scmp.eq.s32.totalorder %s19, 0
      %p114 = por %p112, %p113
      %s115 = ssub.s32 %s13, %s20
      %p116 = scmp.eq.s32.totalorder %s115, 0
      %s118 = sadd.s32 %s117, 1
      %s119 = scalar_select %p116, %s117, %s118
      %p122 = pneg %p116
      %p123 = scmp.eq.s32.totalorder %s13, 1
      %p124 = por %p122, %p123
      %p125 = scmp.ne.s32.totalorder %s117, %s120
      %p126 = scmp.eq.s32.totalorder %s13, 0
      %p127 = por %p125, %p126
      %p128 = scmp.ne.s32.totalorder %s117, %s120
      %p129 = scmp.eq.s32.totalorder %s18, 1
      %p130 = por %p128, %p129
      %p131 = scmp.ne.s32.totalorder %s120, %s121
      %p132 = scmp.eq.s32.totalorder %s18, 0
      %p133 = por %p131, %p132
      %p134 = scmp.ne.s32.totalorder %s120, %s121
      %p135 = scmp.eq.s32.totalorder %s19, 1
      %p136 = por %p134, %p135
      %p138 = scmp.ne.s32.totalorder %s121, %s137
      %p139 = scmp.eq.s32.totalorder %s19, 0
      %p140 = por %p138, %p139
      %p141 = scmp.le.s32.totalorder 1, %s13
      %p142 = scmp.lt.s32.totalorder %s13, 3
      %p143 = pnand %p141, %p142
      %p144 = pneg %p143
      // Predicated region
      $region9: #{bottleneck_ibn_nhwc.7} parent=5 // pred_check
        _
      $region10: #{bottleneck_ibn_nhwc.7} parent=5 // pred_check_branch
        %146 = sbr.rel (%p143) target = $region12
      $region11: #{bottleneck_ibn_nhwc.7} parent=5 // pred_region
        %s147 = ssub.s32 %s13, 1
        // Predicated region
        $region13: #{bottleneck_ibn_nhwc.7} parent=11 // pred_check
          %p148 = pneg %p86
        $region14: #{bottleneck_ibn_nhwc.7} parent=11 // pred_check_branch
          %150 = sbr.rel (%p148) target = $region16
        $region15: #{bottleneck_ibn_nhwc.7} parent=11 // pred_region
          _
        $region16: #{bottleneck_ibn_nhwc.7} parent=11 // pred_fallthru
          _
        // Predicated region
        $region17: #{bottleneck_ibn_nhwc.7} parent=11 // pred_check
          %p151 = pneg %p107
        $region18: #{bottleneck_ibn_nhwc.7} parent=11 // pred_check_branch
          %153 = sbr.rel (%p151) target = $region20
        $region19: #{bottleneck_ibn_nhwc.7} parent=11 // pred_region
          _
        $region20: #{bottleneck_ibn_nhwc.7} parent=11 // pred_fallthru
          _
      $region12: #{bottleneck_ibn_nhwc.7} parent=5 // pred_fallthru
        _
      %p154 = scmp.lt.s32.totalorder %s13, 2
      // Predicated region
      $region21: #{bottleneck_ibn_nhwc.7} parent=5 // pred_check
        %p155 = pneg %p154
      $region22: #{bottleneck_ibn_nhwc.7} parent=5 // pred_check_branch
        %157 = sbr.rel (%p155) target = $region24
      $region23: #{bottleneck_ibn_nhwc.7} parent=5 // pred_region
        // Predicated region
        $region25: #{bottleneck_ibn_nhwc.7} parent=23 // pred_check
          %p158 = pneg %p33
        $region26: #{bottleneck_ibn_nhwc.7} parent=23 // pred_check_branch
          %160 = sbr.rel (%p158) target = $region28
        $region27: #{bottleneck_ibn_nhwc.7} parent=23 // pred_region
          %p161 = scmp.lt.s32.totalorder %s13, 1
          %s162 = scalar_select %p161, %s13, 1
          %s163 = smul.addr %s162, 32
          %s164 = smul.addr %s163, 4
          %s165 = scalar_lea.vmem %s0, %s164
        $region28: #{bottleneck_ibn_nhwc.7} parent=23 // pred_fallthru
          _
        // Predicated region
        $region29: #{bottleneck_ibn_nhwc.7} parent=23 // pred_check
          %p166 = pneg %p59
        $region30: #{bottleneck_ibn_nhwc.7} parent=23 // pred_check_branch
          %168 = sbr.rel (%p166) target = $region32
        $region31: #{bottleneck_ibn_nhwc.7} parent=23 // pred_region
          %p169 = scmp.lt.s32.totalorder %s13, 1
          %s170 = scalar_select %p169, %s13, 1
          %s171 = smul.addr %s170, 32
          %s172 = smul.addr %s171, 8
          %s173 = scalar_lea.vmem %s1, %s172
        $region32: #{bottleneck_ibn_nhwc.7} parent=23 // pred_fallthru
          _
      $region24: #{bottleneck_ibn_nhwc.7} parent=5 // pred_fallthru
        _
      %p174 = scmp.le.s32.totalorder 1, %s13
      %p175 = scmp.lt.s32.totalorder %s13, 3
      %p176 = pnand %p174, %p175
      %p177 = pneg %p176
      // Predicated region
      $region33: #{bottleneck_ibn_nhwc.7} parent=5 // pred_check
        _
      $region34: #{bottleneck_ibn_nhwc.7} parent=5 // pred_check_branch
        %179 = sbr.rel (%p176) target = $region36
      $region35: #{bottleneck_ibn_nhwc.7} parent=5 // pred_region
        %s180 = ssub.s32 %s13, 1
        %p181 = scmp.lt.s32.totalorder %s18, 1
        %s182 = scalar_select %p181, %s18, 1
        %s183 = smul.addr %s182, 32
        %s184 = smul.addr %s183, 4
        %s185 = scalar_lea.vmem %s0, %s184
        %p186 = pneg %p39
        %p187 = pneg %p36
        %p188 = scmp.lt.s32.totalorder %s18, 1
        %s189 = scalar_select %p188, %s18, 1
        %s190 = smul.addr %s189, 32
        %s191 = smul.addr %s190, 8
        %s192 = scalar_lea.vmem %s1, %s191
        %p193 = pneg %p65
        %p194 = pneg %p62
        %p195 = pneg %p86
        %p196 = pneg %p83
        %p197 = pneg %p107
        %p198 = pneg %p104
        %p199 = pneg %p133
        %p200 = pneg %p130
        %s201 = sand.u32 %s120, 1
        %s202 = scalar_lea.sflag [#allocation3], %s201
        %s203 = sand.u32 %s120, 1
        %s204 = smul.addr %s203, 256
        %s205 = scalar_lea.vmem [#allocation2], %s204
        %p206 = scmp.lt.s32.totalorder %s18, 1
        %s207 = scalar_select %p206, %s18, 1
        %s208 = smul.addr %s207, 32
        %s209 = smul.addr %s208, 4
        %s210 = scalar_lea.vmem %s0, %s209
        %p211 = scmp.lt.s32.totalorder %s18, 1
        %s212 = scalar_select %p211, %s18, 1
        %s213 = smul.addr %s212, 32
        %s214 = smul.addr %s213, 8
        %s215 = scalar_lea.vmem %s1, %s214
        %v216 = vld [vmem:[%s210] sm:$0xf]
        %v217 = vld [vmem:[%s210 + $0x4] sm:$0xf]
        %v218 = vld [vmem:[%s210 + $0x8] sm:$0xf]
        %v219 = vld [vmem:[%s210 + $0xc] sm:$0xf]
        %v220 = vld [vmem:[%s210 + $0x10] sm:$0xf]
        %v221 = vld [vmem:[%s210 + $0x14] sm:$0xf]
        %v222 = vld [vmem:[%s210 + $0x18] sm:$0xf]
        %v223 = vld [vmem:[%s210 + $0x1c] sm:$0xf]
        %v224 = vld [vmem:[%s210 + $0x20] sm:$0xf]
        %v225 = vld [vmem:[%s210 + $0x24] sm:$0xf]
        %v226 = vld [vmem:[%s210 + $0x28] sm:$0xf]
        %v227 = vld [vmem:[%s210 + $0x2c] sm:$0xf]
        %v228 = vld [vmem:[%s210 + $0x30] sm:$0xf]
        %v229 = vld [vmem:[%s210 + $0x34] sm:$0xf]
        %v230 = vld [vmem:[%s210 + $0x38] sm:$0xf]
        %v231 = vld [vmem:[%s210 + $0x3c] sm:$0xf]
        %v232 = vld [vmem:[%s210 + $0x40] sm:$0xf]
        %v233 = vld [vmem:[%s210 + $0x44] sm:$0xf]
        %v234 = vld [vmem:[%s210 + $0x48] sm:$0xf]
        %v235 = vld [vmem:[%s210 + $0x4c] sm:$0xf]
        %v236 = vld [vmem:[%s210 + $0x50] sm:$0xf]
        %v237 = vld [vmem:[%s210 + $0x54] sm:$0xf]
        %v238 = vld [vmem:[%s210 + $0x58] sm:$0xf]
        %v239 = vld [vmem:[%s210 + $0x5c] sm:$0xf]
        %v240 = vld [vmem:[%s210 + $0x60] sm:$0xf]
        %v241 = vld [vmem:[%s210 + $0x64] sm:$0xf]
        %v242 = vld [vmem:[%s210 + $0x68] sm:$0xf]
        %v243 = vld [vmem:[%s210 + $0x6c] sm:$0xf]
        %v244 = vld [vmem:[%s210 + $0x70] sm:$0xf]
        %v245 = vld [vmem:[%s210 + $0x74] sm:$0xf]
        %v246 = vld [vmem:[%s210 + $0x78] sm:$0xf]
        %v247 = vld [vmem:[%s210 + $0x7c] sm:$0xf]
        %v248 = vunpack.c.l.bf16 %v216
        %v249 = vunpack.c.l.bf16 %v217
        %v250 = vunpack.c.l.bf16 %v218
        %v251 = vunpack.c.l.bf16 %v219
        %v252 = vunpack.c.l.bf16 %v220
        %v253 = vunpack.c.l.bf16 %v221
        %v254 = vunpack.c.l.bf16 %v222
        %v255 = vunpack.c.l.bf16 %v223
        %v256 = vunpack.c.l.bf16 %v224
        %v257 = vunpack.c.l.bf16 %v225
        %v258 = vunpack.c.l.bf16 %v226
        %v259 = vunpack.c.l.bf16 %v227
        %v260 = vunpack.c.l.bf16 %v228
        %v261 = vunpack.c.l.bf16 %v229
        %v262 = vunpack.c.l.bf16 %v230
        %v263 = vunpack.c.l.bf16 %v231
        %v264 = vunpack.c.l.bf16 %v232
        %v265 = vunpack.c.l.bf16 %v233
        %v266 = vunpack.c.l.bf16 %v234
        %v267 = vunpack.c.l.bf16 %v235
        %v268 = vunpack.c.l.bf16 %v236
        %v269 = vunpack.c.l.bf16 %v237
        %v270 = vunpack.c.l.bf16 %v238
        %v271 = vunpack.c.l.bf16 %v239
        %v272 = vunpack.c.l.bf16 %v240
        %v273 = vunpack.c.l.bf16 %v241
        %v274 = vunpack.c.l.bf16 %v242
        %v275 = vunpack.c.l.bf16 %v243
        %v276 = vunpack.c.l.bf16 %v244
        %v277 = vunpack.c.l.bf16 %v245
        %v278 = vunpack.c.l.bf16 %v246
        %v279 = vunpack.c.l.bf16 %v247
        %v280 = vld [vmem:[%s215] sm:$0xff]
        %v281 = vld [vmem:[%s215 + $0x8] sm:$0xff]
        %v282 = vld [vmem:[%s215 + $0x10] sm:$0xff]
        %v283 = vld [vmem:[%s215 + $0x18] sm:$0xff]
        %v284 = vld [vmem:[%s215 + $0x20] sm:$0xff]
        %v285 = vld [vmem:[%s215 + $0x28] sm:$0xff]
        %v286 = vld [vmem:[%s215 + $0x30] sm:$0xff]
        %v287 = vld [vmem:[%s215 + $0x38] sm:$0xff]
        %v288 = vld [vmem:[%s215 + $0x40] sm:$0xff]
        %v289 = vld [vmem:[%s215 + $0x48] sm:$0xff]
        %v290 = vld [vmem:[%s215 + $0x50] sm:$0xff]
        %v291 = vld [vmem:[%s215 + $0x58] sm:$0xff]
        %v292 = vld [vmem:[%s215 + $0x60] sm:$0xff]
        %v293 = vld [vmem:[%s215 + $0x68] sm:$0xff]
        %v294 = vld [vmem:[%s215 + $0x70] sm:$0xff]
        %v295 = vld [vmem:[%s215 + $0x78] sm:$0xff]
        %v296 = vld [vmem:[%s215 + $0x80] sm:$0xff]
        %v297 = vld [vmem:[%s215 + $0x88] sm:$0xff]
        %v298 = vld [vmem:[%s215 + $0x90] sm:$0xff]
        %v299 = vld [vmem:[%s215 + $0x98] sm:$0xff]
        %v300 = vld [vmem:[%s215 + $0xa0] sm:$0xff]
        %v301 = vld [vmem:[%s215 + $0xa8] sm:$0xff]
        %v302 = vld [vmem:[%s215 + $0xb0] sm:$0xff]
        %v303 = vld [vmem:[%s215 + $0xb8] sm:$0xff]
        %v304 = vld [vmem:[%s215 + $0xc0] sm:$0xff]
        %v305 = vld [vmem:[%s215 + $0xc8] sm:$0xff]
        %v306 = vld [vmem:[%s215 + $0xd0] sm:$0xff]
        %v307 = vld [vmem:[%s215 + $0xd8] sm:$0xff]
        %v308 = vld [vmem:[%s215 + $0xe0] sm:$0xff]
        %v309 = vld [vmem:[%s215 + $0xe8] sm:$0xff]
        %v310 = vld [vmem:[%s215 + $0xf0] sm:$0xff]
        %v311 = vld [vmem:[%s215 + $0xf8] sm:$0xff]
        %v312 = vld [vmem:[%s2] sm:$0x1]
        %v313 = vld [vmem:[%s3] sm:$0x1]
        %v315 = vlaneseq
        %v316 = vshrl.u32 %v315, 7
        %v317 = vsub.s32 0, %v316
        %v318 = vrot.slane %v312, %v317
        %v320 = vmul.f32 %v248, %v318
        %v321 = vmul.f32 %v249, %v318
        %v322 = vmul.f32 %v250, %v318
        %v323 = vmul.f32 %v251, %v318
        %v324 = vmul.f32 %v252, %v318
        %v325 = vmul.f32 %v253, %v318
        %v326 = vmul.f32 %v254, %v318
        %v327 = vmul.f32 %v255, %v318
        %v328 = vmul.f32 %v256, %v318
        %v329 = vmul.f32 %v257, %v318
        %v330 = vmul.f32 %v258, %v318
        %v331 = vmul.f32 %v259, %v318
        %v332 = vmul.f32 %v260, %v318
        %v333 = vmul.f32 %v261, %v318
        %v334 = vmul.f32 %v262, %v318
        %v335 = vmul.f32 %v263, %v318
        %v336 = vmul.f32 %v264, %v318
        %v337 = vmul.f32 %v265, %v318
        %v338 = vmul.f32 %v266, %v318
        %v339 = vmul.f32 %v267, %v318
        %v340 = vmul.f32 %v268, %v318
        %v341 = vmul.f32 %v269, %v318
        %v342 = vmul.f32 %v270, %v318
        %v343 = vmul.f32 %v271, %v318
        %v344 = vmul.f32 %v272, %v318
        %v345 = vmul.f32 %v273, %v318
        %v346 = vmul.f32 %v274, %v318
        %v347 = vmul.f32 %v275, %v318
        %v348 = vmul.f32 %v276, %v318
        %v349 = vmul.f32 %v277, %v318
        %v350 = vmul.f32 %v278, %v318
        %v351 = vmul.f32 %v279, %v318
        %v353 = vlaneseq
        %v354 = vshrl.u32 %v353, 7
        %v355 = vsub.s32 0, %v354
        %v356 = vrot.slane %v313, %v355
        %v358 = vadd.f32 %v320, %v356
        %v359 = vadd.f32 %v321, %v356
        %v360 = vadd.f32 %v322, %v356
        %v361 = vadd.f32 %v323, %v356
        %v362 = vadd.f32 %v324, %v356
        %v363 = vadd.f32 %v325, %v356
        %v364 = vadd.f32 %v326, %v356
        %v365 = vadd.f32 %v327, %v356
        %v366 = vadd.f32 %v328, %v356
        %v367 = vadd.f32 %v329, %v356
        %v368 = vadd.f32 %v330, %v356
        %v369 = vadd.f32 %v331, %v356
        %v370 = vadd.f32 %v332, %v356
        %v371 = vadd.f32 %v333, %v356
        %v372 = vadd.f32 %v334, %v356
        %v373 = vadd.f32 %v335, %v356
        %v374 = vadd.f32 %v336, %v356
        %v375 = vadd.f32 %v337, %v356
        %v376 = vadd.f32 %v338, %v356
        %v377 = vadd.f32 %v339, %v356
        %v378 = vadd.f32 %v340, %v356
        %v379 = vadd.f32 %v341, %v356
        %v380 = vadd.f32 %v342, %v356
        %v381 = vadd.f32 %v343, %v356
        %v382 = vadd.f32 %v344, %v356
        %v383 = vadd.f32 %v345, %v356
        %v384 = vadd.f32 %v346, %v356
        %v385 = vadd.f32 %v347, %v356
        %v386 = vadd.f32 %v348, %v356
        %v387 = vadd.f32 %v349, %v356
        %v388 = vadd.f32 %v350, %v356
        %v389 = vadd.f32 %v351, %v356
        %v390 = vadd.f32 %v358, %v280
        %v391 = vadd.f32 %v359, %v281
        %v392 = vadd.f32 %v360, %v282
        %v393 = vadd.f32 %v361, %v283
        %v394 = vadd.f32 %v362, %v284
        %v395 = vadd.f32 %v363, %v285
        %v396 = vadd.f32 %v364, %v286
        %v397 = vadd.f32 %v365, %v287
        %v398 = vadd.f32 %v366, %v288
        %v399 = vadd.f32 %v367, %v289
        %v400 = vadd.f32 %v368, %v290
        %v401 = vadd.f32 %v369, %v291
        %v402 = vadd.f32 %v370, %v292
        %v403 = vadd.f32 %v371, %v293
        %v404 = vadd.f32 %v372, %v294
        %v405 = vadd.f32 %v373, %v295
        %v406 = vadd.f32 %v374, %v296
        %v407 = vadd.f32 %v375, %v297
        %v408 = vadd.f32 %v376, %v298
        %v409 = vadd.f32 %v377, %v299
        %v410 = vadd.f32 %v378, %v300
        %v411 = vadd.f32 %v379, %v301
        %v412 = vadd.f32 %v380, %v302
        %v413 = vadd.f32 %v381, %v303
        %v414 = vadd.f32 %v382, %v304
        %v415 = vadd.f32 %v383, %v305
        %v416 = vadd.f32 %v384, %v306
        %v417 = vadd.f32 %v385, %v307
        %v418 = vadd.f32 %v386, %v308
        %v419 = vadd.f32 %v387, %v309
        %v420 = vadd.f32 %v388, %v310
        %v421 = vadd.f32 %v389, %v311
        %v422 = vmax.f32 %v390, 0.0
        %v423 = vmax.f32 %v391, 0.0
        %v424 = vmax.f32 %v392, 0.0
        %v425 = vmax.f32 %v393, 0.0
        %v426 = vmax.f32 %v394, 0.0
        %v427 = vmax.f32 %v395, 0.0
        %v428 = vmax.f32 %v396, 0.0
        %v429 = vmax.f32 %v397, 0.0
        %v430 = vmax.f32 %v398, 0.0
        %v431 = vmax.f32 %v399, 0.0
        %v432 = vmax.f32 %v400, 0.0
        %v433 = vmax.f32 %v401, 0.0
        %v434 = vmax.f32 %v402, 0.0
        %v435 = vmax.f32 %v403, 0.0
        %v436 = vmax.f32 %v404, 0.0
        %v437 = vmax.f32 %v405, 0.0
        %v438 = vmax.f32 %v406, 0.0
        %v439 = vmax.f32 %v407, 0.0
        %v440 = vmax.f32 %v408, 0.0
        %v441 = vmax.f32 %v409, 0.0
        %v442 = vmax.f32 %v410, 0.0
        %v443 = vmax.f32 %v411, 0.0
        %v444 = vmax.f32 %v412, 0.0
        %v445 = vmax.f32 %v413, 0.0
        %v446 = vmax.f32 %v414, 0.0
        %v447 = vmax.f32 %v415, 0.0
        %v448 = vmax.f32 %v416, 0.0
        %v449 = vmax.f32 %v417, 0.0
        %v450 = vmax.f32 %v418, 0.0
        %v451 = vmax.f32 %v419, 0.0
        %v452 = vmax.f32 %v420, 0.0
        %v453 = vmax.f32 %v421, 0.0
        %vm454 = vcmask 523264
        %455 = vst.msk [vmem:[%s205] sm:$0xff] %vm454, %v422
        %456 = vst.msk [vmem:[%s205 + $0x8] sm:$0xff] %vm454, %v423
        %457 = vst.msk [vmem:[%s205 + $0x10] sm:$0xff] %vm454, %v424
        %458 = vst.msk [vmem:[%s205 + $0x18] sm:$0xff] %vm454, %v425
        %459 = vst.msk [vmem:[%s205 + $0x20] sm:$0xff] %vm454, %v426
        %460 = vst.msk [vmem:[%s205 + $0x28] sm:$0xff] %vm454, %v427
        %461 = vst.msk [vmem:[%s205 + $0x30] sm:$0xff] %vm454, %v428
        %462 = vst.msk [vmem:[%s205 + $0x38] sm:$0xff] %vm454, %v429
        %463 = vst.msk [vmem:[%s205 + $0x40] sm:$0xff] %vm454, %v430
        %464 = vst.msk [vmem:[%s205 + $0x48] sm:$0xff] %vm454, %v431
        %465 = vst.msk [vmem:[%s205 + $0x50] sm:$0xff] %vm454, %v432
        %466 = vst.msk [vmem:[%s205 + $0x58] sm:$0xff] %vm454, %v433
        %467 = vst.msk [vmem:[%s205 + $0x60] sm:$0xff] %vm454, %v434
        %468 = vst.msk [vmem:[%s205 + $0x68] sm:$0xff] %vm454, %v435
        %469 = vst.msk [vmem:[%s205 + $0x70] sm:$0xff] %vm454, %v436
        %470 = vst.msk [vmem:[%s205 + $0x78] sm:$0xff] %vm454, %v437
        %471 = vst.msk [vmem:[%s205 + $0x80] sm:$0xff] %vm454, %v438
        %472 = vst.msk [vmem:[%s205 + $0x88] sm:$0xff] %vm454, %v439
        %473 = vst.msk [vmem:[%s205 + $0x90] sm:$0xff] %vm454, %v440
        %474 = vst.msk [vmem:[%s205 + $0x98] sm:$0xff] %vm454, %v441
        %475 = vst.msk [vmem:[%s205 + $0xa0] sm:$0xff] %vm454, %v442
        %476 = vst.msk [vmem:[%s205 + $0xa8] sm:$0xff] %vm454, %v443
        %477 = vst.msk [vmem:[%s205 + $0xb0] sm:$0xff] %vm454, %v444
        %478 = vst.msk [vmem:[%s205 + $0xb8] sm:$0xff] %vm454, %v445
        %479 = vst.msk [vmem:[%s205 + $0xc0] sm:$0xff] %vm454, %v446
        %480 = vst.msk [vmem:[%s205 + $0xc8] sm:$0xff] %vm454, %v447
        %481 = vst.msk [vmem:[%s205 + $0xd0] sm:$0xff] %vm454, %v448
        %482 = vst.msk [vmem:[%s205 + $0xd8] sm:$0xff] %vm454, %v449
        %483 = vst.msk [vmem:[%s205 + $0xe0] sm:$0xff] %vm454, %v450
        %484 = vst.msk [vmem:[%s205 + $0xe8] sm:$0xff] %vm454, %v451
        %485 = vst.msk [vmem:[%s205 + $0xf0] sm:$0xff] %vm454, %v452
        %486 = vst.msk [vmem:[%s205 + $0xf8] sm:$0xff] %vm454, %v453
        %s487 = sand.u32 %s120, 1
        %s488 = scalar_lea.sflag [#allocation3], %s487
        %s489 = sand.u32 %s120, 1
        %s490 = smul.addr %s489, 256
        %s491 = scalar_lea.vmem [#allocation2], %s490
        // Predicated region
        $region37: #{bottleneck_ibn_nhwc.7} parent=35 // pred_check
          %p492 = pneg %p130
        $region38: #{bottleneck_ibn_nhwc.7} parent=35 // pred_check_branch
          %494 = sbr.rel (%p492) target = $region40
        $region39: #{bottleneck_ibn_nhwc.7} parent=35 // pred_region
          %s496 = ssub.s32 4096, 4096
          %497 = vsyncadd %s488, %s496
          %s498 = smul.addr %s18, 32
          %s499 = smul.addr %s498, 128
          %s500 = scalar_lea.hbm %s4, %s499
          %s501 = sshll.u32 %s491, 4
          %s502 = int_to_ptr.vmem [resolvable:$true] %s501
          %507 = dma.vmem_to_hbm [thread:$0]  %s502, 4096, %s500, %s488, 128, 128, 8
        $region40: #{bottleneck_ibn_nhwc.7} parent=35 // pred_fallthru
          _
      $region36: #{bottleneck_ibn_nhwc.7} parent=5 // pred_fallthru
        _
      %p508 = scmp.le.s32.totalorder 2, %s13
      // Predicated region
      $region41: #{bottleneck_ibn_nhwc.7} parent=5 // pred_check
        %p509 = pneg %p508
      $region42: #{bottleneck_ibn_nhwc.7} parent=5 // pred_check_branch
        %511 = sbr.rel (%p509) target = $region44
      $region43: #{bottleneck_ibn_nhwc.7} parent=5 // pred_region
        %s512 = ssub.s32 %s13, 2
        // Predicated region
        $region45: #{bottleneck_ibn_nhwc.7} parent=43 // pred_check
          %p513 = pneg %p136
        $region46: #{bottleneck_ibn_nhwc.7} parent=43 // pred_check_branch
          %515 = sbr.rel (%p513) target = $region48
        $region47: #{bottleneck_ibn_nhwc.7} parent=43 // pred_region
          %s516 = sand.u32 %s121, 1
          %s517 = scalar_lea.sflag [#allocation3], %s516
          %s518 = sand.u32 %s121, 1
          %s519 = smul.addr %s518, 256
          %s520 = scalar_lea.vmem [#allocation2], %s519
          %521 = dma.done %s517, 4096
        $region48: #{bottleneck_ibn_nhwc.7} parent=43 // pred_fallthru
          _
      $region44: #{bottleneck_ibn_nhwc.7} parent=5 // pred_fallthru
        _
    $region6: #{bottleneck_ibn_nhwc.7} parent=1 // loop_footer
      %s17 = sadd.s32 1, %s13
    $region7: #{bottleneck_ibn_nhwc.7} parent=1 // loop_footer_branch
      %12 = sbr.rel target = $region3
    $region8: #{bottleneck_ibn_nhwc.7} parent=1 // loop_exit
      _
    %522 = vsyncpa [#allocation3], 1
    %s523 = scalar_lea.sflag [#allocation3], 1
    %524 = vsyncpa %s523, 1

// kernel: bottleneck_ibn_nhwc.4
$region0: #{bottleneck_ibn_nhwc.4}
  #allocation0 [shape = 'u32[]', space=smem, size = 0x4, offset = 0x4, fixed_abs, tag = 'smem constant byte address 0x4 - core index']
  #allocation1 [shape = 'u32[144,128]{1,0:T(1,128)}', space=vmem, size = 0x12000, scoped, tag = 'internal scratch']
  %s0 = inlined_call_operand.hbm [shape: f32[2,16,16,64], index: 0, kind: input, shape index: {}]
  %s1 = inlined_call_operand.vmem [shape: bf16[64,16], index: 1, kind: input, shape index: {}]
  %s2 = inlined_call_operand.vmem [shape: bf16[2,16,16,16], index: 2, kind: output, shape index: {0}]
  %s3 = inlined_call_operand.vmem [shape: f32[2,2,16], index: 3, kind: output, shape index: {1}]
  %4 = xla_tuple %s2, %s3
  %s5 = sld [smem:[#allocation0]]
  $region53: #{bottleneck_ibn_nhwc.4} parent=0
    _
  %s7 = ssub.s32 1, %s5
  %s8 = scalar_select 0, %s7, %s5
  $region1: #{bottleneck_ibn_nhwc.4} parent=0
    #allocation2 [shape = 'u8[262144]{0}', space=vmem, size = 0x40000, scoped, tag = 'input window, operand 0']
    #allocation3 [shape = 's32[2]{0}', space=sflag, size = 0x8, scoped, tag = 'scoped memory for bottleneck_ibn_nhwc.4']
    %9 = vsyncpa [#allocation3], 0
    %s10 = scalar_lea.sflag [#allocation3], 1
    %11 = vsyncpa %s10, 0
    loop: start=0, step=1, limit=4
    $region2: #{bottleneck_ibn_nhwc.4} parent=1 // loop_pre_header
      _
    $region3: #{bottleneck_ibn_nhwc.4} parent=1 // loop_header
      %s13 = sphi 0, %s17
      %p14 = scmp.ge.s32.totalorder %s13, 4
      %s23 = sphi 0, %s25
      %s26 = sphi 0, %s23
      %s27 = sphi 0, %s26
      %s43 = sphi 0, %s27
      %s47 = sphi 0, %s47
      %s49 = sphi 0, %s47
      %s50 = sphi 0, %s49
      %s64 = sphi 0, %s50
      %s70 = sphi 0, %s72
      %s73 = sphi 0, %s70
      %s74 = sphi 0, %s73
      %s90 = sphi 0, %s74
      %s96 = sphi 0, %s98
      %s99 = sphi 0, %s96
      %s100 = sphi 0, %s99
      %s116 = sphi 0, %s100
    $region4: #{bottleneck_ibn_nhwc.4} parent=1 // loop_header_branch
      %16 = sbr.rel (%p14) target = $region8
    $region5: #{bottleneck_ibn_nhwc.4} parent=1 // loop_body
      %s18 = ssub.s32 %s13, 1
      %s19 = ssub.s32 %s13, 2
      %s20 = sadd.s32 %s13, 1
      %s21 = ssub.s32 %s13, %s20
      %p22 = scmp.eq.s32.totalorder %s21, 0
      %s24 = sadd.s32 %s23, 1
      %s25 = scalar_select %p22, %s23, %s24
      %p28 = pneg %p22
      %p29 = scmp.eq.s32.totalorder %s13, 1
      %p30 = por %p28, %p29
      %p31 = scmp.ne.s32.totalorder %s23, %s26
      %p32 = scmp.eq.s32.totalorder %s13, 0
      %p33 = por %p31, %p32
      %p34 = scmp.ne.s32.totalorder %s23, %s26
      %p35 = scmp.eq.s32.totalorder %s18, 1
      %p36 = por %p34, %p35
      %p37 = scmp.ne.s32.totalorder %s26, %s27
      %p38 = scmp.eq.s32.totalorder %s18, 0
      %p39 = por %p37, %p38
      %p40 = scmp.ne.s32.totalorder %s26, %s27
      %p41 = scmp.eq.s32.totalorder %s19, 1
      %p42 = por %p40, %p41
      %p44 = scmp.ne.s32.totalorder %s27, %s43
      %p45 = scmp.eq.s32.totalorder %s19, 0
      %p46 = por %p44, %p45
      %s48 = sadd.s32 %s47, 1
      %p51 = scmp.eq.s32.totalorder %s13, 1
      %p52 = scmp.ne.s32.totalorder %s47, %s49
      %p53 = scmp.eq.s32.totalorder %s13, 0
      %p54 = por %p52, %p53
      %p55 = scmp.ne.s32.totalorder %s47, %s49
      %p56 = scmp.eq.s32.totalorder %s18, 1
      %p57 = por %p55, %p56
      %p58 = scmp.ne.s32.totalorder %s49, %s50
      %p59 = scmp.eq.s32.totalorder %s18, 0
      %p60 = por %p58, %p59
      %p61 = scmp.ne.s32.totalorder %s49, %s50
      %p62 = scmp.eq.s32.totalorder %s19, 1
      %p63 = por %p61, %p62
      %p65 = scmp.ne.s32.totalorder %s50, %s64
      %p66 = scmp.eq.s32.totalorder %s19, 0
      %p67 = por %p65, %p66
      %s68 = ssub.s32 %s13, %s20
      %p69 = scmp.eq.s32.totalorder %s68, 0
      %s71 = sadd.s32 %s70, 1
      %s72 = scalar_select %p69, %s70, %s71
      %p75 = pneg %p69
      %p76 = scmp.eq.s32.totalorder %s13, 1
      %p77 = por %p75, %p76
      %p78 = scmp.ne.s32.totalorder %s70, %s73
      %p79 = scmp.eq.s32.totalorder %s13, 0
      %p80 = por %p78, %p79
      %p81 = scmp.ne.s32.totalorder %s70, %s73
      %p82 = scmp.eq.s32.totalorder %s18, 1
      %p83 = por %p81, %p82
      %p84 = scmp.ne.s32.totalorder %s73, %s74
      %p85 = scmp.eq.s32.totalorder %s18, 0
      %p86 = por %p84, %p85
      %p87 = scmp.ne.s32.totalorder %s73, %s74
      %p88 = scmp.eq.s32.totalorder %s19, 1
      %p89 = por %p87, %p88
      %p91 = scmp.ne.s32.totalorder %s74, %s90
      %p92 = scmp.eq.s32.totalorder %s19, 0
      %p93 = por %p91, %p92
      %s94 = ssub.s32 %s13, %s20
      %p95 = scmp.eq.s32.totalorder %s94, 0
      %s97 = sadd.s32 %s96, 1
      %s98 = scalar_select %p95, %s96, %s97
      %p101 = pneg %p95
      %p102 = scmp.eq.s32.totalorder %s13, 1
      %p103 = por %p101, %p102
      %p104 = scmp.ne.s32.totalorder %s96, %s99
      %p105 = scmp.eq.s32.totalorder %s13, 0
      %p106 = por %p104, %p105
      %p107 = scmp.ne.s32.totalorder %s96, %s99
      %p108 = scmp.eq.s32.totalorder %s18, 1
      %p109 = por %p107, %p108
      %p110 = scmp.ne.s32.totalorder %s99, %s100
      %p111 = scmp.eq.s32.totalorder %s18, 0
      %p112 = por %p110, %p111
      %p113 = scmp.ne.s32.totalorder %s99, %s100
      %p114 = scmp.eq.s32.totalorder %s19, 1
      %p115 = por %p113, %p114
      %p117 = scmp.ne.s32.totalorder %s100, %s116
      %p118 = scmp.eq.s32.totalorder %s19, 0
      %p119 = por %p117, %p118
      %p120 = scmp.le.s32.totalorder 1, %s13
      %p121 = scmp.lt.s32.totalorder %s13, 3
      %p122 = pnand %p120, %p121
      %p123 = pneg %p122
      // Predicated region
      $region9: #{bottleneck_ibn_nhwc.4} parent=5 // pred_check
        _
      $region10: #{bottleneck_ibn_nhwc.4} parent=5 // pred_check_branch
        %125 = sbr.rel (%p122) target = $region12
      $region11: #{bottleneck_ibn_nhwc.4} parent=5 // pred_region
        %s126 = ssub.s32 %s13, 1
        // Predicated region
        $region13: #{bottleneck_ibn_nhwc.4} parent=11 // pred_check
          %p127 = pneg %p60
        $region14: #{bottleneck_ibn_nhwc.4} parent=11 // pred_check_branch
          %129 = sbr.rel (%p127) target = $region16
        $region15: #{bottleneck_ibn_nhwc.4} parent=11 // pred_region
          _
        $region16: #{bottleneck_ibn_nhwc.4} parent=11 // pred_fallthru
          _
      $region12: #{bottleneck_ibn_nhwc.4} parent=5 // pred_fallthru
        _
      %p130 = scmp.lt.s32.totalorder %s13, 2
      // Predicated region
      $region17: #{bottleneck_ibn_nhwc.4} parent=5 // pred_check
        %p131 = pneg %p130
      $region18: #{bottleneck_ibn_nhwc.4} parent=5 // pred_check_branch
        %133 = sbr.rel (%p131) target = $region20
      $region19: #{bottleneck_ibn_nhwc.4} parent=5 // pred_region
        // Predicated region
        $region21: #{bottleneck_ibn_nhwc.4} parent=19 // pred_check
          %p134 = pneg %p33
        $region22: #{bottleneck_ibn_nhwc.4} parent=19 // pred_check_branch
          %136 = sbr.rel (%p134) target = $region24
        $region23: #{bottleneck_ibn_nhwc.4} parent=19 // pred_region
          %s137 = sand.u32 %s23, 1
          %s138 = scalar_lea.sflag [#allocation3], %s137
          %s139 = sand.u32 %s23, 1
          %s140 = smul.addr %s139, 256
          %s141 = scalar_lea.vmem [#allocation2], %s140
          %s143 = ssub.s32 4096, 4096
          %144 = vsyncadd %s138, %s143
          %s145 = smul.addr %s13, 32
          %s146 = smul.addr %s145, 128
          %s147 = scalar_lea.hbm %s0, %s146
          %s148 = sshll.u32 %s141, 4
          %s149 = int_to_ptr.vmem [resolvable:$true] %s148
          %154 = dma.hbm_to_vmem [thread:$0]  %s147, 4096, %s149, %s138, 128, 128, 8
        $region24: #{bottleneck_ibn_nhwc.4} parent=19 // pred_fallthru
          _
      $region20: #{bottleneck_ibn_nhwc.4} parent=5 // pred_fallthru
        _
      %p155 = scmp.le.s32.totalorder 1, %s13
      %p156 = scmp.lt.s32.totalorder %s13, 3
      %p157 = pnand %p155, %p156
      %p158 = pneg %p157
      // Predicated region
      $region25: #{bottleneck_ibn_nhwc.4} parent=5 // pred_check
        _
      $region26: #{bottleneck_ibn_nhwc.4} parent=5 // pred_check_branch
        %160 = sbr.rel (%p157) target = $region28
      $region27: #{bottleneck_ibn_nhwc.4} parent=5 // pred_region
        %s161 = ssub.s32 %s13, 1
        %s162 = sand.u32 %s26, 1
        %s163 = scalar_lea.sflag [#allocation3], %s162
        %s164 = sand.u32 %s26, 1
        %s165 = smul.addr %s164, 256
        %s166 = scalar_lea.vmem [#allocation2], %s165
        // Predicated region
        $region29: #{bottleneck_ibn_nhwc.4} parent=27 // pred_check
          %p167 = pneg %p39
        $region30: #{bottleneck_ibn_nhwc.4} parent=27 // pred_check_branch
          %169 = sbr.rel (%p167) target = $region32
        $region31: #{bottleneck_ibn_nhwc.4} parent=27 // pred_region
          %170 = dma.done %s163, 4096
        $region32: #{bottleneck_ibn_nhwc.4} parent=27 // pred_fallthru
          _
        %s171 = sand.u32 %s26, 1
        %s172 = scalar_lea.sflag [#allocation3], %s171
        %s173 = sand.u32 %s26, 1
        %s174 = smul.addr %s173, 256
        %s175 = scalar_lea.vmem [#allocation2], %s174
        %p176 = pneg %p39
        %p177 = pneg %p36
        %p178 = pneg %p60
        %p179 = pneg %p57
        %p180 = pneg %p86
        %p181 = pneg %p83
        %p182 = scmp.lt.s32.totalorder %s18, 1
        %s183 = scalar_select %p182, %s18, 1
        %s184 = smul.addr %s183, 32
        %s185 = smul.addr %s184, 4
        %s186 = scalar_lea.vmem %s2, %s185
        %p187 = pneg %p112
        %p188 = pneg %p109
        %p189 = scmp.lt.s32.totalorder %s18, 1
        %s190 = scalar_select %p189, %s18, 1
        %s191 = smul.addr %s190, 2
        %s192 = scalar_lea.vmem %s3, %s191
        %p193 = scmp.lt.s32.totalorder %s18, 1
        %s194 = scalar_select %p193, %s18, 1
        %s195 = smul.addr %s194, 32
        %s196 = smul.addr %s195, 4
        %s197 = scalar_lea.vmem %s2, %s196
        %p198 = scmp.lt.s32.totalorder %s18, 1
        %s199 = scalar_select %p198, %s18, 1
        %s200 = smul.addr %s199, 2
        %s201 = scalar_lea.vmem %s3, %s200
        %v203 = vld [vmem:[%s166] sm:$0xff]
        %v204 = vld [vmem:[%s166 + $0x8] sm:$0xff]
        %v205 = vld [vmem:[%s166 + $0x10] sm:$0xff]
        %v206 = vld [vmem:[%s166 + $0x18] sm:$0xff]
        %v207 = vld [vmem:[%s166 + $0x20] sm:$0xff]
        %v208 = vld [vmem:[%s166 + $0x28] sm:$0xff]
        %v209 = vld [vmem:[%s166 + $0x30] sm:$0xff]
        %v210 = vld [vmem:[%s166 + $0x38] sm:$0xff]
        %v211 = vld [vmem:[%s166 + $0x40] sm:$0xff]
        %v212 = vld [vmem:[%s166 + $0x48] sm:$0xff]
        %v213 = vld [vmem:[%s166 + $0x50] sm:$0xff]
        %v214 = vld [vmem:[%s166 + $0x58] sm:$0xff]
        %v215 = vld [vmem:[%s166 + $0x60] sm:$0xff]
        %v216 = vld [vmem:[%s166 + $0x68] sm:$0xff]
        %v217 = vld [vmem:[%s166 + $0x70] sm:$0xff]
        %v218 = vld [vmem:[%s166 + $0x78] sm:$0xff]
        %v219 = vld [vmem:[%s166 + $0x80] sm:$0xff]
        %v220 = vld [vmem:[%s166 + $0x88] sm:$0xff]
        %v221 = vld [vmem:[%s166 + $0x90] sm:$0xff]
        %v222 = vld [vmem:[%s166 + $0x98] sm:$0xff]
        %v223 = vld [vmem:[%s166 + $0xa0] sm:$0xff]
        %v224 = vld [vmem:[%s166 + $0xa8] sm:$0xff]
        %v225 = vld [vmem:[%s166 + $0xb0] sm:$0xff]
        %v226 = vld [vmem:[%s166 + $0xb8] sm:$0xff]
        %v227 = vld [vmem:[%s166 + $0xc0] sm:$0xff]
        %v228 = vld [vmem:[%s166 + $0xc8] sm:$0xff]
        %v229 = vld [vmem:[%s166 + $0xd0] sm:$0xff]
        %v230 = vld [vmem:[%s166 + $0xd8] sm:$0xff]
        %v231 = vld [vmem:[%s166 + $0xe0] sm:$0xff]
        %v232 = vld [vmem:[%s166 + $0xe8] sm:$0xff]
        %v233 = vld [vmem:[%s166 + $0xf0] sm:$0xff]
        %v234 = vld [vmem:[%s166 + $0xf8] sm:$0xff]
        %v235 = vpack.c.bf16 %v204, %v203
        %v236 = vpack.c.bf16 %v206, %v205
        %v237 = vpack.c.bf16 %v208, %v207
        %v238 = vpack.c.bf16 %v210, %v209
        %v239 = vpack.c.bf16 %v212, %v211
        %v240 = vpack.c.bf16 %v214, %v213
        %v241 = vpack.c.bf16 %v216, %v215
        %v242 = vpack.c.bf16 %v218, %v217
        %v243 = vpack.c.bf16 %v220, %v219
        %v244 = vpack.c.bf16 %v222, %v221
        %v245 = vpack.c.bf16 %v224, %v223
        %v246 = vpack.c.bf16 %v226, %v225
        %v247 = vpack.c.bf16 %v228, %v227
        %v248 = vpack.c.bf16 %v230, %v229
        %v249 = vpack.c.bf16 %v232, %v231
        %v250 = vpack.c.bf16 %v234, %v233
        %v251 = vld [vmem:[%s1] sm:$0xf]
        %v252 = vld [vmem:[%s1 + $0x4] sm:$0xf]
        %v253 = vld [vmem:[%s1 + $0x8] sm:$0xf]
        %v254 = vld [vmem:[%s1 + $0xc] sm:$0xf]
        %v255 = vld [vmem:[%s1 + $0x10] sm:$0xf]
        %v256 = vld [vmem:[%s1 + $0x14] sm:$0xf]
        %v257 = vld [vmem:[%s1 + $0x18] sm:$0xf]
        %v258 = vld [vmem:[%s1 + $0x1c] sm:$0xf]
        %v267 = vunpack.c.l.b16 %v251
        %v268 = vunpack.c.l.b16 %v252
        %v269 = vunpack.c.l.b16 %v253
        %v270 = vunpack.c.l.b16 %v254
        %v271 = vunpack.c.l.b16 %v255
        %v272 = vunpack.c.l.b16 %v256
        %v273 = vunpack.c.l.b16 %v257
        %v274 = vunpack.c.l.b16 %v258
        %v275 = vpack.c.b16 %v268, %v267
        %v276 = vpack.c.b16 %v270, %v269
        %v277 = vpack.c.b16 %v272, %v271
        %v278 = vpack.c.b16 %v274, %v273
        %vm283 = vcmask 523264
        %v285 = vsel %vm283, %v235, 0
        %v288 = vsel %vm283, %v236, 0
        %v291 = vsel %vm283, %v237, 0
        %v294 = vsel %vm283, %v238, 0
        %v297 = vsel %vm283, %v239, 0
        %v300 = vsel %vm283, %v240, 0
        %v303 = vsel %vm283, %v241, 0
        %v306 = vsel %vm283, %v242, 0
        %v309 = vsel %vm283, %v243, 0
        %v312 = vsel %vm283, %v244, 0
        %v315 = vsel %vm283, %v245, 0
        %v318 = vsel %vm283, %v246, 0
        %v321 = vsel %vm283, %v247, 0
        %v324 = vsel %vm283, %v248, 0
        %v327 = vsel %vm283, %v249, 0
        %v330 = vsel %vm283, %v250, 0
        %332 = vmatprep.subr.bf16.mxu0 0
        %333 = vmatpush1.bf16.msra.mxu0 %v275
        %334 = vmatprep.subr.bf16.mxu0 0
        %335 = vmatpush1.bf16.msra.mxu0 %v276
        %336 = vmatprep.subr.bf16.mxu0 0
        %337 = vmatpush1.bf16.msra.mxu0 %v277
        %338 = vmatprep.subr.bf16.mxu0 0
        %339 = vmatpush1.bf16.msra.mxu0 %v278
        %340 = vmatprep.subr.bf16.mxu0 0
        %341 = vmatpush1.bf16.msra.mxu0 0
        %342 = vmatprep.subr.bf16.mxu0 0
        %343 = vmatpush1.bf16.msra.mxu0 0
        %344 = vmatprep.subr.bf16.mxu0 0
        %345 = vmatpush1.bf16.msra.mxu0 0
        %346 = vmatprep.subr.bf16.mxu0 0
        %347 = vmatpush1.bf16.msra.mxu0 0
        %348 = vmatprep.subr.bf16.mxu0 0
        %349 = vmatpush1.bf16.msra.mxu0 0
        %350 = vmatprep.subr.bf16.mxu0 0
        %351 = vmatpush1.bf16.msra.mxu0 0
        %352 = vmatprep.subr.bf16.mxu0 0
        %353 = vmatpush1.bf16.msra.mxu0 0
        %354 = vmatprep.subr.bf16.mxu0 0
        %355 = vmatpush1.bf16.msra.mxu0 0
        %356 = vmatprep.subr.bf16.mxu0 0
        %357 = vmatpush1.bf16.msra.mxu0 0
        %358 = vmatprep.subr.bf16.mxu0 0
        %359 = vmatpush1.bf16.msra.mxu0 0
        %360 = vmatprep.subr.bf16.mxu0 0
        %361 = vmatpush1.bf16.msra.mxu0 0
        %362 = vmatprep.subr.bf16.mxu0 0
        %363 = vmatpush1.bf16.msra.mxu0 0
        %364 = vmatprep.mubr.bf16.mxu0 0
        %365 = vmatmul.mubr.bf16.gmra.mrb[0].mxu0 %v285
        %v366 = vpop.f32.mrb[0].mxu0
        %v367 = vadd.f32 0.0, %v366
        %v368 = vpop.f32.mrb[0].mxu0
        %v369 = vpop.f32.mrb[0].mxu0
        %v370 = vadd.f32 0.0, %v369
        %v371 = vpop.f32.mrb[0].mxu0
        %372 = vmatprep.mubr.bf16.mxu0 0
        %373 = vmatmul.mubr.bf16.gmra.mrb[0].mxu0 %v288
        %v374 = vpop.f32.mrb[0].mxu0
        %v375 = vadd.f32 0.0, %v374
        %v376 = vpop.f32.mrb[0].mxu0
        %v377 = vpop.f32.mrb[0].mxu0
        %v378 = vadd.f32 0.0, %v377
        %v379 = vpop.f32.mrb[0].mxu0
        %380 = vmatprep.mubr.bf16.mxu0 0
        %381 = vmatmul.mubr.bf16.gmra.mrb[0].mxu0 %v291
        %v382 = vpop.f32.mrb[0].mxu0
        %v383 = vadd.f32 0.0, %v382
        %v384 = vpop.f32.mrb[0].mxu0
        %v385 = vpop.f32.mrb[0].mxu0
        %v386 = vadd.f32 0.0, %v385
        %v387 = vpop.f32.mrb[0].mxu0
        %388 = vmatprep.mubr.bf16.mxu0 0
        %389 = vmatmul.mubr.bf16.gmra.mrb[0].mxu0 %v294
        %v390 = vpop.f32.mrb[0].mxu0
        %v391 = vadd.f32 0.0, %v390
        %v392 = vpop.f32.mrb[0].mxu0
        %v393 = vpop.f32.mrb[0].mxu0
        %v394 = vadd.f32 0.0, %v393
        %v395 = vpop.f32.mrb[0].mxu0
        %396 = vmatprep.mubr.bf16.mxu0 0
        %397 = vmatmul.mubr.bf16.gmra.mrb[0].mxu0 %v297
        %v398 = vpop.f32.mrb[0].mxu0
        %v399 = vadd.f32 0.0, %v398
        %v400 = vpop.f32.mrb[0].mxu0
        %v401 = vpop.f32.mrb[0].mxu0
        %v402 = vadd.f32 0.0, %v401
        %v403 = vpop.f32.mrb[0].mxu0
        %404 = vmatprep.mubr.bf16.mxu0 0
        %405 = vmatmul.mubr.bf16.gmra.mrb[0].mxu0 %v300
        %v406 = vpop.f32.mrb[0].mxu0
        %v407 = vadd.f32 0.0, %v406
        %v408 = vpop.f32.mrb[0].mxu0
        %v409 = vpop.f32.mrb[0].mxu0
        %v410 = vadd.f32 0.0, %v409
        %v411 = vpop.f32.mrb[0].mxu0
        %412 = vmatprep.mubr.bf16.mxu0 0
        %413 = vmatmul.mubr.bf16.gmra.mrb[0].mxu0 %v303
        %v414 = vpop.f32.mrb[0].mxu0
        %v415 = vadd.f32 0.0, %v414
        %v416 = vpop.f32.mrb[0].mxu0
        %v417 = vpop.f32.mrb[0].mxu0
        %v418 = vadd.f32 0.0, %v417
        %v419 = vpop.f32.mrb[0].mxu0
        %420 = vmatprep.mubr.bf16.mxu0 0
        %421 = vmatmul.mubr.bf16.gmra.mrb[0].mxu0 %v306
        %v422 = vpop.f32.mrb[0].mxu0
        %v423 = vadd.f32 0.0, %v422
        %v424 = vpop.f32.mrb[0].mxu0
        %v425 = vpop.f32.mrb[0].mxu0
        %v426 = vadd.f32 0.0, %v425
        %v427 = vpop.f32.mrb[0].mxu0
        %428 = vmatprep.mubr.bf16.mxu0 0
        %429 = vmatmul.mubr.bf16.gmra.mrb[0].mxu0 %v309
        %v430 = vpop.f32.mrb[0].mxu0
        %v431 = vadd.f32 0.0, %v430
        %v432 = vpop.f32.mrb[0].mxu0
        %v433 = vpop.f32.mrb[0].mxu0
        %v434 = vadd.f32 0.0, %v433
        %v435 = vpop.f32.mrb[0].mxu0
        %436 = vmatprep.mubr.bf16.mxu0 0
        %437 = vmatmul.mubr.bf16.gmra.mrb[0].mxu0 %v312
        %v438 = vpop.f32.mrb[0].mxu0
        %v439 = vadd.f32 0.0, %v438
        %v440 = vpop.f32.mrb[0].mxu0
        %v441 = vpop.f32.mrb[0].mxu0
        %v442 = vadd.f32 0.0, %v441
        %v443 = vpop.f32.mrb[0].mxu0
        %444 = vmatprep.mubr.bf16.mxu0 0
        %445 = vmatmul.mubr.bf16.gmra.mrb[0].mxu0 %v315
        %v446 = vpop.f32.mrb[0].mxu0
        %v447 = vadd.f32 0.0, %v446
        %v448 = vpop.f32.mrb[0].mxu0
        %v449 = vpop.f32.mrb[0].mxu0
        %v450 = vadd.f32 0.0, %v449
        %v451 = vpop.f32.mrb[0].mxu0
        %452 = vmatprep.mubr.bf16.mxu0 0
        %453 = vmatmul.mubr.bf16.gmra.mrb[0].mxu0 %v318
        %v454 = vpop.f32.mrb[0].mxu0
        %v455 = vadd.f32 0.0, %v454
        %v456 = vpop.f32.mrb[0].mxu0
        %v457 = vpop.f32.mrb[0].mxu0
        %v458 = vadd.f32 0.0, %v457
        %v459 = vpop.f32.mrb[0].mxu0
        %460 = vmatprep.mubr.bf16.mxu0 0
        %461 = vmatmul.mubr.bf16.gmra.mrb[0].mxu0 %v321
        %v462 = vpop.f32.mrb[0].mxu0
        %v463 = vadd.f32 0.0, %v462
        %v464 = vpop.f32.mrb[0].mxu0
        %v465 = vpop.f32.mrb[0].mxu0
        %v466 = vadd.f32 0.0, %v465
        %v467 = vpop.f32.mrb[0].mxu0
        %468 = vmatprep.mubr.bf16.mxu0 0
        %469 = vmatmul.mubr.bf16.gmra.mrb[0].mxu0 %v324
        %v470 = vpop.f32.mrb[0].mxu0
        %v471 = vadd.f32 0.0, %v470
        %v472 = vpop.f32.mrb[0].mxu0
        %v473 = vpop.f32.mrb[0].mxu0
        %v474 = vadd.f32 0.0, %v473
        %v475 = vpop.f32.mrb[0].mxu0
        %476 = vmatprep.mubr.bf16.mxu0 0
        %477 = vmatmul.mubr.bf16.gmra.mrb[0].mxu0 %v327
        %v478 = vpop.f32.mrb[0].mxu0
        %v479 = vadd.f32 0.0, %v478
        %v480 = vpop.f32.mrb[0].mxu0
        %v481 = vpop.f32.mrb[0].mxu0
        %v482 = vadd.f32 0.0, %v481
        %v483 = vpop.f32.mrb[0].mxu0
        %484 = vmatprep.mubr.bf16.mxu0 0
        %485 = vmatmul.mubr.bf16.gmra.mrb[0].mxu0 %v330
        %v486 = vpop.f32.mrb[0].mxu0
        %v487 = vadd.f32 0.0, %v486
        %v488 = vpop.f32.mrb[0].mxu0
        %v489 = vpop.f32.mrb[0].mxu0
        %v490 = vadd.f32 0.0, %v489
        %v491 = vpop.f32.mrb[0].mxu0
        %492 = vdwg.mxu0
        %v493 = vpack.c.bf16 %v370, %v367
        %v494 = vpack.c.bf16 %v378, %v375
        %v495 = vpack.c.bf16 %v386, %v383
        %v496 = vpack.c.bf16 %v394, %v391
        %v497 = vpack.c.bf16 %v402, %v399
        %v498 = vpack.c.bf16 %v410, %v407
        %v499 = vpack.c.bf16 %v418, %v415
        %v500 = vpack.c.bf16 %v426, %v423
        %v501 = vpack.c.bf16 %v434, %v431
        %v502 = vpack.c.bf16 %v442, %v439
        %v503 = vpack.c.bf16 %v450, %v447
        %v504 = vpack.c.bf16 %v458, %v455
        %v505 = vpack.c.bf16 %v466, %v463
        %v506 = vpack.c.bf16 %v474, %v471
        %v507 = vpack.c.bf16 %v482, %v479
        %v508 = vpack.c.bf16 %v490, %v487
        %v525 = vunpack.c.l.b16 %v493
        %v526 = vunpack.c.h.b16 %v493
        %v527 = vunpack.c.l.b16 %v494
        %v528 = vunpack.c.h.b16 %v494
        %v529 = vunpack.c.l.b16 %v495
        %v530 = vunpack.c.h.b16 %v495
        %v531 = vunpack.c.l.b16 %v496
        %v532 = vunpack.c.h.b16 %v496
        %v533 = vunpack.c.l.b16 %v497
        %v534 = vunpack.c.h.b16 %v497
        %v535 = vunpack.c.l.b16 %v498
        %v536 = vunpack.c.h.b16 %v498
        %v537 = vunpack.c.l.b16 %v499
        %v538 = vunpack.c.h.b16 %v499
        %v539 = vunpack.c.l.b16 %v500
        %v540 = vunpack.c.h.b16 %v500
        %v541 = vunpack.c.l.b16 %v501
        %v542 = vunpack.c.h.b16 %v501
        %v543 = vunpack.c.l.b16 %v502
        %v544 = vunpack.c.h.b16 %v502
        %v545 = vunpack.c.l.b16 %v503
        %v546 = vunpack.c.h.b16 %v503
        %v547 = vunpack.c.l.b16 %v504
        %v548 = vunpack.c.h.b16 %v504
        %v549 = vunpack.c.l.b16 %v505
        %v550 = vunpack.c.h.b16 %v505
        %v551 = vunpack.c.l.b16 %v506
        %v552 = vunpack.c.h.b16 %v506
        %v553 = vunpack.c.l.b16 %v507
        %v554 = vunpack.c.h.b16 %v507
        %v555 = vunpack.c.l.b16 %v508
        %v556 = vunpack.c.h.b16 %v508
        %v557 = vpack.c.b16 %v525, %v525
        %v558 = vpack.c.b16 %v526, %v526
        %v559 = vpack.c.b16 %v527, %v527
        %v560 = vpack.c.b16 %v528, %v528
        %v561 = vpack.c.b16 %v529, %v529
        %v562 = vpack.c.b16 %v530, %v530
        %v563 = vpack.c.b16 %v531, %v531
        %v564 = vpack.c.b16 %v532, %v532
        %v565 = vpack.c.b16 %v533, %v533
        %v566 = vpack.c.b16 %v534, %v534
        %v567 = vpack.c.b16 %v535, %v535
        %v568 = vpack.c.b16 %v536, %v536
        %v569 = vpack.c.b16 %v537, %v537
        %v570 = vpack.c.b16 %v538, %v538
        %v571 = vpack.c.b16 %v539, %v539
        %v572 = vpack.c.b16 %v540, %v540
        %v573 = vpack.c.b16 %v541, %v541
        %v574 = vpack.c.b16 %v542, %v542
        %v575 = vpack.c.b16 %v543, %v543
        %v576 = vpack.c.b16 %v544, %v544
        %v577 = vpack.c.b16 %v545, %v545
        %v578 = vpack.c.b16 %v546, %v546
        %v579 = vpack.c.b16 %v547, %v547
        %v580 = vpack.c.b16 %v548, %v548
        %v581 = vpack.c.b16 %v549, %v549
        %v582 = vpack.c.b16 %v550, %v550
        %v583 = vpack.c.b16 %v551, %v551
        %v584 = vpack.c.b16 %v552, %v552
        %v585 = vpack.c.b16 %v553, %v553
        %v586 = vpack.c.b16 %v554, %v554
        %v587 = vpack.c.b16 %v555, %v555
        %v588 = vpack.c.b16 %v556, %v556
        %vm621 = vcmask 125952
        %622 = vst.msk [vmem:[%s197] sm:$0xf] %vm621, %v557
        %623 = vst.msk [vmem:[%s197 + $0x4] sm:$0xf] %vm621, %v558
        %624 = vst.msk [vmem:[%s197 + $0x8] sm:$0xf] %vm621, %v559
        %625 = vst.msk [vmem:[%s197 + $0xc] sm:$0xf] %vm621, %v560
        %626 = vst.msk [vmem:[%s197 + $0x10] sm:$0xf] %vm621, %v561
        %627 = vst.msk [vmem:[%s197 + $0x14] sm:$0xf] %vm621, %v562
        %628 = vst.msk [vmem:[%s197 + $0x18] sm:$0xf] %vm621, %v563
        %629 = vst.msk [vmem:[%s197 + $0x1c] sm:$0xf] %vm621, %v564
        %630 = vst.msk [vmem:[%s197 + $0x20] sm:$0xf] %vm621, %v565
        %631 = vst.msk [vmem:[%s197 + $0x24] sm:$0xf] %vm621, %v566
        %632 = vst.msk [vmem:[%s197 + $0x28] sm:$0xf] %vm621, %v567
        %633 = vst.msk [vmem:[%s197 + $0x2c] sm:$0xf] %vm621, %v568
        %634 = vst.msk [vmem:[%s197 + $0x30] sm:$0xf] %vm621, %v569
        %635 = vst.msk [vmem:[%s197 + $0x34] sm:$0xf] %vm621, %v570
        %636 = vst.msk [vmem:[%s197 + $0x38] sm:$0xf] %vm621, %v571
        %637 = vst.msk [vmem:[%s197 + $0x3c] sm:$0xf] %vm621, %v572
        %638 = vst.msk [vmem:[%s197 + $0x40] sm:$0xf] %vm621, %v573
        %639 = vst.msk [vmem:[%s197 + $0x44] sm:$0xf] %vm621, %v574
        %640 = vst.msk [vmem:[%s197 + $0x48] sm:$0xf] %vm621, %v575
        %641 = vst.msk [vmem:[%s197 + $0x4c] sm:$0xf] %vm621, %v576
        %642 = vst.msk [vmem:[%s197 + $0x50] sm:$0xf] %vm621, %v577
        %643 = vst.msk [vmem:[%s197 + $0x54] sm:$0xf] %vm621, %v578
        %644 = vst.msk [vmem:[%s197 + $0x58] sm:$0xf] %vm621, %v579
        %645 = vst.msk [vmem:[%s197 + $0x5c] sm:$0xf] %vm621, %v580
        %646 = vst.msk [vmem:[%s197 + $0x60] sm:$0xf] %vm621, %v581
        %647 = vst.msk [vmem:[%s197 + $0x64] sm:$0xf] %vm621, %v582
        %648 = vst.msk [vmem:[%s197 + $0x68] sm:$0xf] %vm621, %v583
        %649 = vst.msk [vmem:[%s197 + $0x6c] sm:$0xf] %vm621, %v584
        %650 = vst.msk [vmem:[%s197 + $0x70] sm:$0xf] %vm621, %v585
        %651 = vst.msk [vmem:[%s197 + $0x74] sm:$0xf] %vm621, %v586
        %652 = vst.msk [vmem:[%s197 + $0x78] sm:$0xf] %vm621, %v587
        %653 = vst.msk [vmem:[%s197 + $0x7c] sm:$0xf] %vm621, %v588
        %vm654 = vcmask 130048
        %v655 = vsel %vm654, %v367, 0.0
        %v656 = vsel %vm654, %v370, 0.0
        %v657 = vadd.f32 %v655, %v656
        %v658 = vsel %vm654, %v375, 0.0
        %v659 = vadd.f32 %v657, %v658
        %v660 = vsel %vm654, %v378, 0.0
        %v661 = vadd.f32 %v659, %v660
        %v662 = vsel %vm654, %v383, 0.0
        %v663 = vadd.f32 %v661, %v662
        %v664 = vsel %vm654, %v386, 0.0
        %v665 = vadd.f32 %v663, %v664
        %v666 = vsel %vm654, %v391, 0.0
        %v667 = vadd.f32 %v665, %v666
        %v668 = vsel %vm654, %v394, 0.0
        %v669 = vadd.f32 %v667, %v668
        %v670 = vsel %vm654, %v399, 0.0
        %v671 = vadd.f32 %v669, %v670
        %v672 = vsel %vm654, %v402, 0.0
        %v673 = vadd.f32 %v671, %v672
        %v674 = vsel %vm654, %v407, 0.0
        %v675 = vadd.f32 %v673, %v674
        %v676 = vsel %vm654, %v410, 0.0
        %v677 = vadd.f32 %v675, %v676
        %v678 = vsel %vm654, %v415, 0.0
        %v679 = vadd.f32 %v677, %v678
        %v680 = vsel %vm654, %v418, 0.0
        %v681 = vadd.f32 %v679, %v680
        %v682 = vsel %vm654, %v423, 0.0
        %v683 = vadd.f32 %v681, %v682
        %v684 = vsel %vm654, %v426, 0.0
        %v685 = vadd.f32 %v683, %v684
        %v686 = vsel %vm654, %v431, 0.0
        %v687 = vadd.f32 %v685, %v686
        %v688 = vsel %vm654, %v434, 0.0
        %v689 = vadd.f32 %v687, %v688
        %v690 = vsel %vm654, %v439, 0.0
        %v691 = vadd.f32 %v689, %v690
        %v692 = vsel %vm654, %v442, 0.0
        %v693 = vadd.f32 %v691, %v692
        %v694 = vsel %vm654, %v447, 0.0
        %v695 = vadd.f32 %v693, %v694
        %v696 = vsel %vm654, %v450, 0.0
        %v697 = vadd.f32 %v695, %v696
        %v698 = vsel %vm654, %v455, 0.0
        %v699 = vadd.f32 %v697, %v698
        %v700 = vsel %vm654, %v458, 0.0
        %v701 = vadd.f32 %v699, %v700
        %v702 = vsel %vm654, %v463, 0.0
        %v703 = vadd.f32 %v701, %v702
        %v704 = vsel %vm654, %v466, 0.0
        %v705 = vadd.f32 %v703, %v704
        %v706 = vsel %vm654, %v471, 0.0
        %v707 = vadd.f32 %v705, %v706
        %v708 = vsel %vm654, %v474, 0.0
        %v709 = vadd.f32 %v707, %v708
        %v710 = vsel %vm654, %v479, 0.0
        %v711 = vadd.f32 %v709, %v710
        %v712 = vsel %vm654, %v482, 0.0
        %v713 = vadd.f32 %v711, %v712
        %v714 = vsel %vm654, %v487, 0.0
        %v715 = vadd.f32 %v713, %v714
        %v716 = vsel %vm654, %v490, 0.0
        %v717 = vadd.f32 %v715, %v716
        %v718 = vrot.slane %v717, 4
        %v719 = vadd.f32 %v717, %v718
        %v720 = vrot.slane %v719, 2
        %v721 = vadd.f32 %v719, %v720
        %v722 = vrot.slane %v721, 1
        %v723 = vadd.f32 %v721, %v722
        %v724 = vmul.f32 %v367, %v367
        %v725 = vmul.f32 %v370, %v370
        %v726 = vmul.f32 %v375, %v375
        %v727 = vmul.f32 %v378, %v378
        %v728 = vmul.f32 %v383, %v383
        %v729 = vmul.f32 %v386, %v386
        %v730 = vmul.f32 %v391, %v391
        %v731 = vmul.f32 %v394, %v394
        %v732 = vmul.f32 %v399, %v399
        %v733 = vmul.f32 %v402, %v402
        %v734 = vmul.f32 %v407, %v407
        %v735 = vmul.f32 %v410, %v410
        %v736 = vmul.f32 %v415, %v415
        %v737 = vmul.f32 %v418, %v418
        %v738 = vmul.f32 %v423, %v423
        %v739 = vmul.f32 %v426, %v426
        %v740 = vmul.f32 %v431, %v431
        %v741 = vmul.f32 %v434, %v434
        %v742 = vmul.f32 %v439, %v439
        %v743 = vmul.f32 %v442, %v442
        %v744 = vmul.f32 %v447, %v447
        %v745 = vmul.f32 %v450, %v450
        %v746 = vmul.f32 %v455, %v455
        %v747 = vmul.f32 %v458, %v458
        %v748 = vmul.f32 %v463, %v463
        %v749 = vmul.f32 %v466, %v466
        %v750 = vmul.f32 %v471, %v471
        %v751 = vmul.f32 %v474, %v474
        %v752 = vmul.f32 %v479, %v479
        %v753 = vmul.f32 %v482, %v482
        %v754 = vmul.f32 %v487, %v487
        %v755 = vmul.f32 %v490, %v490
        %v756 = vsel %vm654, %v724, 0.0
        %v757 = vsel %vm654, %v725, 0.0
        %v758 = vadd.f32 %v756, %v757
        %v759 = vsel %vm654, %v726, 0.0
        %v760 = vadd.f32 %v758, %v759
        %v761 = vsel %vm654, %v727, 0.0
        %v762 = vadd.f32 %v760, %v761
        %v763 = vsel %vm654, %v728, 0.0
        %v764 = vadd.f32 %v762, %v763
        %v765 = vsel %vm654, %v729, 0.0
        %v766 = vadd.f32 %v764, %v765
        %v767 = vsel %vm654, %v730, 0.0
        %v768 = vadd.f32 %v766, %v767
        %v769 = vsel %vm654, %v731, 0.0
        %v770 = vadd.f32 %v768, %v769
        %v771 = vsel %vm654, %v732, 0.0
        %v772 = vadd.f32 %v770, %v771
        %v773 = vsel %vm654, %v733, 0.0
        %v774 = vadd.f32 %v772, %v773
        %v775 = vsel %vm654, %v734, 0.0
        %v776 = vadd.f32 %v774, %v775
        %v777 = vsel %vm654, %v735, 0.0
        %v778 = vadd.f32 %v776, %v777
        %v779 = vsel %vm654, %v736, 0.0
        %v780 = vadd.f32 %v778, %v779
        %v781 = vsel %vm654, %v737, 0.0
        %v782 = vadd.f32 %v780, %v781
        %v783 = vsel %vm654, %v738, 0.0
        %v784 = vadd.f32 %v782, %v783
        %v785 = vsel %vm654, %v739, 0.0
        %v786 = vadd.f32 %v784, %v785
        %v787 = vsel %vm654, %v740, 0.0
        %v788 = vadd.f32 %v786, %v787
        %v789 = vsel %vm654, %v741, 0.0
        %v790 = vadd.f32 %v788, %v789
        %v791 = vsel %vm654, %v742, 0.0
        %v792 = vadd.f32 %v790, %v791
        %v793 = vsel %vm654, %v743, 0.0
        %v794 = vadd.f32 %v792, %v793
        %v795 = vsel %vm654, %v744, 0.0
        %v796 = vadd.f32 %v794, %v795
        %v797 = vsel %vm654, %v745, 0.0
        %v798 = vadd.f32 %v796, %v797
        %v799 = vsel %vm654, %v746, 0.0
        %v800 = vadd.f32 %v798, %v799
        %v801 = vsel %vm654, %v747, 0.0
        %v802 = vadd.f32 %v800, %v801
        %v803 = vsel %vm654, %v748, 0.0
        %v804 = vadd.f32 %v802, %v803
        %v805 = vsel %vm654, %v749, 0.0
        %v806 = vadd.f32 %v804, %v805
        %v807 = vsel %vm654, %v750, 0.0
        %v808 = vadd.f32 %v806, %v807
        %v809 = vsel %vm654, %v751, 0.0
        %v810 = vadd.f32 %v808, %v809
        %v811 = vsel %vm654, %v752, 0.0
        %v812 = vadd.f32 %v810, %v811
        %v813 = vsel %vm654, %v753, 0.0
        %v814 = vadd.f32 %v812, %v813
        %v815 = vsel %vm654, %v754, 0.0
        %v816 = vadd.f32 %v814, %v815
        %v817 = vsel %vm654, %v755, 0.0
        %v818 = vadd.f32 %v816, %v817
        %v819 = vrot.slane %v818, 4
        %v820 = vadd.f32 %v818, %v819
        %v821 = vrot.slane %v820, 2
        %v822 = vadd.f32 %v820, %v821
        %v823 = vrot.slane %v822, 1
        %v824 = vadd.f32 %v822, %v823
        %vm825 = vcmask 1040384
        %v826 = vsel %vm825, %v723, %v824
        %vm827 = vcmask 123904
        %828 = vst.msk [vmem:[%s201] sm:$0x3] %vm827, %v826
        %p829 = scmp.lt.s32.totalorder %s18, 1
        %s830 = scalar_select %p829, %s18, 1
        %s831 = smul.addr %s830, 32
        %s832 = smul.addr %s831, 4
        %s833 = scalar_lea.vmem %s2, %s832
        %p834 = scmp.lt.s32.totalorder %s18, 1
        %s835 = scalar_select %p834, %s18, 1
        %s836 = smul.addr %s835, 2
        %s837 = scalar_lea.vmem %s3, %s836
        // Predicated region
        $region33: #{bottleneck_ibn_nhwc.4} parent=27 // pred_check
          %p838 = pneg %p83
        $region34: #{bottleneck_ibn_nhwc.4} parent=27 // pred_check_branch
          %840 = sbr.rel (%p838) target = $region36
        $region35: #{bottleneck_ibn_nhwc.4} parent=27 // pred_region
          _
        $region36: #{bottleneck_ibn_nhwc.4} parent=27 // pred_fallthru
          _
        // Predicated region
        $region37: #{bottleneck_ibn_nhwc.4} parent=27 // pred_check
          %p841 = pneg %p109
        $region38: #{bottleneck_ibn_nhwc.4} parent=27 // pred_check_branch
          %843 = sbr.rel (%p841) target = $region40
        $region39: #{bottleneck_ibn_nhwc.4} parent=27 // pred_region
          _
        $region40: #{bottleneck_ibn_nhwc.4} parent=27 // pred_fallthru
          _
      $region28: #{bottleneck_ibn_nhwc.4} parent=5 // pred_fallthru
        _
      %p844 = scmp.le.s32.totalorder 2, %s13
      // Predicated region
      $region41: #{bottleneck_ibn_nhwc.4} parent=5 // pred_check
        %p845 = pneg %p844
      $region42: #{bottleneck_ibn_nhwc.4} parent=5 // pred_check_branch
        %847 = sbr.rel (%p845) target = $region44
      $region43: #{bottleneck_ibn_nhwc.4} parent=5 // pred_region
        %s848 = ssub.s32 %s13, 2
        // Predicated region
        $region45: #{bottleneck_ibn_nhwc.4} parent=43 // pred_check
          %p849 = pneg %p89
        $region46: #{bottleneck_ibn_nhwc.4} parent=43 // pred_check_branch
          %851 = sbr.rel (%p849) target = $region48
        $region47: #{bottleneck_ibn_nhwc.4} parent=43 // pred_region
          %p852 = scmp.lt.s32.totalorder %s19, 1
          %s853 = scalar_select %p852, %s19, 1
          %s854 = smul.addr %s853, 32
          %s855 = smul.addr %s854, 4
          %s856 = scalar_lea.vmem %s2, %s855
        $region48: #{bottleneck_ibn_nhwc.4} parent=43 // pred_fallthru
          _
        // Predicated region
        $region49: #{bottleneck_ibn_nhwc.4} parent=43 // pred_check
          %p857 = pneg %p115
        $region50: #{bottleneck_ibn_nhwc.4} parent=43 // pred_check_branch
          %859 = sbr.rel (%p857) target = $region52
        $region51: #{bottleneck_ibn_nhwc.4} parent=43 // pred_region
          %p860 = scmp.lt.s32.totalorder %s19, 1
          %s861 = scalar_select %p860, %s19, 1
          %s862 = smul.addr %s861, 2
          %s863 = scalar_lea.vmem %s3, %s862
        $region52: #{bottleneck_ibn_nhwc.4} parent=43 // pred_fallthru
          _
      $region44: #{bottleneck_ibn_nhwc.4} parent=5 // pred_fallthru
        _
    $region6: #{bottleneck_ibn_nhwc.4} parent=1 // loop_footer
      %s17 = sadd.s32 1, %s13
    $region7: #{bottleneck_ibn_nhwc.4} parent=1 // loop_footer_branch
      %12 = sbr.rel target = $region3
    $region8: #{bottleneck_ibn_nhwc.4} parent=1 // loop_exit
      _
    %864 = vsyncpa [#allocation3], 1
    %s865 = scalar_lea.sflag [#allocation3], 1
    %866 = vsyncpa %s865, 1

// kernel: bottleneck_ibn_nhwc.6
$region0: #{bottleneck_ibn_nhwc.6}
  #allocation0 [shape = 'u32[]', space=smem, size = 0x4, offset = 0x4, fixed_abs, tag = 'smem constant byte address 0x4 - core index']
  #allocation1 [shape = 'u32[144,128]{1,0:T(1,128)}', space=vmem, size = 0x12000, scoped, tag = 'internal scratch']
  %s0 = inlined_call_operand.vmem [shape: bf16[2,16,16,16], index: 0, kind: input, shape index: {}]
  %s1 = inlined_call_operand.vmem [shape: f32[1,16], index: 1, kind: input, shape index: {}]
  %s2 = inlined_call_operand.vmem [shape: f32[1,16], index: 2, kind: input, shape index: {}]
  %s3 = inlined_call_operand.vmem [shape: bf16[16,64], index: 3, kind: input, shape index: {}]
  %s4 = inlined_call_operand.vmem [shape: bf16[2,16,16,64], index: 4, kind: output, shape index: {0}]
  %s5 = inlined_call_operand.vmem [shape: f32[2,2,64], index: 5, kind: output, shape index: {1}]
  %6 = xla_tuple %s4, %s5
  %s7 = sld [smem:[#allocation0]]
  $region57: #{bottleneck_ibn_nhwc.6} parent=0
    _
  %s9 = ssub.s32 1, %s7
  %s10 = scalar_select 0, %s9, %s7
  loop: start=0, step=1, limit=4
  $region2: #{bottleneck_ibn_nhwc.6} parent=0 // loop_pre_header
    _
  $region3: #{bottleneck_ibn_nhwc.6} parent=0 // loop_header
    %s12 = sphi 0, %s16
    %p13 = scmp.ge.s32.totalorder %s12, 4
    %s22 = sphi 0, %s24
    %s25 = sphi 0, %s22
    %s26 = sphi 0, %s25
    %s42 = sphi 0, %s26
    %s46 = sphi 0, %s46
    %s48 = sphi 0, %s46
    %s49 = sphi 0, %s48
    %s63 = sphi 0, %s49
    %s67 = sphi 0, %s67
    %s69 = sphi 0, %s67
    %s70 = sphi 0, %s69
    %s84 = sphi 0, %s70
    %s88 = sphi 0, %s88
    %s90 = sphi 0, %s88
    %s91 = sphi 0, %s90
    %s105 = sphi 0, %s91
    %s111 = sphi 0, %s113
    %s114 = sphi 0, %s111
    %s115 = sphi 0, %s114
    %s131 = sphi 0, %s115
    %s137 = sphi 0, %s139
    %s140 = sphi 0, %s137
    %s141 = sphi 0, %s140
    %s157 = sphi 0, %s141
  $region4: #{bottleneck_ibn_nhwc.6} parent=0 // loop_header_branch
    %15 = sbr.rel (%p13) target = $region8
  $region5: #{bottleneck_ibn_nhwc.6} parent=0 // loop_body
    %s17 = ssub.s32 %s12, 1
    %s18 = ssub.s32 %s12, 2
    %s19 = sadd.s32 %s12, 1
    %s20 = ssub.s32 %s12, %s19
    %p21 = scmp.eq.s32.totalorder %s20, 0
    %s23 = sadd.s32 %s22, 1
    %s24 = scalar_select %p21, %s22, %s23
    %p27 = pneg %p21
    %p28 = scmp.eq.s32.totalorder %s12, 1
    %p29 = por %p27, %p28
    %p30 = scmp.ne.s32.totalorder %s22, %s25
    %p31 = scmp.eq.s32.totalorder %s12, 0
    %p32 = por %p30, %p31
    %p33 = scmp.ne.s32.totalorder %s22, %s25
    %p34 = scmp.eq.s32.totalorder %s17, 1
    %p35 = por %p33, %p34
    %p36 = scmp.ne.s32.totalorder %s25, %s26
    %p37 = scmp.eq.s32.totalorder %s17, 0
    %p38 = por %p36, %p37
    %p39 = scmp.ne.s32.totalorder %s25, %s26
    %p40 = scmp.eq.s32.totalorder %s18, 1
    %p41 = por %p39, %p40
    %p43 = scmp.ne.s32.totalorder %s26, %s42
    %p44 = scmp.eq.s32.totalorder %s18, 0
    %p45 = por %p43, %p44
    %s47 = sadd.s32 %s46, 1
    %p50 = scmp.eq.s32.totalorder %s12, 1
    %p51 = scmp.ne.s32.totalorder %s46, %s48
    %p52 = scmp.eq.s32.totalorder %s12, 0
    %p53 = por %p51, %p52
    %p54 = scmp.ne.s32.totalorder %s46, %s48
    %p55 = scmp.eq.s32.totalorder %s17, 1
    %p56 = por %p54, %p55
    %p57 = scmp.ne.s32.totalorder %s48, %s49
    %p58 = scmp.eq.s32.totalorder %s17, 0
    %p59 = por %p57, %p58
    %p60 = scmp.ne.s32.totalorder %s48, %s49
    %p61 = scmp.eq.s32.totalorder %s18, 1
    %p62 = por %p60, %p61
    %p64 = scmp.ne.s32.totalorder %s49, %s63
    %p65 = scmp.eq.s32.totalorder %s18, 0
    %p66 = por %p64, %p65
    %s68 = sadd.s32 %s67, 1
    %p71 = scmp.eq.s32.totalorder %s12, 1
    %p72 = scmp.ne.s32.totalorder %s67, %s69
    %p73 = scmp.eq.s32.totalorder %s12, 0
    %p74 = por %p72, %p73
    %p75 = scmp.ne.s32.totalorder %s67, %s69
    %p76 = scmp.eq.s32.totalorder %s17, 1
    %p77 = por %p75, %p76
    %p78 = scmp.ne.s32.totalorder %s69, %s70
    %p79 = scmp.eq.s32.totalorder %s17, 0
    %p80 = por %p78, %p79
    %p81 = scmp.ne.s32.totalorder %s69, %s70
    %p82 = scmp.eq.s32.totalorder %s18, 1
    %p83 = por %p81, %p82
    %p85 = scmp.ne.s32.totalorder %s70, %s84
    %p86 = scmp.eq.s32.totalorder %s18, 0
    %p87 = por %p85, %p86
    %s89 = sadd.s32 %s88, 1
    %p92 = scmp.eq.s32.totalorder %s12, 1
    %p93 = scmp.ne.s32.totalorder %s88, %s90
    %p94 = scmp.eq.s32.totalorder %s12, 0
    %p95 = por %p93, %p94
    %p96 = scmp.ne.s32.totalorder %s88, %s90
    %p97 = scmp.eq.s32.totalorder %s17, 1
    %p98 = por %p96, %p97
    %p99 = scmp.ne.s32.totalorder %s90, %s91
    %p100 = scmp.eq.s32.totalorder %s17, 0
    %p101 = por %p99, %p100
    %p102 = scmp.ne.s32.totalorder %s90, %s91
    %p103 = scmp.eq.s32.totalorder %s18, 1
    %p104 = por %p102, %p103
    %p106 = scmp.ne.s32.totalorder %s91, %s105
    %p107 = scmp.eq.s32.totalorder %s18, 0
    %p108 = por %p106, %p107
    %s109 = ssub.s32 %s12, %s19
    %p110 = scmp.eq.s32.totalorder %s109, 0
    %s112 = sadd.s32 %s111, 1
    %s113 = scalar_select %p110, %s111, %s112
    %p116 = pneg %p110
    %p117 = scmp.eq.s32.totalorder %s12, 1
    %p118 = por %p116, %p117
    %p119 = scmp.ne.s32.totalorder %s111, %s114
    %p120 = scmp.eq.s32.totalorder %s12, 0
    %p121 = por %p119, %p120
    %p122 = scmp.ne.s32.totalorder %s111, %s114
    %p123 = scmp.eq.s32.totalorder %s17, 1
    %p124 = por %p122, %p123
    %p125 = scmp.ne.s32.totalorder %s114, %s115
    %p126 = scmp.eq.s32.totalorder %s17, 0
    %p127 = por %p125, %p126
    %p128 = scmp.ne.s32.totalorder %s114, %s115
    %p129 = scmp.eq.s32.totalorder %s18, 1
    %p130 = por %p128, %p129
    %p132 = scmp.ne.s32.totalorder %s115, %s131
    %p133 = scmp.eq.s32.totalorder %s18, 0
    %p134 = por %p132, %p133
    %s135 = ssub.s32 %s12, %s19
    %p136 = scmp.eq.s32.totalorder %s135, 0
    %s138 = sadd.s32 %s137, 1
    %s139 = scalar_select %p136, %s137, %s138
    %p142 = pneg %p136
    %p143 = scmp.eq.s32.totalorder %s12, 1
    %p144 = por %p142, %p143
    %p145 = scmp.ne.s32.totalorder %s137, %s140
    %p146 = scmp.eq.s32.totalorder %s12, 0
    %p147 = por %p145, %p146
    %p148 = scmp.ne.s32.totalorder %s137, %s140
    %p149 = scmp.eq.s32.totalorder %s17, 1
    %p150 = por %p148, %p149
    %p151 = scmp.ne.s32.totalorder %s140, %s141
    %p152 = scmp.eq.s32.totalorder %s17, 0
    %p153 = por %p151, %p152
    %p154 = scmp.ne.s32.totalorder %s140, %s141
    %p155 = scmp.eq.s32.totalorder %s18, 1
    %p156 = por %p154, %p155
    %p158 = scmp.ne.s32.totalorder %s141, %s157
    %p159 = scmp.eq.s32.totalorder %s18, 0
    %p160 = por %p158, %p159
    %p161 = scmp.le.s32.totalorder 1, %s12
    %p162 = scmp.lt.s32.totalorder %s12, 3
    %p163 = pnand %p161, %p162
    %p164 = pneg %p163
    // Predicated region
    $region9: #{bottleneck_ibn_nhwc.6} parent=5 // pred_check
      _
    $region10: #{bottleneck_ibn_nhwc.6} parent=5 // pred_check_branch
      %166 = sbr.rel (%p163) target = $region12
    $region11: #{bottleneck_ibn_nhwc.6} parent=5 // pred_region
      %s167 = ssub.s32 %s12, 1
      // Predicated region
      $region13: #{bottleneck_ibn_nhwc.6} parent=11 // pred_check
        %p168 = pneg %p59
      $region14: #{bottleneck_ibn_nhwc.6} parent=11 // pred_check_branch
        %170 = sbr.rel (%p168) target = $region16
      $region15: #{bottleneck_ibn_nhwc.6} parent=11 // pred_region
        _
      $region16: #{bottleneck_ibn_nhwc.6} parent=11 // pred_fallthru
        _
      // Predicated region
      $region17: #{bottleneck_ibn_nhwc.6} parent=11 // pred_check
        %p171 = pneg %p80
      $region18: #{bottleneck_ibn_nhwc.6} parent=11 // pred_check_branch
        %173 = sbr.rel (%p171) target = $region20
      $region19: #{bottleneck_ibn_nhwc.6} parent=11 // pred_region
        _
      $region20: #{bottleneck_ibn_nhwc.6} parent=11 // pred_fallthru
        _
      // Predicated region
      $region21: #{bottleneck_ibn_nhwc.6} parent=11 // pred_check
        %p174 = pneg %p101
      $region22: #{bottleneck_ibn_nhwc.6} parent=11 // pred_check_branch
        %176 = sbr.rel (%p174) target = $region24
      $region23: #{bottleneck_ibn_nhwc.6} parent=11 // pred_region
        _
      $region24: #{bottleneck_ibn_nhwc.6} parent=11 // pred_fallthru
        _
    $region12: #{bottleneck_ibn_nhwc.6} parent=5 // pred_fallthru
      _
    %p177 = scmp.lt.s32.totalorder %s12, 2
    // Predicated region
    $region25: #{bottleneck_ibn_nhwc.6} parent=5 // pred_check
      %p178 = pneg %p177
    $region26: #{bottleneck_ibn_nhwc.6} parent=5 // pred_check_branch
      %180 = sbr.rel (%p178) target = $region28
    $region27: #{bottleneck_ibn_nhwc.6} parent=5 // pred_region
      // Predicated region
      $region29: #{bottleneck_ibn_nhwc.6} parent=27 // pred_check
        %p181 = pneg %p32
      $region30: #{bottleneck_ibn_nhwc.6} parent=27 // pred_check_branch
        %183 = sbr.rel (%p181) target = $region32
      $region31: #{bottleneck_ibn_nhwc.6} parent=27 // pred_region
        %p184 = scmp.lt.s32.totalorder %s12, 1
        %s185 = scalar_select %p184, %s12, 1
        %s186 = smul.addr %s185, 32
        %s187 = smul.addr %s186, 4
        %s188 = scalar_lea.vmem %s0, %s187
      $region32: #{bottleneck_ibn_nhwc.6} parent=27 // pred_fallthru
        _
    $region28: #{bottleneck_ibn_nhwc.6} parent=5 // pred_fallthru
      _
    %p189 = scmp.le.s32.totalorder 1, %s12
    %p190 = scmp.lt.s32.totalorder %s12, 3
    %p191 = pnand %p189, %p190
    %p192 = pneg %p191
    // Predicated region
    $region33: #{bottleneck_ibn_nhwc.6} parent=5 // pred_check
      _
    $region34: #{bottleneck_ibn_nhwc.6} parent=5 // pred_check_branch
      %194 = sbr.rel (%p191) target = $region36
    $region35: #{bottleneck_ibn_nhwc.6} parent=5 // pred_region
      %s195 = ssub.s32 %s12, 1
      %p196 = scmp.lt.s32.totalorder %s17, 1
      %s197 = scalar_select %p196, %s17, 1
      %s198 = smul.addr %s197, 32
      %s199 = smul.addr %s198, 4
      %s200 = scalar_lea.vmem %s0, %s199
      %p201 = pneg %p38
      %p202 = pneg %p35
      %p203 = pneg %p59
      %p204 = pneg %p56
      %p205 = pneg %p80
      %p206 = pneg %p77
      %p207 = pneg %p101
      %p208 = pneg %p98
      %p209 = pneg %p127
      %p210 = pneg %p124
      %p211 = scmp.lt.s32.totalorder %s17, 1
      %s212 = scalar_select %p211, %s17, 1
      %s213 = smul.addr %s212, 32
      %s214 = smul.addr %s213, 4
      %s215 = scalar_lea.vmem %s4, %s214
      %p216 = pneg %p153
      %p217 = pneg %p150
      %p218 = scmp.lt.s32.totalorder %s17, 1
      %s219 = scalar_select %p218, %s17, 1
      %s220 = smul.addr %s219, 2
      %s221 = scalar_lea.vmem %s5, %s220
      %p222 = scmp.lt.s32.totalorder %s17, 1
      %s223 = scalar_select %p222, %s17, 1
      %s224 = smul.addr %s223, 32
      %s225 = smul.addr %s224, 4
      %s226 = scalar_lea.vmem %s0, %s225
      %p227 = scmp.lt.s32.totalorder %s17, 1
      %s228 = scalar_select %p227, %s17, 1
      %s229 = smul.addr %s228, 32
      %s230 = smul.addr %s229, 4
      %s231 = scalar_lea.vmem %s4, %s230
      %p232 = scmp.lt.s32.totalorder %s17, 1
      %s233 = scalar_select %p232, %s17, 1
      %s234 = smul.addr %s233, 2
      %s235 = scalar_lea.vmem %s5, %s234
      %v237 = vld [vmem:[%s226] sm:$0xf]
      %v238 = vld [vmem:[%s226 + $0x4] sm:$0xf]
      %v239 = vld [vmem:[%s226 + $0x8] sm:$0xf]
      %v240 = vld [vmem:[%s226 + $0xc] sm:$0xf]
      %v241 = vld [vmem:[%s226 + $0x10] sm:$0xf]
      %v242 = vld [vmem:[%s226 + $0x14] sm:$0xf]
      %v243 = vld [vmem:[%s226 + $0x18] sm:$0xf]
      %v244 = vld [vmem:[%s226 + $0x1c] sm:$0xf]
      %v245 = vld [vmem:[%s226 + $0x20] sm:$0xf]
      %v246 = vld [vmem:[%s226 + $0x24] sm:$0xf]
      %v247 = vld [vmem:[%s226 + $0x28] sm:$0xf]
      %v248 = vld [vmem:[%s226 + $0x2c] sm:$0xf]
      %v249 = vld [vmem:[%s226 + $0x30] sm:$0xf]
      %v250 = vld [vmem:[%s226 + $0x34] sm:$0xf]
      %v251 = vld [vmem:[%s226 + $0x38] sm:$0xf]
      %v252 = vld [vmem:[%s226 + $0x3c] sm:$0xf]
      %v253 = vld [vmem:[%s226 + $0x40] sm:$0xf]
      %v254 = vld [vmem:[%s226 + $0x44] sm:$0xf]
      %v255 = vld [vmem:[%s226 + $0x48] sm:$0xf]
      %v256 = vld [vmem:[%s226 + $0x4c] sm:$0xf]
      %v257 = vld [vmem:[%s226 + $0x50] sm:$0xf]
      %v258 = vld [vmem:[%s226 + $0x54] sm:$0xf]
      %v259 = vld [vmem:[%s226 + $0x58] sm:$0xf]
      %v260 = vld [vmem:[%s226 + $0x5c] sm:$0xf]
      %v261 = vld [vmem:[%s226 + $0x60] sm:$0xf]
      %v262 = vld [vmem:[%s226 + $0x64] sm:$0xf]
      %v263 = vld [vmem:[%s226 + $0x68] sm:$0xf]
      %v264 = vld [vmem:[%s226 + $0x6c] sm:$0xf]
      %v265 = vld [vmem:[%s226 + $0x70] sm:$0xf]
      %v266 = vld [vmem:[%s226 + $0x74] sm:$0xf]
      %v267 = vld [vmem:[%s226 + $0x78] sm:$0xf]
      %v268 = vld [vmem:[%s226 + $0x7c] sm:$0xf]
      %v269 = vunpack.c.l.bf16 %v237
      %v270 = vunpack.c.l.bf16 %v238
      %v271 = vunpack.c.l.bf16 %v239
      %v272 = vunpack.c.l.bf16 %v240
      %v273 = vunpack.c.l.bf16 %v241
      %v274 = vunpack.c.l.bf16 %v242
      %v275 = vunpack.c.l.bf16 %v243
      %v276 = vunpack.c.l.bf16 %v244
      %v277 = vunpack.c.l.bf16 %v245
      %v278 = vunpack.c.l.bf16 %v246
      %v279 = vunpack.c.l.bf16 %v247
      %v280 = vunpack.c.l.bf16 %v248
      %v281 = vunpack.c.l.bf16 %v249
      %v282 = vunpack.c.l.bf16 %v250
      %v283 = vunpack.c.l.bf16 %v251
      %v284 = vunpack.c.l.bf16 %v252
      %v285 = vunpack.c.l.bf16 %v253
      %v286 = vunpack.c.l.bf16 %v254
      %v287 = vunpack.c.l.bf16 %v255
      %v288 = vunpack.c.l.bf16 %v256
      %v289 = vunpack.c.l.bf16 %v257
      %v290 = vunpack.c.l.bf16 %v258
      %v291 = vunpack.c.l.bf16 %v259
      %v292 = vunpack.c.l.bf16 %v260
      %v293 = vunpack.c.l.bf16 %v261
      %v294 = vunpack.c.l.bf16 %v262
      %v295 = vunpack.c.l.bf16 %v263
      %v296 = vunpack.c.l.bf16 %v264
      %v297 = vunpack.c.l.bf16 %v265
      %v298 = vunpack.c.l.bf16 %v266
      %v299 = vunpack.c.l.bf16 %v267
      %v300 = vunpack.c.l.bf16 %v268
      %v301 = vld [vmem:[%s1] sm:$0x1]
      %v303 = vlaneseq
      %v304 = vshrl.u32 %v303, 7
      %v305 = vsub.s32 0, %v304
      %v306 = vrot.slane %v301, %v305
      %v308 = vmul.f32 %v269, %v306
      %v309 = vmul.f32 %v270, %v306
      %v310 = vmul.f32 %v271, %v306
      %v311 = vmul.f32 %v272, %v306
      %v312 = vmul.f32 %v273, %v306
      %v313 = vmul.f32 %v274, %v306
      %v314 = vmul.f32 %v275, %v306
      %v315 = vmul.f32 %v276, %v306
      %v316 = vmul.f32 %v277, %v306
      %v317 = vmul.f32 %v278, %v306
      %v318 = vmul.f32 %v279, %v306
      %v319 = vmul.f32 %v280, %v306
      %v320 = vmul.f32 %v281, %v306
      %v321 = vmul.f32 %v282, %v306
      %v322 = vmul.f32 %v283, %v306
      %v323 = vmul.f32 %v284, %v306
      %v324 = vmul.f32 %v285, %v306
      %v325 = vmul.f32 %v286, %v306
      %v326 = vmul.f32 %v287, %v306
      %v327 = vmul.f32 %v288, %v306
      %v328 = vmul.f32 %v289, %v306
      %v329 = vmul.f32 %v290, %v306
      %v330 = vmul.f32 %v291, %v306
      %v331 = vmul.f32 %v292, %v306
      %v332 = vmul.f32 %v293, %v306
      %v333 = vmul.f32 %v294, %v306
      %v334 = vmul.f32 %v295, %v306
      %v335 = vmul.f32 %v296, %v306
      %v336 = vmul.f32 %v297, %v306
      %v337 = vmul.f32 %v298, %v306
      %v338 = vmul.f32 %v299, %v306
      %v339 = vmul.f32 %v300, %v306
      %v340 = vld [vmem:[%s2] sm:$0x1]
      %v342 = vlaneseq
      %v343 = vshrl.u32 %v342, 7
      %v344 = vsub.s32 0, %v343
      %v345 = vrot.slane %v340, %v344
      %v347 = vadd.f32 %v308, %v345
      %v348 = vadd.f32 %v309, %v345
      %v349 = vadd.f32 %v310, %v345
      %v350 = vadd.f32 %v311, %v345
      %v351 = vadd.f32 %v312, %v345
      %v352 = vadd.f32 %v313, %v345
      %v353 = vadd.f32 %v314, %v345
      %v354 = vadd.f32 %v315, %v345
      %v355 = vadd.f32 %v316, %v345
      %v356 = vadd.f32 %v317, %v345
      %v357 = vadd.f32 %v318, %v345
      %v358 = vadd.f32 %v319, %v345
      %v359 = vadd.f32 %v320, %v345
      %v360 = vadd.f32 %v321, %v345
      %v361 = vadd.f32 %v322, %v345
      %v362 = vadd.f32 %v323, %v345
      %v363 = vadd.f32 %v324, %v345
      %v364 = vadd.f32 %v325, %v345
      %v365 = vadd.f32 %v326, %v345
      %v366 = vadd.f32 %v327, %v345
      %v367 = vadd.f32 %v328, %v345
      %v368 = vadd.f32 %v329, %v345
      %v369 = vadd.f32 %v330, %v345
      %v370 = vadd.f32 %v331, %v345
      %v371 = vadd.f32 %v332, %v345
      %v372 = vadd.f32 %v333, %v345
      %v373 = vadd.f32 %v334, %v345
      %v374 = vadd.f32 %v335, %v345
      %v375 = vadd.f32 %v336, %v345
      %v376 = vadd.f32 %v337, %v345
      %v377 = vadd.f32 %v338, %v345
      %v378 = vadd.f32 %v339, %v345
      %v379 = vmax.f32 %v347, 0.0
      %v380 = vmax.f32 %v348, 0.0
      %v381 = vmax.f32 %v349, 0.0
      %v382 = vmax.f32 %v350, 0.0
      %v383 = vmax.f32 %v351, 0.0
      %v384 = vmax.f32 %v352, 0.0
      %v385 = vmax.f32 %v353, 0.0
      %v386 = vmax.f32 %v354, 0.0
      %v387 = vmax.f32 %v355, 0.0
      %v388 = vmax.f32 %v356, 0.0
      %v389 = vmax.f32 %v357, 0.0
      %v390 = vmax.f32 %v358, 0.0
      %v391 = vmax.f32 %v359, 0.0
      %v392 = vmax.f32 %v360, 0.0
      %v393 = vmax.f32 %v361, 0.0
      %v394 = vmax.f32 %v362, 0.0
      %v395 = vmax.f32 %v363, 0.0
      %v396 = vmax.f32 %v364, 0.0
      %v397 = vmax.f32 %v365, 0.0
      %v398 = vmax.f32 %v366, 0.0
      %v399 = vmax.f32 %v367, 0.0
      %v400 = vmax.f32 %v368, 0.0
      %v401 = vmax.f32 %v369, 0.0
      %v402 = vmax.f32 %v370, 0.0
      %v403 = vmax.f32 %v371, 0.0
      %v404 = vmax.f32 %v372, 0.0
      %v405 = vmax.f32 %v373, 0.0
      %v406 = vmax.f32 %v374, 0.0
      %v407 = vmax.f32 %v375, 0.0
      %v408 = vmax.f32 %v376, 0.0
      %v409 = vmax.f32 %v377, 0.0
      %v410 = vmax.f32 %v378, 0.0
      %v411 = vpack.c.bf16 %v380, %v379
      %v412 = vpack.c.bf16 %v382, %v381
      %v413 = vpack.c.bf16 %v384, %v383
      %v414 = vpack.c.bf16 %v386, %v385
      %v415 = vpack.c.bf16 %v388, %v387
      %v416 = vpack.c.bf16 %v390, %v389
      %v417 = vpack.c.bf16 %v392, %v391
      %v418 = vpack.c.bf16 %v394, %v393
      %v419 = vpack.c.bf16 %v396, %v395
      %v420 = vpack.c.bf16 %v398, %v397
      %v421 = vpack.c.bf16 %v400, %v399
      %v422 = vpack.c.bf16 %v402, %v401
      %v423 = vpack.c.bf16 %v404, %v403
      %v424 = vpack.c.bf16 %v406, %v405
      %v425 = vpack.c.bf16 %v408, %v407
      %v426 = vpack.c.bf16 %v410, %v409
      %v427 = vld [vmem:[%s3] sm:$0xf]
      %v428 = vld [vmem:[%s3 + $0x4] sm:$0xf]
      %v431 = vunpack.c.l.b16 %v427
      %v432 = vunpack.c.l.b16 %v428
      %v433 = vpack.c.b16 %v432, %v431
      %vm435 = vcmask 130048
      %v437 = vsel %vm435, %v411, 0
      %v440 = vsel %vm435, %v412, 0
      %v443 = vsel %vm435, %v413, 0
      %v446 = vsel %vm435, %v414, 0
      %v449 = vsel %vm435, %v415, 0
      %v452 = vsel %vm435, %v416, 0
      %v455 = vsel %vm435, %v417, 0
      %v458 = vsel %vm435, %v418, 0
      %v461 = vsel %vm435, %v419, 0
      %v464 = vsel %vm435, %v420, 0
      %v467 = vsel %vm435, %v421, 0
      %v470 = vsel %vm435, %v422, 0
      %v473 = vsel %vm435, %v423, 0
      %v476 = vsel %vm435, %v424, 0
      %v479 = vsel %vm435, %v425, 0
      %v482 = vsel %vm435, %v426, 0
      %484 = vmatprep.subr.bf16.mxu0 0
      %485 = vmatpush1.bf16.msra.mxu0 %v433
      %486 = vmatprep.subr.bf16.mxu0 0
      %487 = vmatpush1.bf16.msra.mxu0 0
      %488 = vmatprep.subr.bf16.mxu0 0
      %489 = vmatpush1.bf16.msra.mxu0 0
      %490 = vmatprep.subr.bf16.mxu0 0
      %491 = vmatpush1.bf16.msra.mxu0 0
      %492 = vmatprep.subr.bf16.mxu0 0
      %493 = vmatpush1.bf16.msra.mxu0 0
      %494 = vmatprep.subr.bf16.mxu0 0
      %495 = vmatpush1.bf16.msra.mxu0 0
      %496 = vmatprep.subr.bf16.mxu0 0
      %497 = vmatpush1.bf16.msra.mxu0 0
      %498 = vmatprep.subr.bf16.mxu0 0
      %499 = vmatpush1.bf16.msra.mxu0 0
      %500 = vmatprep.subr.bf16.mxu0 0
      %501 = vmatpush1.bf16.msra.mxu0 0
      %502 = vmatprep.subr.bf16.mxu0 0
      %503 = vmatpush1.bf16.msra.mxu0 0
      %504 = vmatprep.subr.bf16.mxu0 0
      %505 = vmatpush1.bf16.msra.mxu0 0
      %506 = vmatprep.subr.bf16.mxu0 0
      %507 = vmatpush1.bf16.msra.mxu0 0
      %508 = vmatprep.subr.bf16.mxu0 0
      %509 = vmatpush1.bf16.msra.mxu0 0
      %510 = vmatprep.subr.bf16.mxu0 0
      %511 = vmatpush1.bf16.msra.mxu0 0
      %512 = vmatprep.subr.bf16.mxu0 0
      %513 = vmatpush1.bf16.msra.mxu0 0
      %514 = vmatprep.subr.bf16.mxu0 0
      %515 = vmatpush1.bf16.msra.mxu0 0
      %516 = vmatprep.mubr.bf16.mxu0 0
      %517 = vmatmul.mubr.bf16.gmra.mrb[0].mxu0 %v437
      %v518 = vpop.f32.mrb[0].mxu0
      %v519 = vadd.f32 0.0, %v518
      %v520 = vpop.f32.mrb[0].mxu0
      %v521 = vpop.f32.mrb[0].mxu0
      %v522 = vadd.f32 0.0, %v521
      %v523 = vpop.f32.mrb[0].mxu0
      %524 = vmatprep.mubr.bf16.mxu0 0
      %525 = vmatmul.mubr.bf16.gmra.mrb[0].mxu0 %v440
      %v526 = vpop.f32.mrb[0].mxu0
      %v527 = vadd.f32 0.0, %v526
      %v528 = vpop.f32.mrb[0].mxu0
      %v529 = vpop.f32.mrb[0].mxu0
      %v530 = vadd.f32 0.0, %v529
      %v531 = vpop.f32.mrb[0].mxu0
      %532 = vmatprep.mubr.bf16.mxu0 0
      %533 = vmatmul.mubr.bf16.gmra.mrb[0].mxu0 %v443
      %v534 = vpop.f32.mrb[0].mxu0
      %v535 = vadd.f32 0.0, %v534
      %v536 = vpop.f32.mrb[0].mxu0
      %v537 = vpop.f32.mrb[0].mxu0
      %v538 = vadd.f32 0.0, %v537
      %v539 = vpop.f32.mrb[0].mxu0
      %540 = vmatprep.mubr.bf16.mxu0 0
      %541 = vmatmul.mubr.bf16.gmra.mrb[0].mxu0 %v446
      %v542 = vpop.f32.mrb[0].mxu0
      %v543 = vadd.f32 0.0, %v542
      %v544 = vpop.f32.mrb[0].mxu0
      %v545 = vpop.f32.mrb[0].mxu0
      %v546 = vadd.f32 0.0, %v545
      %v547 = vpop.f32.mrb[0].mxu0
      %548 = vmatprep.mubr.bf16.mxu0 0
      %549 = vmatmul.mubr.bf16.gmra.mrb[0].mxu0 %v449
      %v550 = vpop.f32.mrb[0].mxu0
      %v551 = vadd.f32 0.0, %v550
      %v552 = vpop.f32.mrb[0].mxu0
      %v553 = vpop.f32.mrb[0].mxu0
      %v554 = vadd.f32 0.0, %v553
      %v555 = vpop.f32.mrb[0].mxu0
      %556 = vmatprep.mubr.bf16.mxu0 0
      %557 = vmatmul.mubr.bf16.gmra.mrb[0].mxu0 %v452
      %v558 = vpop.f32.mrb[0].mxu0
      %v559 = vadd.f32 0.0, %v558
      %v560 = vpop.f32.mrb[0].mxu0
      %v561 = vpop.f32.mrb[0].mxu0
      %v562 = vadd.f32 0.0, %v561
      %v563 = vpop.f32.mrb[0].mxu0
      %564 = vmatprep.mubr.bf16.mxu0 0
      %565 = vmatmul.mubr.bf16.gmra.mrb[0].mxu0 %v455
      %v566 = vpop.f32.mrb[0].mxu0
      %v567 = vadd.f32 0.0, %v566
      %v568 = vpop.f32.mrb[0].mxu0
      %v569 = vpop.f32.mrb[0].mxu0
      %v570 = vadd.f32 0.0, %v569
      %v571 = vpop.f32.mrb[0].mxu0
      %572 = vmatprep.mubr.bf16.mxu0 0
      %573 = vmatmul.mubr.bf16.gmra.mrb[0].mxu0 %v458
      %v574 = vpop.f32.mrb[0].mxu0
      %v575 = vadd.f32 0.0, %v574
      %v576 = vpop.f32.mrb[0].mxu0
      %v577 = vpop.f32.mrb[0].mxu0
      %v578 = vadd.f32 0.0, %v577
      %v579 = vpop.f32.mrb[0].mxu0
      %580 = vmatprep.mubr.bf16.mxu0 0
      %581 = vmatmul.mubr.bf16.gmra.mrb[0].mxu0 %v461
      %v582 = vpop.f32.mrb[0].mxu0
      %v583 = vadd.f32 0.0, %v582
      %v584 = vpop.f32.mrb[0].mxu0
      %v585 = vpop.f32.mrb[0].mxu0
      %v586 = vadd.f32 0.0, %v585
      %v587 = vpop.f32.mrb[0].mxu0
      %588 = vmatprep.mubr.bf16.mxu0 0
      %589 = vmatmul.mubr.bf16.gmra.mrb[0].mxu0 %v464
      %v590 = vpop.f32.mrb[0].mxu0
      %v591 = vadd.f32 0.0, %v590
      %v592 = vpop.f32.mrb[0].mxu0
      %v593 = vpop.f32.mrb[0].mxu0
      %v594 = vadd.f32 0.0, %v593
      %v595 = vpop.f32.mrb[0].mxu0
      %596 = vmatprep.mubr.bf16.mxu0 0
      %597 = vmatmul.mubr.bf16.gmra.mrb[0].mxu0 %v467
      %v598 = vpop.f32.mrb[0].mxu0
      %v599 = vadd.f32 0.0, %v598
      %v600 = vpop.f32.mrb[0].mxu0
      %v601 = vpop.f32.mrb[0].mxu0
      %v602 = vadd.f32 0.0, %v601
      %v603 = vpop.f32.mrb[0].mxu0
      %604 = vmatprep.mubr.bf16.mxu0 0
      %605 = vmatmul.mubr.bf16.gmra.mrb[0].mxu0 %v470
      %v606 = vpop.f32.mrb[0].mxu0
      %v607 = vadd.f32 0.0, %v606
      %v608 = vpop.f32.mrb[0].mxu0
      %v609 = vpop.f32.mrb[0].mxu0
      %v610 = vadd.f32 0.0, %v609
      %v611 = vpop.f32.mrb[0].mxu0
      %612 = vmatprep.mubr.bf16.mxu0 0
      %613 = vmatmul.mubr.bf16.gmra.mrb[0].mxu0 %v473
      %v614 = vpop.f32.mrb[0].mxu0
      %v615 = vadd.f32 0.0, %v614
      %v616 = vpop.f32.mrb[0].mxu0
      %v617 = vpop.f32.mrb[0].mxu0
      %v618 = vadd.f32 0.0, %v617
      %v619 = vpop.f32.mrb[0].mxu0
      %620 = vmatprep.mubr.bf16.mxu0 0
      %621 = vmatmul.mubr.bf16.gmra.mrb[0].mxu0 %v476
      %v622 = vpop.f32.mrb[0].mxu0
      %v623 = vadd.f32 0.0, %v622
      %v624 = vpop.f32.mrb[0].mxu0
      %v625 = vpop.f32.mrb[0].mxu0
      %v626 = vadd.f32 0.0, %v625
      %v627 = vpop.f32.mrb[0].mxu0
      %628 = vmatprep.mubr.bf16.mxu0 0
      %629 = vmatmul.mubr.bf16.gmra.mrb[0].mxu0 %v479
      %v630 = vpop.f32.mrb[0].mxu0
      %v631 = vadd.f32 0.0, %v630
      %v632 = vpop.f32.mrb[0].mxu0
      %v633 = vpop.f32.mrb[0].mxu0
      %v634 = vadd.f32 0.0, %v633
      %v635 = vpop.f32.mrb[0].mxu0
      %636 = vmatprep.mubr.bf16.mxu0 0
      %637 = vmatmul.mubr.bf16.gmra.mrb[0].mxu0 %v482
      %v638 = vpop.f32.mrb[0].mxu0
      %v639 = vadd.f32 0.0, %v638
      %v640 = vpop.f32.mrb[0].mxu0
      %v641 = vpop.f32.mrb[0].mxu0
      %v642 = vadd.f32 0.0, %v641
      %v643 = vpop.f32.mrb[0].mxu0
      %644 = vdwg.mxu0
      %v645 = vpack.c.bf16 %v522, %v519
      %v646 = vpack.c.bf16 %v530, %v527
      %v647 = vpack.c.bf16 %v538, %v535
      %v648 = vpack.c.bf16 %v546, %v543
      %v649 = vpack.c.bf16 %v554, %v551
      %v650 = vpack.c.bf16 %v562, %v559
      %v651 = vpack.c.bf16 %v570, %v567
      %v652 = vpack.c.bf16 %v578, %v575
      %v653 = vpack.c.bf16 %v586, %v583
      %v654 = vpack.c.bf16 %v594, %v591
      %v655 = vpack.c.bf16 %v602, %v599
      %v656 = vpack.c.bf16 %v610, %v607
      %v657 = vpack.c.bf16 %v618, %v615
      %v658 = vpack.c.bf16 %v626, %v623
      %v659 = vpack.c.bf16 %v634, %v631
      %v660 = vpack.c.bf16 %v642, %v639
      %v677 = vunpack.c.l.b16 %v645
      %v678 = vunpack.c.h.b16 %v645
      %v679 = vunpack.c.l.b16 %v646
      %v680 = vunpack.c.h.b16 %v646
      %v681 = vunpack.c.l.b16 %v647
      %v682 = vunpack.c.h.b16 %v647
      %v683 = vunpack.c.l.b16 %v648
      %v684 = vunpack.c.h.b16 %v648
      %v685 = vunpack.c.l.b16 %v649
      %v686 = vunpack.c.h.b16 %v649
      %v687 = vunpack.c.l.b16 %v650
      %v688 = vunpack.c.h.b16 %v650
      %v689 = vunpack.c.l.b16 %v651
      %v690 = vunpack.c.h.b16 %v651
      %v691 = vunpack.c.l.b16 %v652
      %v692 = vunpack.c.h.b16 %v652
      %v693 = vunpack.c.l.b16 %v653
      %v694 = vunpack.c.h.b16 %v653
      %v695 = vunpack.c.l.b16 %v654
      %v696 = vunpack.c.h.b16 %v654
      %v697 = vunpack.c.l.b16 %v655
      %v698 = vunpack.c.h.b16 %v655
      %v699 = vunpack.c.l.b16 %v656
      %v700 = vunpack.c.h.b16 %v656
      %v701 = vunpack.c.l.b16 %v657
      %v702 = vunpack.c.h.b16 %v657
      %v703 = vunpack.c.l.b16 %v658
      %v704 = vunpack.c.h.b16 %v658
      %v705 = vunpack.c.l.b16 %v659
      %v706 = vunpack.c.h.b16 %v659
      %v707 = vunpack.c.l.b16 %v660
      %v708 = vunpack.c.h.b16 %v660
      %v709 = vpack.c.b16 %v677, %v677
      %v710 = vpack.c.b16 %v678, %v678
      %v711 = vpack.c.b16 %v679, %v679
      %v712 = vpack.c.b16 %v680, %v680
      %v713 = vpack.c.b16 %v681, %v681
      %v714 = vpack.c.b16 %v682, %v682
      %v715 = vpack.c.b16 %v683, %v683
      %v716 = vpack.c.b16 %v684, %v684
      %v717 = vpack.c.b16 %v685, %v685
      %v718 = vpack.c.b16 %v686, %v686
      %v719 = vpack.c.b16 %v687, %v687
      %v720 = vpack.c.b16 %v688, %v688
      %v721 = vpack.c.b16 %v689, %v689
      %v722 = vpack.c.b16 %v690, %v690
      %v723 = vpack.c.b16 %v691, %v691
      %v724 = vpack.c.b16 %v692, %v692
      %v725 = vpack.c.b16 %v693, %v693
      %v726 = vpack.c.b16 %v694, %v694
      %v727 = vpack.c.b16 %v695, %v695
      %v728 = vpack.c.b16 %v696, %v696
      %v729 = vpack.c.b16 %v697, %v697
      %v730 = vpack.c.b16 %v698, %v698
      %v731 = vpack.c.b16 %v699, %v699
      %v732 = vpack.c.b16 %v700, %v700
      %v733 = vpack.c.b16 %v701, %v701
      %v734 = vpack.c.b16 %v702, %v702
      %v735 = vpack.c.b16 %v703, %v703
      %v736 = vpack.c.b16 %v704, %v704
      %v737 = vpack.c.b16 %v705, %v705
      %v738 = vpack.c.b16 %v706, %v706
      %v739 = vpack.c.b16 %v707, %v707
      %v740 = vpack.c.b16 %v708, %v708
      %vm773 = vcmask 519168
      %774 = vst.msk [vmem:[%s231] sm:$0xf] %vm773, %v709
      %775 = vst.msk [vmem:[%s231 + $0x4] sm:$0xf] %vm773, %v710
      %776 = vst.msk [vmem:[%s231 + $0x8] sm:$0xf] %vm773, %v711
      %777 = vst.msk [vmem:[%s231 + $0xc] sm:$0xf] %vm773, %v712
      %778 = vst.msk [vmem:[%s231 + $0x10] sm:$0xf] %vm773, %v713
      %779 = vst.msk [vmem:[%s231 + $0x14] sm:$0xf] %vm773, %v714
      %780 = vst.msk [vmem:[%s231 + $0x18] sm:$0xf] %vm773, %v715
      %781 = vst.msk [vmem:[%s231 + $0x1c] sm:$0xf] %vm773, %v716
      %782 = vst.msk [vmem:[%s231 + $0x20] sm:$0xf] %vm773, %v717
      %783 = vst.msk [vmem:[%s231 + $0x24] sm:$0xf] %vm773, %v718
      %784 = vst.msk [vmem:[%s231 + $0x28] sm:$0xf] %vm773, %v719
      %785 = vst.msk [vmem:[%s231 + $0x2c] sm:$0xf] %vm773, %v720
      %786 = vst.msk [vmem:[%s231 + $0x30] sm:$0xf] %vm773, %v721
      %787 = vst.msk [vmem:[%s231 + $0x34] sm:$0xf] %vm773, %v722
      %788 = vst.msk [vmem:[%s231 + $0x38] sm:$0xf] %vm773, %v723
      %789 = vst.msk [vmem:[%s231 + $0x3c] sm:$0xf] %vm773, %v724
      %790 = vst.msk [vmem:[%s231 + $0x40] sm:$0xf] %vm773, %v725
      %791 = vst.msk [vmem:[%s231 + $0x44] sm:$0xf] %vm773, %v726
      %792 = vst.msk [vmem:[%s231 + $0x48] sm:$0xf] %vm773, %v727
      %793 = vst.msk [vmem:[%s231 + $0x4c] sm:$0xf] %vm773, %v728
      %794 = vst.msk [vmem:[%s231 + $0x50] sm:$0xf] %vm773, %v729
      %795 = vst.msk [vmem:[%s231 + $0x54] sm:$0xf] %vm773, %v730
      %796 = vst.msk [vmem:[%s231 + $0x58] sm:$0xf] %vm773, %v731
      %797 = vst.msk [vmem:[%s231 + $0x5c] sm:$0xf] %vm773, %v732
      %798 = vst.msk [vmem:[%s231 + $0x60] sm:$0xf] %vm773, %v733
      %799 = vst.msk [vmem:[%s231 + $0x64] sm:$0xf] %vm773, %v734
      %800 = vst.msk [vmem:[%s231 + $0x68] sm:$0xf] %vm773, %v735
      %801 = vst.msk [vmem:[%s231 + $0x6c] sm:$0xf] %vm773, %v736
      %802 = vst.msk [vmem:[%s231 + $0x70] sm:$0xf] %vm773, %v737
      %803 = vst.msk [vmem:[%s231 + $0x74] sm:$0xf] %vm773, %v738
      %804 = vst.msk [vmem:[%s231 + $0x78] sm:$0xf] %vm773, %v739
      %805 = vst.msk [vmem:[%s231 + $0x7c] sm:$0xf] %vm773, %v740
      %vm806 = vcmask 523264
      %v807 = vsel %vm806, %v519, 0.0
      %v808 = vsel %vm806, %v522, 0.0
      %v809 = vadd.f32 %v807, %v808
      %v810 = vsel %vm806, %v527, 0.0
      %v811 = vadd.f32 %v809, %v810
      %v812 = vsel %vm806, %v530, 0.0
      %v813 = vadd.f32 %v811, %v812
      %v814 = vsel %vm806, %v535, 0.0
      %v815 = vadd.f32 %v813, %v814
      %v816 = vsel %vm806, %v538, 0.0
      %v817 = vadd.f32 %v815, %v816
      %v818 = vsel %vm806, %v543, 0.0
      %v819 = vadd.f32 %v817, %v818
      %v820 = vsel %vm806, %v546, 0.0
      %v821 = vadd.f32 %v819, %v820
      %v822 = vsel %vm806, %v551, 0.0
      %v823 = vadd.f32 %v821, %v822
      %v824 = vsel %vm806, %v554, 0.0
      %v825 = vadd.f32 %v823, %v824
      %v826 = vsel %vm806, %v559, 0.0
      %v827 = vadd.f32 %v825, %v826
      %v828 = vsel %vm806, %v562, 0.0
      %v829 = vadd.f32 %v827, %v828
      %v830 = vsel %vm806, %v567, 0.0
      %v831 = vadd.f32 %v829, %v830
      %v832 = vsel %vm806, %v570, 0.0
      %v833 = vadd.f32 %v831, %v832
      %v834 = vsel %vm806, %v575, 0.0
      %v835 = vadd.f32 %v833, %v834
      %v836 = vsel %vm806, %v578, 0.0
      %v837 = vadd.f32 %v835, %v836
      %v838 = vsel %vm806, %v583, 0.0
      %v839 = vadd.f32 %v837, %v838
      %v840 = vsel %vm806, %v586, 0.0
      %v841 = vadd.f32 %v839, %v840
      %v842 = vsel %vm806, %v591, 0.0
      %v843 = vadd.f32 %v841, %v842
      %v844 = vsel %vm806, %v594, 0.0
      %v845 = vadd.f32 %v843, %v844
      %v846 = vsel %vm806, %v599, 0.0
      %v847 = vadd.f32 %v845, %v846
      %v848 = vsel %vm806, %v602, 0.0
      %v849 = vadd.f32 %v847, %v848
      %v850 = vsel %vm806, %v607, 0.0
      %v851 = vadd.f32 %v849, %v850
      %v852 = vsel %vm806, %v610, 0.0
      %v853 = vadd.f32 %v851, %v852
      %v854 = vsel %vm806, %v615, 0.0
      %v855 = vadd.f32 %v853, %v854
      %v856 = vsel %vm806, %v618, 0.0
      %v857 = vadd.f32 %v855, %v856
      %v858 = vsel %vm806, %v623, 0.0
      %v859 = vadd.f32 %v857, %v858
      %v860 = vsel %vm806, %v626, 0.0
      %v861 = vadd.f32 %v859, %v860
      %v862 = vsel %vm806, %v631, 0.0
      %v863 = vadd.f32 %v861, %v862
      %v864 = vsel %vm806, %v634, 0.0
      %v865 = vadd.f32 %v863, %v864
      %v866 = vsel %vm806, %v639, 0.0
      %v867 = vadd.f32 %v865, %v866
      %v868 = vsel %vm806, %v642, 0.0
      %v869 = vadd.f32 %v867, %v868
      %v870 = vrot.slane %v869, 4
      %v871 = vadd.f32 %v869, %v870
      %v872 = vrot.slane %v871, 2
      %v873 = vadd.f32 %v871, %v872
      %v874 = vrot.slane %v873, 1
      %v875 = vadd.f32 %v873, %v874
      %v876 = vmul.f32 %v519, %v519
      %v877 = vmul.f32 %v522, %v522
      %v878 = vmul.f32 %v527, %v527
      %v879 = vmul.f32 %v530, %v530
      %v880 = vmul.f32 %v535, %v535
      %v881 = vmul.f32 %v538, %v538
      %v882 = vmul.f32 %v543, %v543
      %v883 = vmul.f32 %v546, %v546
      %v884 = vmul.f32 %v551, %v551
      %v885 = vmul.f32 %v554, %v554
      %v886 = vmul.f32 %v559, %v559
      %v887 = vmul.f32 %v562, %v562
      %v888 = vmul.f32 %v567, %v567
      %v889 = vmul.f32 %v570, %v570
      %v890 = vmul.f32 %v575, %v575
      %v891 = vmul.f32 %v578, %v578
      %v892 = vmul.f32 %v583, %v583
      %v893 = vmul.f32 %v586, %v586
      %v894 = vmul.f32 %v591, %v591
      %v895 = vmul.f32 %v594, %v594
      %v896 = vmul.f32 %v599, %v599
      %v897 = vmul.f32 %v602, %v602
      %v898 = vmul.f32 %v607, %v607
      %v899 = vmul.f32 %v610, %v610
      %v900 = vmul.f32 %v615, %v615
      %v901 = vmul.f32 %v618, %v618
      %v902 = vmul.f32 %v623, %v623
      %v903 = vmul.f32 %v626, %v626
      %v904 = vmul.f32 %v631, %v631
      %v905 = vmul.f32 %v634, %v634
      %v906 = vmul.f32 %v639, %v639
      %v907 = vmul.f32 %v642, %v642
      %v908 = vsel %vm806, %v876, 0.0
      %v909 = vsel %vm806, %v877, 0.0
      %v910 = vadd.f32 %v908, %v909
      %v911 = vsel %vm806, %v878, 0.0
      %v912 = vadd.f32 %v910, %v911
      %v913 = vsel %vm806, %v879, 0.0
      %v914 = vadd.f32 %v912, %v913
      %v915 = vsel %vm806, %v880, 0.0
      %v916 = vadd.f32 %v914, %v915
      %v917 = vsel %vm806, %v881, 0.0
      %v918 = vadd.f32 %v916, %v917
      %v919 = vsel %vm806, %v882, 0.0
      %v920 = vadd.f32 %v918, %v919
      %v921 = vsel %vm806, %v883, 0.0
      %v922 = vadd.f32 %v920, %v921
      %v923 = vsel %vm806, %v884, 0.0
      %v924 = vadd.f32 %v922, %v923
      %v925 = vsel %vm806, %v885, 0.0
      %v926 = vadd.f32 %v924, %v925
      %v927 = vsel %vm806, %v886, 0.0
      %v928 = vadd.f32 %v926, %v927
      %v929 = vsel %vm806, %v887, 0.0
      %v930 = vadd.f32 %v928, %v929
      %v931 = vsel %vm806, %v888, 0.0
      %v932 = vadd.f32 %v930, %v931
      %v933 = vsel %vm806, %v889, 0.0
      %v934 = vadd.f32 %v932, %v933
      %v935 = vsel %vm806, %v890, 0.0
      %v936 = vadd.f32 %v934, %v935
      %v937 = vsel %vm806, %v891, 0.0
      %v938 = vadd.f32 %v936, %v937
      %v939 = vsel %vm806, %v892, 0.0
      %v940 = vadd.f32 %v938, %v939
      %v941 = vsel %vm806, %v893, 0.0
      %v942 = vadd.f32 %v940, %v941
      %v943 = vsel %vm806, %v894, 0.0
      %v944 = vadd.f32 %v942, %v943
      %v945 = vsel %vm806, %v895, 0.0
      %v946 = vadd.f32 %v944, %v945
      %v947 = vsel %vm806, %v896, 0.0
      %v948 = vadd.f32 %v946, %v947
      %v949 = vsel %vm806, %v897, 0.0
      %v950 = vadd.f32 %v948, %v949
      %v951 = vsel %vm806, %v898, 0.0
      %v952 = vadd.f32 %v950, %v951
      %v953 = vsel %vm806, %v899, 0.0
      %v954 = vadd.f32 %v952, %v953
      %v955 = vsel %vm806, %v900, 0.0
      %v956 = vadd.f32 %v954, %v955
      %v957 = vsel %vm806, %v901, 0.0
      %v958 = vadd.f32 %v956, %v957
      %v959 = vsel %vm806, %v902, 0.0
      %v960 = vadd.f32 %v958, %v959
      %v961 = vsel %vm806, %v903, 0.0
      %v962 = vadd.f32 %v960, %v961
      %v963 = vsel %vm806, %v904, 0.0
      %v964 = vadd.f32 %v962, %v963
      %v965 = vsel %vm806, %v905, 0.0
      %v966 = vadd.f32 %v964, %v965
      %v967 = vsel %vm806, %v906, 0.0
      %v968 = vadd.f32 %v966, %v967
      %v969 = vsel %vm806, %v907, 0.0
      %v970 = vadd.f32 %v968, %v969
      %v971 = vrot.slane %v970, 4
      %v972 = vadd.f32 %v970, %v971
      %v973 = vrot.slane %v972, 2
      %v974 = vadd.f32 %v972, %v973
      %v975 = vrot.slane %v974, 1
      %v976 = vadd.f32 %v974, %v975
      %vm977 = vcmask 1040384
      %v978 = vsel %vm977, %v875, %v976
      %vm979 = vcmask 517120
      %980 = vst.msk [vmem:[%s235] sm:$0x3] %vm979, %v978
      %p981 = scmp.lt.s32.totalorder %s17, 1
      %s982 = scalar_select %p981, %s17, 1
      %s983 = smul.addr %s982, 32
      %s984 = smul.addr %s983, 4
      %s985 = scalar_lea.vmem %s4, %s984
      %p986 = scmp.lt.s32.totalorder %s17, 1
      %s987 = scalar_select %p986, %s17, 1
      %s988 = smul.addr %s987, 2
      %s989 = scalar_lea.vmem %s5, %s988
      // Predicated region
      $region37: #{bottleneck_ibn_nhwc.6} parent=35 // pred_check
        %p990 = pneg %p124
      $region38: #{bottleneck_ibn_nhwc.6} parent=35 // pred_check_branch
        %992 = sbr.rel (%p990) target = $region40
      $region39: #{bottleneck_ibn_nhwc.6} parent=35 // pred_region
        _
      $region40: #{bottleneck_ibn_nhwc.6} parent=35 // pred_fallthru
        _
      // Predicated region
      $region41: #{bottleneck_ibn_nhwc.6} parent=35 // pred_check
        %p993 = pneg %p150
      $region42: #{bottleneck_ibn_nhwc.6} parent=35 // pred_check_branch
        %995 = sbr.rel (%p993) target = $region44
      $region43: #{bottleneck_ibn_nhwc.6} parent=35 // pred_region
        _
      $region44: #{bottleneck_ibn_nhwc.6} parent=35 // pred_fallthru
        _
    $region36: #{bottleneck_ibn_nhwc.6} parent=5 // pred_fallthru
      _
    %p996 = scmp.le.s32.totalorder 2, %s12
    // Predicated region
    $region45: #{bottleneck_ibn_nhwc.6} parent=5 // pred_check
      %p997 = pneg %p996
    $region46: #{bottleneck_ibn_nhwc.6} parent=5 // pred_check_branch
      %999 = sbr.rel (%p997) target = $region48
    $region47: #{bottleneck_ibn_nhwc.6} parent=5 // pred_region
      %s1000 = ssub.s32 %s12, 2
      // Predicated region
      $region49: #{bottleneck_ibn_nhwc.6} parent=47 // pred_check
        %p1001 = pneg %p130
      $region50: #{bottleneck_ibn_nhwc.6} parent=47 // pred_check_branch
        %1003 = sbr.rel (%p1001) target = $region52
      $region51: #{bottleneck_ibn_nhwc.6} parent=47 // pred_region
        %p1004 = scmp.lt.s32.totalorder %s18, 1
        %s1005 = scalar_select %p1004, %s18, 1
        %s1006 = smul.addr %s1005, 32
        %s1007 = smul.addr %s1006, 4
        %s1008 = scalar_lea.vmem %s4, %s1007
      $region52: #{bottleneck_ibn_nhwc.6} parent=47 // pred_fallthru
        _
      // Predicated region
      $region53: #{bottleneck_ibn_nhwc.6} parent=47 // pred_check
        %p1009 = pneg %p156
      $region54: #{bottleneck_ibn_nhwc.6} parent=47 // pred_check_branch
        %1011 = sbr.rel (%p1009) target = $region56
      $region55: #{bottleneck_ibn_nhwc.6} parent=47 // pred_region
        %p1012 = scmp.lt.s32.totalorder %s18, 1
        %s1013 = scalar_select %p1012, %s18, 1
        %s1014 = smul.addr %s1013, 2
        %s1015 = scalar_lea.vmem %s5, %s1014
      $region56: #{bottleneck_ibn_nhwc.6} parent=47 // pred_fallthru
        _
    $region48: #{bottleneck_ibn_nhwc.6} parent=5 // pred_fallthru
      _
  $region6: #{bottleneck_ibn_nhwc.6} parent=0 // loop_footer
    %s16 = sadd.s32 1, %s12
  $region7: #{bottleneck_ibn_nhwc.6} parent=0 // loop_footer_branch
    %11 = sbr.rel target = $region3
  $region8: #{bottleneck_ibn_nhwc.6} parent=0 // loop_exit
    _

// kernel: bottleneck_ibn_nhwc.5
$region0: #{bottleneck_ibn_nhwc.5}
  #allocation0 [shape = 'u32[]', space=smem, size = 0x4, offset = 0x4, fixed_abs, tag = 'smem constant byte address 0x4 - core index']
  #allocation1 [shape = 'u32[144,128]{1,0:T(1,128)}', space=vmem, size = 0x12000, scoped, tag = 'internal scratch']
  #allocation2 [shape = 'bf16[18,18,16]{2,1,0:T(8,128)(2,1)}', space=vmem, size = 0x1b000, scoped, tag = 'scratch operand']
  %s0 = inlined_call_operand.vmem [shape: bf16[2,16,16,16], index: 0, kind: input, shape index: {}]
  %s1 = inlined_call_operand.vmem [shape: f32[1,16], index: 1, kind: input, shape index: {}]
  %s2 = inlined_call_operand.vmem [shape: f32[1,16], index: 2, kind: input, shape index: {}]
  %s3 = inlined_call_operand.vmem [shape: f32[1,16], index: 3, kind: input, shape index: {}]
  %s4 = inlined_call_operand.vmem [shape: f32[1,16], index: 4, kind: input, shape index: {}]
  %s5 = inlined_call_operand.vmem [shape: bf16[144,16], index: 5, kind: input, shape index: {}]
  %s6 = inlined_call_operand.vmem [shape: bf16[2,16,16,16], index: 6, kind: output, shape index: {0}]
  %s7 = inlined_call_operand.vmem [shape: f32[2,2,16], index: 7, kind: output, shape index: {1}]
  %8 = xla_tuple %s6, %s7
  %s9 = sld [smem:[#allocation0]]
  $region65: #{bottleneck_ibn_nhwc.5} parent=0
    _
  %s11 = ssub.s32 1, %s9
  %s12 = scalar_select 0, %s11, %s9
  loop: start=0, step=1, limit=4
  $region2: #{bottleneck_ibn_nhwc.5} parent=0 // loop_pre_header
    _
  $region3: #{bottleneck_ibn_nhwc.5} parent=0 // loop_header
    %s14 = sphi 0, %s18
    %p15 = scmp.ge.s32.totalorder %s14, 4
    %s24 = sphi 0, %s26
    %s27 = sphi 0, %s24
    %s28 = sphi 0, %s27
    %s44 = sphi 0, %s28
    %s48 = sphi 0, %s48
    %s50 = sphi 0, %s48
    %s51 = sphi 0, %s50
    %s65 = sphi 0, %s51
    %s69 = sphi 0, %s69
    %s71 = sphi 0, %s69
    %s72 = sphi 0, %s71
    %s86 = sphi 0, %s72
    %s90 = sphi 0, %s90
    %s92 = sphi 0, %s90
    %s93 = sphi 0, %s92
    %s107 = sphi 0, %s93
    %s111 = sphi 0, %s111
    %s113 = sphi 0, %s111
    %s114 = sphi 0, %s113
    %s128 = sphi 0, %s114
    %s132 = sphi 0, %s132
    %s134 = sphi 0, %s132
    %s135 = sphi 0, %s134
    %s149 = sphi 0, %s135
    %s155 = sphi 0, %s157
    %s158 = sphi 0, %s155
    %s159 = sphi 0, %s158
    %s175 = sphi 0, %s159
    %s181 = sphi 0, %s183
    %s184 = sphi 0, %s181
    %s185 = sphi 0, %s184
    %s201 = sphi 0, %s185
  $region4: #{bottleneck_ibn_nhwc.5} parent=0 // loop_header_branch
    %17 = sbr.rel (%p15) target = $region8
  $region5: #{bottleneck_ibn_nhwc.5} parent=0 // loop_body
    %s19 = ssub.s32 %s14, 1
    %s20 = ssub.s32 %s14, 2
    %s21 = sadd.s32 %s14, 1
    %s22 = ssub.s32 %s14, %s21
    %p23 = scmp.eq.s32.totalorder %s22, 0
    %s25 = sadd.s32 %s24, 1
    %s26 = scalar_select %p23, %s24, %s25
    %p29 = pneg %p23
    %p30 = scmp.eq.s32.totalorder %s14, 1
    %p31 = por %p29, %p30
    %p32 = scmp.ne.s32.totalorder %s24, %s27
    %p33 = scmp.eq.s32.totalorder %s14, 0
    %p34 = por %p32, %p33
    %p35 = scmp.ne.s32.totalorder %s24, %s27
    %p36 = scmp.eq.s32.totalorder %s19, 1
    %p37 = por %p35, %p36
    %p38 = scmp.ne.s32.totalorder %s27, %s28
    %p39 = scmp.eq.s32.totalorder %s19, 0
    %p40 = por %p38, %p39
    %p41 = scmp.ne.s32.totalorder %s27, %s28
    %p42 = scmp.eq.s32.totalorder %s20, 1
    %p43 = por %p41, %p42
    %p45 = scmp.ne.s32.totalorder %s28, %s44
    %p46 = scmp.eq.s32.totalorder %s20, 0
    %p47 = por %p45, %p46
    %s49 = sadd.s32 %s48, 1
    %p52 = scmp.eq.s32.totalorder %s14, 1
    %p53 = scmp.ne.s32.totalorder %s48, %s50
    %p54 = scmp.eq.s32.totalorder %s14, 0
    %p55 = por %p53, %p54
    %p56 = scmp.ne.s32.totalorder %s48, %s50
    %p57 = scmp.eq.s32.totalorder %s19, 1
    %p58 = por %p56, %p57
    %p59 = scmp.ne.s32.totalorder %s50, %s51
    %p60 = scmp.eq.s32.totalorder %s19, 0
    %p61 = por %p59, %p60
    %p62 = scmp.ne.s32.totalorder %s50, %s51
    %p63 = scmp.eq.s32.totalorder %s20, 1
    %p64 = por %p62, %p63
    %p66 = scmp.ne.s32.totalorder %s51, %s65
    %p67 = scmp.eq.s32.totalorder %s20, 0
    %p68 = por %p66, %p67
    %s70 = sadd.s32 %s69, 1
    %p73 = scmp.eq.s32.totalorder %s14, 1
    %p74 = scmp.ne.s32.totalorder %s69, %s71
    %p75 = scmp.eq.s32.totalorder %s14, 0
    %p76 = por %p74, %p75
    %p77 = scmp.ne.s32.totalorder %s69, %s71
    %p78 = scmp.eq.s32.totalorder %s19, 1
    %p79 = por %p77, %p78
    %p80 = scmp.ne.s32.totalorder %s71, %s72
    %p81 = scmp.eq.s32.totalorder %s19, 0
    %p82 = por %p80, %p81
    %p83 = scmp.ne.s32.totalorder %s71, %s72
    %p84 = scmp.eq.s32.totalorder %s20, 1
    %p85 = por %p83, %p84
    %p87 = scmp.ne.s32.totalorder %s72, %s86
    %p88 = scmp.eq.s32.totalorder %s20, 0
    %p89 = por %p87, %p88
    %s91 = sadd.s32 %s90, 1
    %p94 = scmp.eq.s32.totalorder %s14, 1
    %p95 = scmp.ne.s32.totalorder %s90, %s92
    %p96 = scmp.eq.s32.totalorder %s14, 0
    %p97 = por %p95, %p96
    %p98 = scmp.ne.s32.totalorder %s90, %s92
    %p99 = scmp.eq.s32.totalorder %s19, 1
    %p100 = por %p98, %p99
    %p101 = scmp.ne.s32.totalorder %s92, %s93
    %p102 = scmp.eq.s32.totalorder %s19, 0
    %p103 = por %p101, %p102
    %p104 = scmp.ne.s32.totalorder %s92, %s93
    %p105 = scmp.eq.s32.totalorder %s20, 1
    %p106 = por %p104, %p105
    %p108 = scmp.ne.s32.totalorder %s93, %s107
    %p109 = scmp.eq.s32.totalorder %s20, 0
    %p110 = por %p108, %p109
    %s112 = sadd.s32 %s111, 1
    %p115 = scmp.eq.s32.totalorder %s14, 1
    %p116 = scmp.ne.s32.totalorder %s111, %s113
    %p117 = scmp.eq.s32.totalorder %s14, 0
    %p118 = por %p116, %p117
    %p119 = scmp.ne.s32.totalorder %s111, %s113
    %p120 = scmp.eq.s32.totalorder %s19, 1
    %p121 = por %p119, %p120
    %p122 = scmp.ne.s32.totalorder %s113, %s114
    %p123 = scmp.eq.s32.totalorder %s19, 0
    %p124 = por %p122, %p123
    %p125 = scmp.ne.s32.totalorder %s113, %s114
    %p126 = scmp.eq.s32.totalorder %s20, 1
    %p127 = por %p125, %p126
    %p129 = scmp.ne.s32.totalorder %s114, %s128
    %p130 = scmp.eq.s32.totalorder %s20, 0
    %p131 = por %p129, %p130
    %s133 = sadd.s32 %s132, 1
    %p136 = scmp.eq.s32.totalorder %s14, 1
    %p137 = scmp.ne.s32.totalorder %s132, %s134
    %p138 = scmp.eq.s32.totalorder %s14, 0
    %p139 = por %p137, %p138
    %p140 = scmp.ne.s32.totalorder %s132, %s134
    %p141 = scmp.eq.s32.totalorder %s19, 1
    %p142 = por %p140, %p141
    %p143 = scmp.ne.s32.totalorder %s134, %s135
    %p144 = scmp.eq.s32.totalorder %s19, 0
    %p145 = por %p143, %p144
    %p146 = scmp.ne.s32.totalorder %s134, %s135
    %p147 = scmp.eq.s32.totalorder %s20, 1
    %p148 = por %p146, %p147
    %p150 = scmp.ne.s32.totalorder %s135, %s149
    %p151 = scmp.eq.s32.totalorder %s20, 0
    %p152 = por %p150, %p151
    %s153 = ssub.s32 %s14, %s21
    %p154 = scmp.eq.s32.totalorder %s153, 0
    %s156 = sadd.s32 %s155, 1
    %s157 = scalar_select %p154, %s155, %s156
    %p160 = pneg %p154
    %p161 = scmp.eq.s32.totalorder %s14, 1
    %p162 = por %p160, %p161
    %p163 = scmp.ne.s32.totalorder %s155, %s158
    %p164 = scmp.eq.s32.totalorder %s14, 0
    %p165 = por %p163, %p164
    %p166 = scmp.ne.s32.totalorder %s155, %s158
    %p167 = scmp.eq.s32.totalorder %s19, 1
    %p168 = por %p166, %p167
    %p169 = scmp.ne.s32.totalorder %s158, %s159
    %p170 = scmp.eq.s32.totalorder %s19, 0
    %p171 = por %p169, %p170
    %p172 = scmp.ne.s32.totalorder %s158, %s159
    %p173 = scmp.eq.s32.totalorder %s20, 1
    %p174 = por %p172, %p173
    %p176 = scmp.ne.s32.totalorder %s159, %s175
    %p177 = scmp.eq.s32.totalorder %s20, 0
    %p178 = por %p176, %p177
    %s179 = ssub.s32 %s14, %s21
    %p180 = scmp.eq.s32.totalorder %s179, 0
    %s182 = sadd.s32 %s181, 1
    %s183 = scalar_select %p180, %s181, %s182
    %p186 = pneg %p180
    %p187 = scmp.eq.s32.totalorder %s14, 1
    %p188 = por %p186, %p187
    %p189 = scmp.ne.s32.totalorder %s181, %s184
    %p190 = scmp.eq.s32.totalorder %s14, 0
    %p191 = por %p189, %p190
    %p192 = scmp.ne.s32.totalorder %s181, %s184
    %p193 = scmp.eq.s32.totalorder %s19, 1
    %p194 = por %p192, %p193
    %p195 = scmp.ne.s32.totalorder %s184, %s185
    %p196 = scmp.eq.s32.totalorder %s19, 0
    %p197 = por %p195, %p196
    %p198 = scmp.ne.s32.totalorder %s184, %s185
    %p199 = scmp.eq.s32.totalorder %s20, 1
    %p200 = por %p198, %p199
    %p202 = scmp.ne.s32.totalorder %s185, %s201
    %p203 = scmp.eq.s32.totalorder %s20, 0
    %p204 = por %p202, %p203
    %p205 = scmp.le.s32.totalorder 1, %s14
    %p206 = scmp.lt.s32.totalorder %s14, 3
    %p207 = pnand %p205, %p206
    %p208 = pneg %p207
    // Predicated region
    $region9: #{bottleneck_ibn_nhwc.5} parent=5 // pred_check
      _
    $region10: #{bottleneck_ibn_nhwc.5} parent=5 // pred_check_branch
      %210 = sbr.rel (%p207) target = $region12
    $region11: #{bottleneck_ibn_nhwc.5} parent=5 // pred_region
      %s211 = ssub.s32 %s14, 1
      // Predicated region
      $region13: #{bottleneck_ibn_nhwc.5} parent=11 // pred_check
        %p212 = pneg %p61
      $region14: #{bottleneck_ibn_nhwc.5} parent=11 // pred_check_branch
        %214 = sbr.rel (%p212) target = $region16
      $region15: #{bottleneck_ibn_nhwc.5} parent=11 // pred_region
        _
      $region16: #{bottleneck_ibn_nhwc.5} parent=11 // pred_fallthru
        _
      // Predicated region
      $region17: #{bottleneck_ibn_nhwc.5} parent=11 // pred_check
        %p215 = pneg %p82
      $region18: #{bottleneck_ibn_nhwc.5} parent=11 // pred_check_branch
        %217 = sbr.rel (%p215) target = $region20
      $region19: #{bottleneck_ibn_nhwc.5} parent=11 // pred_region
        _
      $region20: #{bottleneck_ibn_nhwc.5} parent=11 // pred_fallthru
        _
      // Predicated region
      $region21: #{bottleneck_ibn_nhwc.5} parent=11 // pred_check
        %p218 = pneg %p103
      $region22: #{bottleneck_ibn_nhwc.5} parent=11 // pred_check_branch
        %220 = sbr.rel (%p218) target = $region24
      $region23: #{bottleneck_ibn_nhwc.5} parent=11 // pred_region
        _
      $region24: #{bottleneck_ibn_nhwc.5} parent=11 // pred_fallthru
        _
      // Predicated region
      $region25: #{bottleneck_ibn_nhwc.5} parent=11 // pred_check
        %p221 = pneg %p124
      $region26: #{bottleneck_ibn_nhwc.5} parent=11 // pred_check_branch
        %223 = sbr.rel (%p221) target = $region28
      $region27: #{bottleneck_ibn_nhwc.5} parent=11 // pred_region
        _
      $region28: #{bottleneck_ibn_nhwc.5} parent=11 // pred_fallthru
        _
      // Predicated region
      $region29: #{bottleneck_ibn_nhwc.5} parent=11 // pred_check
        %p224 = pneg %p145
      $region30: #{bottleneck_ibn_nhwc.5} parent=11 // pred_check_branch
        %226 = sbr.rel (%p224) target = $region32
      $region31: #{bottleneck_ibn_nhwc.5} parent=11 // pred_region
        _
      $region32: #{bottleneck_ibn_nhwc.5} parent=11 // pred_fallthru
        _
    $region12: #{bottleneck_ibn_nhwc.5} parent=5 // pred_fallthru
      _
    %p227 = scmp.lt.s32.totalorder %s14, 2
    // Predicated region
    $region33: #{bottleneck_ibn_nhwc.5} parent=5 // pred_check
      %p228 = pneg %p227
    $region34: #{bottleneck_ibn_nhwc.5} parent=5 // pred_check_branch
      %230 = sbr.rel (%p228) target = $region36
    $region35: #{bottleneck_ibn_nhwc.5} parent=5 // pred_region
      // Predicated region
      $region37: #{bottleneck_ibn_nhwc.5} parent=35 // pred_check
        %p231 = pneg %p34
      $region38: #{bottleneck_ibn_nhwc.5} parent=35 // pred_check_branch
        %233 = sbr.rel (%p231) target = $region40
      $region39: #{bottleneck_ibn_nhwc.5} parent=35 // pred_region
        %p234 = scmp.lt.s32.totalorder %s14, 1
        %s235 = scalar_select %p234, %s14, 1
        %s236 = smul.addr %s235, 32
        %s237 = smul.addr %s236, 4
        %s238 = scalar_lea.vmem %s0, %s237
      $region40: #{bottleneck_ibn_nhwc.5} parent=35 // pred_fallthru
        _
    $region36: #{bottleneck_ibn_nhwc.5} parent=5 // pred_fallthru
      _
    %p239 = scmp.le.s32.totalorder 1, %s14
    %p240 = scmp.lt.s32.totalorder %s14, 3
    %p241 = pnand %p239, %p240
    %p242 = pneg %p241
    // Predicated region
    $region41: #{bottleneck_ibn_nhwc.5} parent=5 // pred_check
      _
    $region42: #{bottleneck_ibn_nhwc.5} parent=5 // pred_check_branch
      %244 = sbr.rel (%p241) target = $region44
    $region43: #{bottleneck_ibn_nhwc.5} parent=5 // pred_region
      %s245 = ssub.s32 %s14, 1
      %p246 = scmp.lt.s32.totalorder %s19, 1
      %s247 = scalar_select %p246, %s19, 1
      %s248 = smul.addr %s247, 32
      %s249 = smul.addr %s248, 4
      %s250 = scalar_lea.vmem %s0, %s249
      %p251 = pneg %p40
      %p252 = pneg %p37
      %p253 = pneg %p61
      %p254 = pneg %p58
      %p255 = pneg %p82
      %p256 = pneg %p79
      %p257 = pneg %p103
      %p258 = pneg %p100
      %p259 = pneg %p124
      %p260 = pneg %p121
      %p261 = pneg %p145
      %p262 = pneg %p142
      %p263 = pneg %p171
      %p264 = pneg %p168
      %p265 = scmp.lt.s32.totalorder %s19, 1
      %s266 = scalar_select %p265, %s19, 1
      %s267 = smul.addr %s266, 32
      %s268 = smul.addr %s267, 4
      %s269 = scalar_lea.vmem %s6, %s268
      %p270 = pneg %p197
      %p271 = pneg %p194
      %p272 = scmp.lt.s32.totalorder %s19, 1
      %s273 = scalar_select %p272, %s19, 1
      %s274 = smul.addr %s273, 2
      %s275 = scalar_lea.vmem %s7, %s274
      %p276 = scmp.lt.s32.totalorder %s19, 1
      %s277 = scalar_select %p276, %s19, 1
      %s278 = smul.addr %s277, 32
      %s279 = smul.addr %s278, 4
      %s280 = scalar_lea.vmem %s0, %s279
      %p281 = scmp.lt.s32.totalorder %s19, 1
      %s282 = scalar_select %p281, %s19, 1
      %s283 = smul.addr %s282, 32
      %s284 = smul.addr %s283, 4
      %s285 = scalar_lea.vmem %s6, %s284
      %p286 = scmp.lt.s32.totalorder %s19, 1
      %s287 = scalar_select %p286, %s19, 1
      %s288 = smul.addr %s287, 2
      %s289 = scalar_lea.vmem %s7, %s288
      %v291 = vld [vmem:[%s280] sm:$0xf]
      %v292 = vld [vmem:[%s280 + $0x4] sm:$0xf]
      %v293 = vld [vmem:[%s280 + $0x8] sm:$0xf]
      %v294 = vld [vmem:[%s280 + $0xc] sm:$0xf]
      %v295 = vld [vmem:[%s280 + $0x10] sm:$0xf]
      %v296 = vld [vmem:[%s280 + $0x14] sm:$0xf]
      %v297 = vld [vmem:[%s280 + $0x18] sm:$0xf]
      %v298 = vld [vmem:[%s280 + $0x1c] sm:$0xf]
      %v299 = vld [vmem:[%s280 + $0x20] sm:$0xf]
      %v300 = vld [vmem:[%s280 + $0x24] sm:$0xf]
      %v301 = vld [vmem:[%s280 + $0x28] sm:$0xf]
      %v302 = vld [vmem:[%s280 + $0x2c] sm:$0xf]
      %v303 = vld [vmem:[%s280 + $0x30] sm:$0xf]
      %v304 = vld [vmem:[%s280 + $0x34] sm:$0xf]
      %v305 = vld [vmem:[%s280 + $0x38] sm:$0xf]
      %v306 = vld [vmem:[%s280 + $0x3c] sm:$0xf]
      %v307 = vld [vmem:[%s280 + $0x40] sm:$0xf]
      %v308 = vld [vmem:[%s280 + $0x44] sm:$0xf]
      %v309 = vld [vmem:[%s280 + $0x48] sm:$0xf]
      %v310 = vld [vmem:[%s280 + $0x4c] sm:$0xf]
      %v311 = vld [vmem:[%s280 + $0x50] sm:$0xf]
      %v312 = vld [vmem:[%s280 + $0x54] sm:$0xf]
      %v313 = vld [vmem:[%s280 + $0x58] sm:$0xf]
      %v314 = vld [vmem:[%s280 + $0x5c] sm:$0xf]
      %v315 = vld [vmem:[%s280 + $0x60] sm:$0xf]
      %v316 = vld [vmem:[%s280 + $0x64] sm:$0xf]
      %v317 = vld [vmem:[%s280 + $0x68] sm:$0xf]
      %v318 = vld [vmem:[%s280 + $0x6c] sm:$0xf]
      %v319 = vld [vmem:[%s280 + $0x70] sm:$0xf]
      %v320 = vld [vmem:[%s280 + $0x74] sm:$0xf]
      %v321 = vld [vmem:[%s280 + $0x78] sm:$0xf]
      %v322 = vld [vmem:[%s280 + $0x7c] sm:$0xf]
      %v323 = vunpack.c.l.bf16 %v291
      %v324 = vunpack.c.l.bf16 %v292
      %v325 = vunpack.c.l.bf16 %v293
      %v326 = vunpack.c.l.bf16 %v294
      %v327 = vunpack.c.l.bf16 %v295
      %v328 = vunpack.c.l.bf16 %v296
      %v329 = vunpack.c.l.bf16 %v297
      %v330 = vunpack.c.l.bf16 %v298
      %v331 = vunpack.c.l.bf16 %v299
      %v332 = vunpack.c.l.bf16 %v300
      %v333 = vunpack.c.l.bf16 %v301
      %v334 = vunpack.c.l.bf16 %v302
      %v335 = vunpack.c.l.bf16 %v303
      %v336 = vunpack.c.l.bf16 %v304
      %v337 = vunpack.c.l.bf16 %v305
      %v338 = vunpack.c.l.bf16 %v306
      %v339 = vunpack.c.l.bf16 %v307
      %v340 = vunpack.c.l.bf16 %v308
      %v341 = vunpack.c.l.bf16 %v309
      %v342 = vunpack.c.l.bf16 %v310
      %v343 = vunpack.c.l.bf16 %v311
      %v344 = vunpack.c.l.bf16 %v312
      %v345 = vunpack.c.l.bf16 %v313
      %v346 = vunpack.c.l.bf16 %v314
      %v347 = vunpack.c.l.bf16 %v315
      %v348 = vunpack.c.l.bf16 %v316
      %v349 = vunpack.c.l.bf16 %v317
      %v350 = vunpack.c.l.bf16 %v318
      %v351 = vunpack.c.l.bf16 %v319
      %v352 = vunpack.c.l.bf16 %v320
      %v353 = vunpack.c.l.bf16 %v321
      %v354 = vunpack.c.l.bf16 %v322
      %vm355 = vcmask 130048
      %v356 = vsel %vm355, %v323, 0.0
      %v357 = vsel %vm355, %v324, 0.0
      %v358 = vadd.f32 %v356, %v357
      %v359 = vsel %vm355, %v325, 0.0
      %v360 = vadd.f32 %v358, %v359
      %v361 = vsel %vm355, %v326, 0.0
      %v362 = vadd.f32 %v360, %v361
      %v363 = vsel %vm355, %v327, 0.0
      %v364 = vadd.f32 %v362, %v363
      %v365 = vsel %vm355, %v328, 0.0
      %v366 = vadd.f32 %v364, %v365
      %v367 = vsel %vm355, %v329, 0.0
      %v368 = vadd.f32 %v366, %v367
      %v369 = vsel %vm355, %v330, 0.0
      %v370 = vadd.f32 %v368, %v369
      %v371 = vsel %vm355, %v331, 0.0
      %v372 = vadd.f32 %v370, %v371
      %v373 = vsel %vm355, %v332, 0.0
      %v374 = vadd.f32 %v372, %v373
      %v375 = vsel %vm355, %v333, 0.0
      %v376 = vadd.f32 %v374, %v375
      %v377 = vsel %vm355, %v334, 0.0
      %v378 = vadd.f32 %v376, %v377
      %v379 = vsel %vm355, %v335, 0.0
      %v380 = vadd.f32 %v378, %v379
      %v381 = vsel %vm355, %v336, 0.0
      %v382 = vadd.f32 %v380, %v381
      %v383 = vsel %vm355, %v337, 0.0
      %v384 = vadd.f32 %v382, %v383
      %v385 = vsel %vm355, %v338, 0.0
      %v386 = vadd.f32 %v384, %v385
      %v387 = vsel %vm355, %v339, 0.0
      %v388 = vadd.f32 %v386, %v387
      %v389 = vsel %vm355, %v340, 0.0
      %v390 = vadd.f32 %v388, %v389
      %v391 = vsel %vm355, %v341, 0.0
      %v392 = vadd.f32 %v390, %v391
      %v393 = vsel %vm355, %v342, 0.0
      %v394 = vadd.f32 %v392, %v393
      %v395 = vsel %vm355, %v343, 0.0
      %v396 = vadd.f32 %v394, %v395
      %v397 = vsel %vm355, %v344, 0.0
      %v398 = vadd.f32 %v396, %v397
      %v399 = vsel %vm355, %v345, 0.0
      %v400 = vadd.f32 %v398, %v399
      %v401 = vsel %vm355, %v346, 0.0
      %v402 = vadd.f32 %v400, %v401
      %v403 = vsel %vm355, %v347, 0.0
      %v404 = vadd.f32 %v402, %v403
      %v405 = vsel %vm355, %v348, 0.0
      %v406 = vadd.f32 %v404, %v405
      %v407 = vsel %vm355, %v349, 0.0
      %v408 = vadd.f32 %v406, %v407
      %v409 = vsel %vm355, %v350, 0.0
      %v410 = vadd.f32 %v408, %v409
      %v411 = vsel %vm355, %v351, 0.0
      %v412 = vadd.f32 %v410, %v411
      %v413 = vsel %vm355, %v352, 0.0
      %v414 = vadd.f32 %v412, %v413
      %v415 = vsel %vm355, %v353, 0.0
      %v416 = vadd.f32 %v414, %v415
      %v417 = vsel %vm355, %v354, 0.0
      %v418 = vadd.f32 %v416, %v417
      %v419 = vrot.slane %v418, 4
      %v420 = vadd.f32 %v418, %v419
      %v421 = vrot.slane %v420, 2
      %v422 = vadd.f32 %v420, %v421
      %v423 = vrot.slane %v422, 1
      %v424 = vadd.f32 %v422, %v423
      %v425 = vmul.f32 %v424, 0.00390625
      %v426 = vmul.f32 %v323, %v323
      %v427 = vmul.f32 %v324, %v324
      %v428 = vmul.f32 %v325, %v325
      %v429 = vmul.f32 %v326, %v326
      %v430 = vmul.f32 %v327, %v327
      %v431 = vmul.f32 %v328, %v328
      %v432 = vmul.f32 %v329, %v329
      %v433 = vmul.f32 %v330, %v330
      %v434 = vmul.f32 %v331, %v331
      %v435 = vmul.f32 %v332, %v332
      %v436 = vmul.f32 %v333, %v333
      %v437 = vmul.f32 %v334, %v334
      %v438 = vmul.f32 %v335, %v335
      %v439 = vmul.f32 %v336, %v336
      %v440 = vmul.f32 %v337, %v337
      %v441 = vmul.f32 %v338, %v338
      %v442 = vmul.f32 %v339, %v339
      %v443 = vmul.f32 %v340, %v340
      %v444 = vmul.f32 %v341, %v341
      %v445 = vmul.f32 %v342, %v342
      %v446 = vmul.f32 %v343, %v343
      %v447 = vmul.f32 %v344, %v344
      %v448 = vmul.f32 %v345, %v345
      %v449 = vmul.f32 %v346, %v346
      %v450 = vmul.f32 %v347, %v347
      %v451 = vmul.f32 %v348, %v348
      %v452 = vmul.f32 %v349, %v349
      %v453 = vmul.f32 %v350, %v350
      %v454 = vmul.f32 %v351, %v351
      %v455 = vmul.f32 %v352, %v352
      %v456 = vmul.f32 %v353, %v353
      %v457 = vmul.f32 %v354, %v354
      %v458 = vsel %vm355, %v426, 0.0
      %v459 = vsel %vm355, %v427, 0.0
      %v460 = vadd.f32 %v458, %v459
      %v461 = vsel %vm355, %v428, 0.0
      %v462 = vadd.f32 %v460, %v461
      %v463 = vsel %vm355, %v429, 0.0
      %v464 = vadd.f32 %v462, %v463
      %v465 = vsel %vm355, %v430, 0.0
      %v466 = vadd.f32 %v464, %v465
      %v467 = vsel %vm355, %v431, 0.0
      %v468 = vadd.f32 %v466, %v467
      %v469 = vsel %vm355, %v432, 0.0
      %v470 = vadd.f32 %v468, %v469
      %v471 = vsel %vm355, %v433, 0.0
      %v472 = vadd.f32 %v470, %v471
      %v473 = vsel %vm355, %v434, 0.0
      %v474 = vadd.f32 %v472, %v473
      %v475 = vsel %vm355, %v435, 0.0
      %v476 = vadd.f32 %v474, %v475
      %v477 = vsel %vm355, %v436, 0.0
      %v478 = vadd.f32 %v476, %v477
      %v479 = vsel %vm355, %v437, 0.0
      %v480 = vadd.f32 %v478, %v479
      %v481 = vsel %vm355, %v438, 0.0
      %v482 = vadd.f32 %v480, %v481
      %v483 = vsel %vm355, %v439, 0.0
      %v484 = vadd.f32 %v482, %v483
      %v485 = vsel %vm355, %v440, 0.0
      %v486 = vadd.f32 %v484, %v485
      %v487 = vsel %vm355, %v441, 0.0
      %v488 = vadd.f32 %v486, %v487
      %v489 = vsel %vm355, %v442, 0.0
      %v490 = vadd.f32 %v488, %v489
      %v491 = vsel %vm355, %v443, 0.0
      %v492 = vadd.f32 %v490, %v491
      %v493 = vsel %vm355, %v444, 0.0
      %v494 = vadd.f32 %v492, %v493
      %v495 = vsel %vm355, %v445, 0.0
      %v496 = vadd.f32 %v494, %v495
      %v497 = vsel %vm355, %v446, 0.0
      %v498 = vadd.f32 %v496, %v497
      %v499 = vsel %vm355, %v447, 0.0
      %v500 = vadd.f32 %v498, %v499
      %v501 = vsel %vm355, %v448, 0.0
      %v502 = vadd.f32 %v500, %v501
      %v503 = vsel %vm355, %v449, 0.0
      %v504 = vadd.f32 %v502, %v503
      %v505 = vsel %vm355, %v450, 0.0
      %v506 = vadd.f32 %v504, %v505
      %v507 = vsel %vm355, %v451, 0.0
      %v508 = vadd.f32 %v506, %v507
      %v509 = vsel %vm355, %v452, 0.0
      %v510 = vadd.f32 %v508, %v509
      %v511 = vsel %vm355, %v453, 0.0
      %v512 = vadd.f32 %v510, %v511
      %v513 = vsel %vm355, %v454, 0.0
      %v514 = vadd.f32 %v512, %v513
      %v515 = vsel %vm355, %v455, 0.0
      %v516 = vadd.f32 %v514, %v515
      %v517 = vsel %vm355, %v456, 0.0
      %v518 = vadd.f32 %v516, %v517
      %v519 = vsel %vm355, %v457, 0.0
      %v520 = vadd.f32 %v518, %v519
      %v521 = vrot.slane %v520, 4
      %v522 = vadd.f32 %v520, %v521
      %v523 = vrot.slane %v522, 2
      %v524 = vadd.f32 %v522, %v523
      %v525 = vrot.slane %v524, 1
      %v526 = vadd.f32 %v524, %v525
      %v527 = vmul.f32 %v526, 0.00390625
      %v528 = vmul.f32 %v425, %v425
      %v529 = vsub.f32 %v527, %v528
      %v530 = vmax.f32 %v529, 0.0
      %v531 = vld [vmem:[%s1] sm:$0x1]
      %v532 = vadd.f32 %v530, 1e-05
      %v533 = vrsqrt.pop %v532
      %v534 = vmul.f32 %v531, %v533
      %v535 = vld [vmem:[%s2] sm:$0x1]
      %v536 = vmul.f32 %v425, %v534
      %v537 = vsub.f32 %v535, %v536
      %v538 = vlaneseq
      %v539 = vand.u32 %v538, 127
      %vm540 = vcmp.lt.s32.totalorder %v539, 8
      %v541 = vld [vmem:[%s3] sm:$0x1]
      %v542 = vsel %vm540, %v534, %v541
      %v543 = vld [vmem:[%s4] sm:$0x1]
      %v544 = vsel %vm540, %v537, %v543
      %v545 = vlaneseq
      %v546 = vshrl.u32 %v545, 7
      %v547 = vsub.s32 0, %v546
      %v548 = vrot.slane %v542, %v547
      %v549 = vmul.f32 %v323, %v548
      %v550 = vmul.f32 %v324, %v548
      %v551 = vmul.f32 %v325, %v548
      %v552 = vmul.f32 %v326, %v548
      %v553 = vmul.f32 %v327, %v548
      %v554 = vmul.f32 %v328, %v548
      %v555 = vmul.f32 %v329, %v548
      %v556 = vmul.f32 %v330, %v548
      %v557 = vmul.f32 %v331, %v548
      %v558 = vmul.f32 %v332, %v548
      %v559 = vmul.f32 %v333, %v548
      %v560 = vmul.f32 %v334, %v548
      %v561 = vmul.f32 %v335, %v548
      %v562 = vmul.f32 %v336, %v548
      %v563 = vmul.f32 %v337, %v548
      %v564 = vmul.f32 %v338, %v548
      %v565 = vmul.f32 %v339, %v548
      %v566 = vmul.f32 %v340, %v548
      %v567 = vmul.f32 %v341, %v548
      %v568 = vmul.f32 %v342, %v548
      %v569 = vmul.f32 %v343, %v548
      %v570 = vmul.f32 %v344, %v548
      %v571 = vmul.f32 %v345, %v548
      %v572 = vmul.f32 %v346, %v548
      %v573 = vmul.f32 %v347, %v548
      %v574 = vmul.f32 %v348, %v548
      %v575 = vmul.f32 %v349, %v548
      %v576 = vmul.f32 %v350, %v548
      %v577 = vmul.f32 %v351, %v548
      %v578 = vmul.f32 %v352, %v548
      %v579 = vmul.f32 %v353, %v548
      %v580 = vmul.f32 %v354, %v548
      %v581 = vlaneseq
      %v582 = vshrl.u32 %v581, 7
      %v583 = vsub.s32 0, %v582
      %v584 = vrot.slane %v544, %v583
      %v585 = vadd.f32 %v549, %v584
      %v586 = vadd.f32 %v550, %v584
      %v587 = vadd.f32 %v551, %v584
      %v588 = vadd.f32 %v552, %v584
      %v589 = vadd.f32 %v553, %v584
      %v590 = vadd.f32 %v554, %v584
      %v591 = vadd.f32 %v555, %v584
      %v592 = vadd.f32 %v556, %v584
      %v593 = vadd.f32 %v557, %v584
      %v594 = vadd.f32 %v558, %v584
      %v595 = vadd.f32 %v559, %v584
      %v596 = vadd.f32 %v560, %v584
      %v597 = vadd.f32 %v561, %v584
      %v598 = vadd.f32 %v562, %v584
      %v599 = vadd.f32 %v563, %v584
      %v600 = vadd.f32 %v564, %v584
      %v601 = vadd.f32 %v565, %v584
      %v602 = vadd.f32 %v566, %v584
      %v603 = vadd.f32 %v567, %v584
      %v604 = vadd.f32 %v568, %v584
      %v605 = vadd.f32 %v569, %v584
      %v606 = vadd.f32 %v570, %v584
      %v607 = vadd.f32 %v571, %v584
      %v608 = vadd.f32 %v572, %v584
      %v609 = vadd.f32 %v573, %v584
      %v610 = vadd.f32 %v574, %v584
      %v611 = vadd.f32 %v575, %v584
      %v612 = vadd.f32 %v576, %v584
      %v613 = vadd.f32 %v577, %v584
      %v614 = vadd.f32 %v578, %v584
      %v615 = vadd.f32 %v579, %v584
      %v616 = vadd.f32 %v580, %v584
      %v617 = vmax.f32 %v585, 0.0
      %v618 = vmax.f32 %v586, 0.0
      %v619 = vmax.f32 %v587, 0.0
      %v620 = vmax.f32 %v588, 0.0
      %v621 = vmax.f32 %v589, 0.0
      %v622 = vmax.f32 %v590, 0.0
      %v623 = vmax.f32 %v591, 0.0
      %v624 = vmax.f32 %v592, 0.0
      %v625 = vmax.f32 %v593, 0.0
      %v626 = vmax.f32 %v594, 0.0
      %v627 = vmax.f32 %v595, 0.0
      %v628 = vmax.f32 %v596, 0.0
      %v629 = vmax.f32 %v597, 0.0
      %v630 = vmax.f32 %v598, 0.0
      %v631 = vmax.f32 %v599, 0.0
      %v632 = vmax.f32 %v600, 0.0
      %v633 = vmax.f32 %v601, 0.0
      %v634 = vmax.f32 %v602, 0.0
      %v635 = vmax.f32 %v603, 0.0
      %v636 = vmax.f32 %v604, 0.0
      %v637 = vmax.f32 %v605, 0.0
      %v638 = vmax.f32 %v606, 0.0
      %v639 = vmax.f32 %v607, 0.0
      %v640 = vmax.f32 %v608, 0.0
      %v641 = vmax.f32 %v609, 0.0
      %v642 = vmax.f32 %v610, 0.0
      %v643 = vmax.f32 %v611, 0.0
      %v644 = vmax.f32 %v612, 0.0
      %v645 = vmax.f32 %v613, 0.0
      %v646 = vmax.f32 %v614, 0.0
      %v647 = vmax.f32 %v615, 0.0
      %v648 = vmax.f32 %v616, 0.0
      %v649 = vpack.c.bf16 %v618, %v617
      %v650 = vpack.c.bf16 %v620, %v619
      %v651 = vpack.c.bf16 %v622, %v621
      %v652 = vpack.c.bf16 %v624, %v623
      %v653 = vpack.c.bf16 %v626, %v625
      %v654 = vpack.c.bf16 %v628, %v627
      %v655 = vpack.c.bf16 %v630, %v629
      %v656 = vpack.c.bf16 %v632, %v631
      %v657 = vpack.c.bf16 %v634, %v633
      %v658 = vpack.c.bf16 %v636, %v635
      %v659 = vpack.c.bf16 %v638, %v637
      %v660 = vpack.c.bf16 %v640, %v639
      %v661 = vpack.c.bf16 %v642, %v641
      %v662 = vpack.c.bf16 %v644, %v643
      %v663 = vpack.c.bf16 %v646, %v645
      %v664 = vpack.c.bf16 %v648, %v647
      %vm665 = vcmask 125952
      %666 = vst.msk [vmem:[#allocation2] sm:$0xf] %vm665, 0
      %667 = vst.msk [vmem:[#allocation2 + $0x4] sm:$0xf] %vm665, 0
      %vm668 = vcmask 122880
      %669 = vst.msk [vmem:[#allocation2 + $0x8] sm:$0x1] %vm668, 0
      %s670 = scalar_lea.vmem [#allocation2], 204
      %671 = vst.msk [vmem:[%s670] sm:$0xf] %vm665, 0
      %672 = vst.msk [vmem:[%s670 + $0x4] sm:$0xf] %vm665, 0
      %673 = vst.msk [vmem:[%s670 + $0x8] sm:$0x1] %vm668, 0
      %vm674 = vcmask 122880
      %vm675 = vsmask.f32 256
      %vm676 = vmand %vm674, %vm675
      %v677 = vld [vmem:[#allocation2] sm:$0x1]
      %v678 = vsel %vm676, 0, %v677
      %679 = vst [vmem:[#allocation2] sm:$0x1] %v678
      %v680 = vld [vmem:[#allocation2 + $0xc] sm:$0x1]
      %v681 = vsel %vm676, 0, %v680
      %682 = vst [vmem:[#allocation2 + $0xc] sm:$0x1] %v681
      %v683 = vld [vmem:[#allocation2 + $0x18] sm:$0x1]
      %v684 = vsel %vm676, 0, %v683
      %685 = vst [vmem:[#allocation2 + $0x18] sm:$0x1] %v684
      %v686 = vld [vmem:[#allocation2 + $0x24] sm:$0x1]
      %v687 = vsel %vm676, 0, %v686
      %688 = vst [vmem:[#allocation2 + $0x24] sm:$0x1] %v687
      %v689 = vld [vmem:[#allocation2 + $0x30] sm:$0x1]
      %v690 = vsel %vm676, 0, %v689
      %691 = vst [vmem:[#allocation2 + $0x30] sm:$0x1] %v690
      %v692 = vld [vmem:[#allocation2 + $0x3c] sm:$0x1]
      %v693 = vsel %vm676, 0, %v692
      %694 = vst [vmem:[#allocation2 + $0x3c] sm:$0x1] %v693
      %v695 = vld [vmem:[#allocation2 + $0x48] sm:$0x1]
      %v696 = vsel %vm676, 0, %v695
      %697 = vst [vmem:[#allocation2 + $0x48] sm:$0x1] %v696
      %v698 = vld [vmem:[#allocation2 + $0x54] sm:$0x1]
      %v699 = vsel %vm676, 0, %v698
      %700 = vst [vmem:[#allocation2 + $0x54] sm:$0x1] %v699
      %v701 = vld [vmem:[#allocation2 + $0x60] sm:$0x1]
      %v702 = vsel %vm676, 0, %v701
      %703 = vst [vmem:[#allocation2 + $0x60] sm:$0x1] %v702
      %v704 = vld [vmem:[#allocation2 + $0x6c] sm:$0x1]
      %v705 = vsel %vm676, 0, %v704
      %706 = vst [vmem:[#allocation2 + $0x6c] sm:$0x1] %v705
      %v707 = vld [vmem:[#allocation2 + $0x78] sm:$0x1]
      %v708 = vsel %vm676, 0, %v707
      %709 = vst [vmem:[#allocation2 + $0x78] sm:$0x1] %v708
      %v710 = vld [vmem:[#allocation2 + $0x84] sm:$0x1]
      %v711 = vsel %vm676, 0, %v710
      %712 = vst [vmem:[#allocation2 + $0x84] sm:$0x1] %v711
      %v713 = vld [vmem:[#allocation2 + $0x90] sm:$0x1]
      %v714 = vsel %vm676, 0, %v713
      %715 = vst [vmem:[#allocation2 + $0x90] sm:$0x1] %v714
      %v716 = vld [vmem:[#allocation2 + $0x9c] sm:$0x1]
      %v717 = vsel %vm676, 0, %v716
      %718 = vst [vmem:[#allocation2 + $0x9c] sm:$0x1] %v717
      %v719 = vld [vmem:[#allocation2 + $0xa8] sm:$0x1]
      %v720 = vsel %vm676, 0, %v719
      %721 = vst [vmem:[#allocation2 + $0xa8] sm:$0x1] %v720
      %v722 = vld [vmem:[#allocation2 + $0xb4] sm:$0x1]
      %v723 = vsel %vm676, 0, %v722
      %724 = vst [vmem:[#allocation2 + $0xb4] sm:$0x1] %v723
      %v725 = vld [vmem:[#allocation2 + $0xc0] sm:$0x1]
      %v726 = vsel %vm676, 0, %v725
      %727 = vst [vmem:[#allocation2 + $0xc0] sm:$0x1] %v726
      %v728 = vld [vmem:[#allocation2 + $0xcc] sm:$0x1]
      %v729 = vsel %vm676, 0, %v728
      %730 = vst [vmem:[#allocation2 + $0xcc] sm:$0x1] %v729
      %vm731 = vsmask.f32 7938
      %vm732 = vmand %vm674, %vm731
      %v733 = vld [vmem:[#allocation2 + $0x8] sm:$0x1]
      %v734 = vsel %vm732, 0, %v733
      %735 = vst [vmem:[#allocation2 + $0x8] sm:$0x1] %v734
      %v736 = vld [vmem:[#allocation2 + $0x14] sm:$0x1]
      %v737 = vsel %vm732, 0, %v736
      %738 = vst [vmem:[#allocation2 + $0x14] sm:$0x1] %v737
      %v739 = vld [vmem:[#allocation2 + $0x20] sm:$0x1]
      %v740 = vsel %vm732, 0, %v739
      %741 = vst [vmem:[#allocation2 + $0x20] sm:$0x1] %v740
      %v742 = vld [vmem:[#allocation2 + $0x2c] sm:$0x1]
      %v743 = vsel %vm732, 0, %v742
      %744 = vst [vmem:[#allocation2 + $0x2c] sm:$0x1] %v743
      %v745 = vld [vmem:[#allocation2 + $0x38] sm:$0x1]
      %v746 = vsel %vm732, 0, %v745
      %747 = vst [vmem:[#allocation2 + $0x38] sm:$0x1] %v746
      %v748 = vld [vmem:[#allocation2 + $0x44] sm:$0x1]
      %v749 = vsel %vm732, 0, %v748
      %750 = vst [vmem:[#allocation2 + $0x44] sm:$0x1] %v749
      %v751 = vld [vmem:[#allocation2 + $0x50] sm:$0x1]
      %v752 = vsel %vm732, 0, %v751
      %753 = vst [vmem:[#allocation2 + $0x50] sm:$0x1] %v752
      %v754 = vld [vmem:[#allocation2 + $0x5c] sm:$0x1]
      %v755 = vsel %vm732, 0, %v754
      %756 = vst [vmem:[#allocation2 + $0x5c] sm:$0x1] %v755
      %v757 = vld [vmem:[#allocation2 + $0x68] sm:$0x1]
      %v758 = vsel %vm732, 0, %v757
      %759 = vst [vmem:[#allocation2 + $0x68] sm:$0x1] %v758
      %v760 = vld [vmem:[#allocation2 + $0x74] sm:$0x1]
      %v761 = vsel %vm732, 0, %v760
      %762 = vst [vmem:[#allocation2 + $0x74] sm:$0x1] %v761
      %v763 = vld [vmem:[#allocation2 + $0x80] sm:$0x1]
      %v764 = vsel %vm732, 0, %v763
      %765 = vst [vmem:[#allocation2 + $0x80] sm:$0x1] %v764
      %v766 = vld [vmem:[#allocation2 + $0x8c] sm:$0x1]
      %v767 = vsel %vm732, 0, %v766
      %768 = vst [vmem:[#allocation2 + $0x8c] sm:$0x1] %v767
      %v769 = vld [vmem:[#allocation2 + $0x98] sm:$0x1]
      %v770 = vsel %vm732, 0, %v769
      %771 = vst [vmem:[#allocation2 + $0x98] sm:$0x1] %v770
      %v772 = vld [vmem:[#allocation2 + $0xa4] sm:$0x1]
      %v773 = vsel %vm732, 0, %v772
      %774 = vst [vmem:[#allocation2 + $0xa4] sm:$0x1] %v773
      %v775 = vld [vmem:[#allocation2 + $0xb0] sm:$0x1]
      %v776 = vsel %vm732, 0, %v775
      %777 = vst [vmem:[#allocation2 + $0xb0] sm:$0x1] %v776
      %v778 = vld [vmem:[#allocation2 + $0xbc] sm:$0x1]
      %v779 = vsel %vm732, 0, %v778
      %780 = vst [vmem:[#allocation2 + $0xbc] sm:$0x1] %v779
      %v781 = vld [vmem:[#allocation2 + $0xc8] sm:$0x1]
      %v782 = vsel %vm732, 0, %v781
      %783 = vst [vmem:[#allocation2 + $0xc8] sm:$0x1] %v782
      %v784 = vld [vmem:[#allocation2 + $0xd4] sm:$0x1]
      %v785 = vsel %vm732, 0, %v784
      %786 = vst [vmem:[#allocation2 + $0xd4] sm:$0x1] %v785
      %v803 = vunpack.c.l.b16 %v649
      %v804 = vunpack.c.h.b16 %v649
      %v805 = vunpack.c.l.b16 %v650
      %v806 = vunpack.c.h.b16 %v650
      %v807 = vunpack.c.l.b16 %v651
      %v808 = vunpack.c.h.b16 %v651
      %v809 = vunpack.c.l.b16 %v652
      %v810 = vunpack.c.h.b16 %v652
      %v811 = vunpack.c.l.b16 %v653
      %v812 = vunpack.c.h.b16 %v653
      %v813 = vunpack.c.l.b16 %v654
      %v814 = vunpack.c.h.b16 %v654
      %v815 = vunpack.c.l.b16 %v655
      %v816 = vunpack.c.h.b16 %v655
      %v817 = vunpack.c.l.b16 %v656
      %v818 = vunpack.c.h.b16 %v656
      %v819 = vunpack.c.l.b16 %v657
      %v820 = vunpack.c.h.b16 %v657
      %v821 = vunpack.c.l.b16 %v658
      %v822 = vunpack.c.h.b16 %v658
      %v823 = vunpack.c.l.b16 %v659
      %v824 = vunpack.c.h.b16 %v659
      %v825 = vunpack.c.l.b16 %v660
      %v826 = vunpack.c.h.b16 %v660
      %v827 = vunpack.c.l.b16 %v661
      %v828 = vunpack.c.h.b16 %v661
      %v829 = vunpack.c.l.b16 %v662
      %v830 = vunpack.c.h.b16 %v662
      %v831 = vunpack.c.l.b16 %v663
      %v832 = vunpack.c.h.b16 %v663
      %v833 = vunpack.c.l.b16 %v664
      %v834 = vunpack.c.h.b16 %v664
      %v835 = vpack.c.b16 %v803, %v803
      %v836 = vpack.c.b16 %v804, %v804
      %v837 = vpack.c.b16 %v805, %v805
      %v838 = vpack.c.b16 %v806, %v806
      %v839 = vpack.c.b16 %v807, %v807
      %v840 = vpack.c.b16 %v808, %v808
      %v841 = vpack.c.b16 %v809, %v809
      %v842 = vpack.c.b16 %v810, %v810
      %v843 = vpack.c.b16 %v811, %v811
      %v844 = vpack.c.b16 %v812, %v812
      %v845 = vpack.c.b16 %v813, %v813
      %v846 = vpack.c.b16 %v814, %v814
      %v847 = vpack.c.b16 %v815, %v815
      %v848 = vpack.c.b16 %v816, %v816
      %v849 = vpack.c.b16 %v817, %v817
      %v850 = vpack.c.b16 %v818, %v818
      %v851 = vpack.c.b16 %v819, %v819
      %v852 = vpack.c.b16 %v820, %v820
      %v853 = vpack.c.b16 %v821, %v821
      %v854 = vpack.c.b16 %v822, %v822
      %v855 = vpack.c.b16 %v823, %v823
      %v856 = vpack.c.b16 %v824, %v824
      %v857 = vpack.c.b16 %v825, %v825
      %v858 = vpack.c.b16 %v826, %v826
      %v859 = vpack.c.b16 %v827, %v827
      %v860 = vpack.c.b16 %v828, %v828
      %v861 = vpack.c.b16 %v829, %v829
      %v862 = vpack.c.b16 %v830, %v830
      %v863 = vpack.c.b16 %v831, %v831
      %v864 = vpack.c.b16 %v832, %v832
      %v865 = vpack.c.b16 %v833, %v833
      %v866 = vpack.c.b16 %v834, %v834
      %vm867 = vsmask.f32 4368
      %vm868 = vmor %vm675, %vm867
      %v870 = vshrl.u32 %v835, 16
      %v872 = vrot.slane %v870, 7
      %v873 = vshll.u32 %v835, 16
      %v875 = vor.u32 %v872, %v873
      %v876 = vrot.slane %v872, 4
      %v878 = vshrl.u32 %v836, 16
      %v880 = vrot.slane %v878, 7
      %v881 = vshll.u32 %v836, 16
      %v883 = vor.u32 %v880, %v881
      %v884 = vsel %vm868, %v876, %v883
      %v885 = vrot.slane %v880, 4
      %v887 = vshrl.u32 %v837, 16
      %v889 = vrot.slane %v887, 7
      %v890 = vshll.u32 %v837, 16
      %v892 = vor.u32 %v889, %v890
      %v893 = vrot.slane %v889, 4
      %v895 = vshrl.u32 %v838, 16
      %v897 = vrot.slane %v895, 7
      %v898 = vshll.u32 %v838, 16
      %v900 = vor.u32 %v897, %v898
      %v901 = vsel %vm868, %v893, %v900
      %v902 = vrot.slane %v897, 4
      %v904 = vshrl.u32 %v839, 16
      %v906 = vrot.slane %v904, 7
      %v907 = vshll.u32 %v839, 16
      %v909 = vor.u32 %v906, %v907
      %v910 = vrot.slane %v906, 4
      %v912 = vshrl.u32 %v840, 16
      %v914 = vrot.slane %v912, 7
      %v915 = vshll.u32 %v840, 16
      %v917 = vor.u32 %v914, %v915
      %v918 = vsel %vm868, %v910, %v917
      %v919 = vrot.slane %v914, 4
      %v921 = vshrl.u32 %v841, 16
      %v923 = vrot.slane %v921, 7
      %v924 = vshll.u32 %v841, 16
      %v926 = vor.u32 %v923, %v924
      %v927 = vrot.slane %v923, 4
      %v929 = vshrl.u32 %v842, 16
      %v931 = vrot.slane %v929, 7
      %v932 = vshll.u32 %v842, 16
      %v934 = vor.u32 %v931, %v932
      %v935 = vsel %vm868, %v927, %v934
      %v936 = vrot.slane %v931, 4
      %v938 = vshrl.u32 %v843, 16
      %v940 = vrot.slane %v938, 7
      %v941 = vshll.u32 %v843, 16
      %v943 = vor.u32 %v940, %v941
      %v944 = vrot.slane %v940, 4
      %v946 = vshrl.u32 %v844, 16
      %v948 = vrot.slane %v946, 7
      %v949 = vshll.u32 %v844, 16
      %v951 = vor.u32 %v948, %v949
      %v952 = vsel %vm868, %v944, %v951
      %v953 = vrot.slane %v948, 4
      %v955 = vshrl.u32 %v845, 16
      %v957 = vrot.slane %v955, 7
      %v958 = vshll.u32 %v845, 16
      %v960 = vor.u32 %v957, %v958
      %v961 = vrot.slane %v957, 4
      %v963 = vshrl.u32 %v846, 16
      %v965 = vrot.slane %v963, 7
      %v966 = vshll.u32 %v846, 16
      %v968 = vor.u32 %v965, %v966
      %v969 = vsel %vm868, %v961, %v968
      %v970 = vrot.slane %v965, 4
      %v972 = vshrl.u32 %v847, 16
      %v974 = vrot.slane %v972, 7
      %v975 = vshll.u32 %v847, 16
      %v977 = vor.u32 %v974, %v975
      %v978 = vrot.slane %v974, 4
      %v980 = vshrl.u32 %v848, 16
      %v982 = vrot.slane %v980, 7
      %v983 = vshll.u32 %v848, 16
      %v985 = vor.u32 %v982, %v983
      %v986 = vsel %vm868, %v978, %v985
      %v987 = vrot.slane %v982, 4
      %v989 = vshrl.u32 %v849, 16
      %v991 = vrot.slane %v989, 7
      %v992 = vshll.u32 %v849, 16
      %v994 = vor.u32 %v991, %v992
      %v995 = vrot.slane %v991, 4
      %v997 = vshrl.u32 %v850, 16
      %v999 = vrot.slane %v997, 7
      %v1000 = vshll.u32 %v850, 16
      %v1002 = vor.u32 %v999, %v1000
      %v1003 = vsel %vm868, %v995, %v1002
      %v1004 = vrot.slane %v999, 4
      %v1006 = vshrl.u32 %v851, 16
      %v1008 = vrot.slane %v1006, 7
      %v1009 = vshll.u32 %v851, 16
      %v1011 = vor.u32 %v1008, %v1009
      %v1012 = vrot.slane %v1008, 4
      %v1014 = vshrl.u32 %v852, 16
      %v1016 = vrot.slane %v1014, 7
      %v1017 = vshll.u32 %v852, 16
      %v1019 = vor.u32 %v1016, %v1017
      %v1020 = vsel %vm868, %v1012, %v1019
      %v1021 = vrot.slane %v1016, 4
      %v1023 = vshrl.u32 %v853, 16
      %v1025 = vrot.slane %v1023, 7
      %v1026 = vshll.u32 %v853, 16
      %v1028 = vor.u32 %v1025, %v1026
      %v1029 = vrot.slane %v1025, 4
      %v1031 = vshrl.u32 %v854, 16
      %v1033 = vrot.slane %v1031, 7
      %v1034 = vshll.u32 %v854, 16
      %v1036 = vor.u32 %v1033, %v1034
      %v1037 = vsel %vm868, %v1029, %v1036
      %v1038 = vrot.slane %v1033, 4
      %v1040 = vshrl.u32 %v855, 16
      %v1042 = vrot.slane %v1040, 7
      %v1043 = vshll.u32 %v855, 16
      %v1045 = vor.u32 %v1042, %v1043
      %v1046 = vrot.slane %v1042, 4
      %v1048 = vshrl.u32 %v856, 16
      %v1050 = vrot.slane %v1048, 7
      %v1051 = vshll.u32 %v856, 16
      %v1053 = vor.u32 %v1050, %v1051
      %v1054 = vsel %vm868, %v1046, %v1053
      %v1055 = vrot.slane %v1050, 4
      %v1057 = vshrl.u32 %v857, 16
      %v1059 = vrot.slane %v1057, 7
      %v1060 = vshll.u32 %v857, 16
      %v1062 = vor.u32 %v1059, %v1060
      %v1063 = vrot.slane %v1059, 4
      %v1065 = vshrl.u32 %v858, 16
      %v1067 = vrot.slane %v1065, 7
      %v1068 = vshll.u32 %v858, 16
      %v1070 = vor.u32 %v1067, %v1068
      %v1071 = vsel %vm868, %v1063, %v1070
      %v1072 = vrot.slane %v1067, 4
      %v1074 = vshrl.u32 %v859, 16
      %v1076 = vrot.slane %v1074, 7
      %v1077 = vshll.u32 %v859, 16
      %v1079 = vor.u32 %v1076, %v1077
      %v1080 = vrot.slane %v1076, 4
      %v1082 = vshrl.u32 %v860, 16
      %v1084 = vrot.slane %v1082, 7
      %v1085 = vshll.u32 %v860, 16
      %v1087 = vor.u32 %v1084, %v1085
      %v1088 = vsel %vm868, %v1080, %v1087
      %v1089 = vrot.slane %v1084, 4
      %v1091 = vshrl.u32 %v861, 16
      %v1093 = vrot.slane %v1091, 7
      %v1094 = vshll.u32 %v861, 16
      %v1096 = vor.u32 %v1093, %v1094
      %v1097 = vrot.slane %v1093, 4
      %v1099 = vshrl.u32 %v862, 16
      %v1101 = vrot.slane %v1099, 7
      %v1102 = vshll.u32 %v862, 16
      %v1104 = vor.u32 %v1101, %v1102
      %v1105 = vsel %vm868, %v1097, %v1104
      %v1106 = vrot.slane %v1101, 4
      %v1108 = vshrl.u32 %v863, 16
      %v1110 = vrot.slane %v1108, 7
      %v1111 = vshll.u32 %v863, 16
      %v1113 = vor.u32 %v1110, %v1111
      %v1114 = vrot.slane %v1110, 4
      %v1116 = vshrl.u32 %v864, 16
      %v1118 = vrot.slane %v1116, 7
      %v1119 = vshll.u32 %v864, 16
      %v1121 = vor.u32 %v1118, %v1119
      %v1122 = vsel %vm868, %v1114, %v1121
      %v1123 = vrot.slane %v1118, 4
      %v1125 = vshrl.u32 %v865, 16
      %v1127 = vrot.slane %v1125, 7
      %v1128 = vshll.u32 %v865, 16
      %v1130 = vor.u32 %v1127, %v1128
      %v1131 = vrot.slane %v1127, 4
      %v1133 = vshrl.u32 %v866, 16
      %v1135 = vrot.slane %v1133, 7
      %v1136 = vshll.u32 %v866, 16
      %v1138 = vor.u32 %v1135, %v1136
      %v1139 = vsel %vm868, %v1131, %v1138
      %v1140 = vrot.slane %v1135, 4
      %s1189 = scalar_lea.vmem [#allocation2], 12
      %vm1190 = vcmask 125952
      %vm1191 = vmand %vm1190, %vm731
      %v1192 = vld [vmem:[%s1189] sm:$0xf]
      %v1193 = vsel %vm1191, %v875, %v1192
      %1194 = vst [vmem:[%s1189] sm:$0xf] %v1193
      %1195 = vst.msk [vmem:[%s1189 + $0x4] sm:$0xf] %vm665, %v884
      %v1196 = vld [vmem:[%s1189 + $0x8] sm:$0x1]
      %v1197 = vsel %vm676, %v885, %v1196
      %1198 = vst [vmem:[%s1189 + $0x8] sm:$0x1] %v1197
      %v1199 = vld [vmem:[%s1189 + $0xc] sm:$0xf]
      %v1200 = vsel %vm1191, %v892, %v1199
      %1201 = vst [vmem:[%s1189 + $0xc] sm:$0xf] %v1200
      %1202 = vst.msk [vmem:[%s1189 + $0x10] sm:$0xf] %vm665, %v901
      %v1203 = vld [vmem:[%s1189 + $0x14] sm:$0x1]
      %v1204 = vsel %vm676, %v902, %v1203
      %1205 = vst [vmem:[%s1189 + $0x14] sm:$0x1] %v1204
      %v1206 = vld [vmem:[%s1189 + $0x18] sm:$0xf]
      %v1207 = vsel %vm1191, %v909, %v1206
      %1208 = vst [vmem:[%s1189 + $0x18] sm:$0xf] %v1207
      %1209 = vst.msk [vmem:[%s1189 + $0x1c] sm:$0xf] %vm665, %v918
      %v1210 = vld [vmem:[%s1189 + $0x20] sm:$0x1]
      %v1211 = vsel %vm676, %v919, %v1210
      %1212 = vst [vmem:[%s1189 + $0x20] sm:$0x1] %v1211
      %v1213 = vld [vmem:[%s1189 + $0x24] sm:$0xf]
      %v1214 = vsel %vm1191, %v926, %v1213
      %1215 = vst [vmem:[%s1189 + $0x24] sm:$0xf] %v1214
      %1216 = vst.msk [vmem:[%s1189 + $0x28] sm:$0xf] %vm665, %v935
      %v1217 = vld [vmem:[%s1189 + $0x2c] sm:$0x1]
      %v1218 = vsel %vm676, %v936, %v1217
      %1219 = vst [vmem:[%s1189 + $0x2c] sm:$0x1] %v1218
      %v1220 = vld [vmem:[%s1189 + $0x30] sm:$0xf]
      %v1221 = vsel %vm1191, %v943, %v1220
      %1222 = vst [vmem:[%s1189 + $0x30] sm:$0xf] %v1221
      %1223 = vst.msk [vmem:[%s1189 + $0x34] sm:$0xf] %vm665, %v952
      %v1224 = vld [vmem:[%s1189 + $0x38] sm:$0x1]
      %v1225 = vsel %vm676, %v953, %v1224
      %1226 = vst [vmem:[%s1189 + $0x38] sm:$0x1] %v1225
      %v1227 = vld [vmem:[%s1189 + $0x3c] sm:$0xf]
      %v1228 = vsel %vm1191, %v960, %v1227
      %1229 = vst [vmem:[%s1189 + $0x3c] sm:$0xf] %v1228
      %1230 = vst.msk [vmem:[%s1189 + $0x40] sm:$0xf] %vm665, %v969
      %v1231 = vld [vmem:[%s1189 + $0x44] sm:$0x1]
      %v1232 = vsel %vm676, %v970, %v1231
      %1233 = vst [vmem:[%s1189 + $0x44] sm:$0x1] %v1232
      %v1234 = vld [vmem:[%s1189 + $0x48] sm:$0xf]
      %v1235 = vsel %vm1191, %v977, %v1234
      %1236 = vst [vmem:[%s1189 + $0x48] sm:$0xf] %v1235
      %1237 = vst.msk [vmem:[%s1189 + $0x4c] sm:$0xf] %vm665, %v986
      %v1238 = vld [vmem:[%s1189 + $0x50] sm:$0x1]
      %v1239 = vsel %vm676, %v987, %v1238
      %1240 = vst [vmem:[%s1189 + $0x50] sm:$0x1] %v1239
      %v1241 = vld [vmem:[%s1189 + $0x54] sm:$0xf]
      %v1242 = vsel %vm1191, %v994, %v1241
      %1243 = vst [vmem:[%s1189 + $0x54] sm:$0xf] %v1242
      %1244 = vst.msk [vmem:[%s1189 + $0x58] sm:$0xf] %vm665, %v1003
      %v1245 = vld [vmem:[%s1189 + $0x5c] sm:$0x1]
      %v1246 = vsel %vm676, %v1004, %v1245
      %1247 = vst [vmem:[%s1189 + $0x5c] sm:$0x1] %v1246
      %v1248 = vld [vmem:[%s1189 + $0x60] sm:$0xf]
      %v1249 = vsel %vm1191, %v1011, %v1248
      %1250 = vst [vmem:[%s1189 + $0x60] sm:$0xf] %v1249
      %1251 = vst.msk [vmem:[%s1189 + $0x64] sm:$0xf] %vm665, %v1020
      %v1252 = vld [vmem:[%s1189 + $0x68] sm:$0x1]
      %v1253 = vsel %vm676, %v1021, %v1252
      %1254 = vst [vmem:[%s1189 + $0x68] sm:$0x1] %v1253
      %v1255 = vld [vmem:[%s1189 + $0x6c] sm:$0xf]
      %v1256 = vsel %vm1191, %v1028, %v1255
      %1257 = vst [vmem:[%s1189 + $0x6c] sm:$0xf] %v1256
      %1258 = vst.msk [vmem:[%s1189 + $0x70] sm:$0xf] %vm665, %v1037
      %v1259 = vld [vmem:[%s1189 + $0x74] sm:$0x1]
      %v1260 = vsel %vm676, %v1038, %v1259
      %1261 = vst [vmem:[%s1189 + $0x74] sm:$0x1] %v1260
      %v1262 = vld [vmem:[%s1189 + $0x78] sm:$0xf]
      %v1263 = vsel %vm1191, %v1045, %v1262
      %1264 = vst [vmem:[%s1189 + $0x78] sm:$0xf] %v1263
      %1265 = vst.msk [vmem:[%s1189 + $0x7c] sm:$0xf] %vm665, %v1054
      %v1266 = vld [vmem:[%s1189 + $0x80] sm:$0x1]
      %v1267 = vsel %vm676, %v1055, %v1266
      %1268 = vst [vmem:[%s1189 + $0x80] sm:$0x1] %v1267
      %v1269 = vld [vmem:[%s1189 + $0x84] sm:$0xf]
      %v1270 = vsel %vm1191, %v1062, %v1269
      %1271 = vst [vmem:[%s1189 + $0x84] sm:$0xf] %v1270
      %1272 = vst.msk [vmem:[%s1189 + $0x88] sm:$0xf] %vm665, %v1071
      %v1273 = vld [vmem:[%s1189 + $0x8c] sm:$0x1]
      %v1274 = vsel %vm676, %v1072, %v1273
      %1275 = vst [vmem:[%s1189 + $0x8c] sm:$0x1] %v1274
      %v1276 = vld [vmem:[%s1189 + $0x90] sm:$0xf]
      %v1277 = vsel %vm1191, %v1079, %v1276
      %1278 = vst [vmem:[%s1189 + $0x90] sm:$0xf] %v1277
      %1279 = vst.msk [vmem:[%s1189 + $0x94] sm:$0xf] %vm665, %v1088
      %v1280 = vld [vmem:[%s1189 + $0x98] sm:$0x1]
      %v1281 = vsel %vm676, %v1089, %v1280
      %1282 = vst [vmem:[%s1189 + $0x98] sm:$0x1] %v1281
      %v1283 = vld [vmem:[%s1189 + $0x9c] sm:$0xf]
      %v1284 = vsel %vm1191, %v1096, %v1283
      %1285 = vst [vmem:[%s1189 + $0x9c] sm:$0xf] %v1284
      %1286 = vst.msk [vmem:[%s1189 + $0xa0] sm:$0xf] %vm665, %v1105
      %v1287 = vld [vmem:[%s1189 + $0xa4] sm:$0x1]
      %v1288 = vsel %vm676, %v1106, %v1287
      %1289 = vst [vmem:[%s1189 + $0xa4] sm:$0x1] %v1288
      %v1290 = vld [vmem:[%s1189 + $0xa8] sm:$0xf]
      %v1291 = vsel %vm1191, %v1113, %v1290
      %1292 = vst [vmem:[%s1189 + $0xa8] sm:$0xf] %v1291
      %1293 = vst.msk [vmem:[%s1189 + $0xac] sm:$0xf] %vm665, %v1122
      %v1294 = vld [vmem:[%s1189 + $0xb0] sm:$0x1]
      %v1295 = vsel %vm676, %v1123, %v1294
      %1296 = vst [vmem:[%s1189 + $0xb0] sm:$0x1] %v1295
      %v1297 = vld [vmem:[%s1189 + $0xb4] sm:$0xf]
      %v1298 = vsel %vm1191, %v1130, %v1297
      %1299 = vst [vmem:[%s1189 + $0xb4] sm:$0xf] %v1298
      %1300 = vst.msk [vmem:[%s1189 + $0xb8] sm:$0xf] %vm665, %v1139
      %v1301 = vld [vmem:[%s1189 + $0xbc] sm:$0x1]
      %v1302 = vsel %vm676, %v1140, %v1301
      %1303 = vst [vmem:[%s1189 + $0xbc] sm:$0x1] %v1302
      %v1304 = vld [vmem:[#allocation2] sm:$0xf]
      %v1305 = vld [vmem:[#allocation2 + $0x4] sm:$0xf]
      %v1306 = vld [vmem:[#allocation2 + $0xc] sm:$0xf]
      %v1307 = vld [vmem:[#allocation2 + $0x10] sm:$0xf]
      %v1308 = vld [vmem:[#allocation2 + $0x18] sm:$0xf]
      %v1309 = vld [vmem:[#allocation2 + $0x1c] sm:$0xf]
      %v1310 = vld [vmem:[#allocation2 + $0x24] sm:$0xf]
      %v1311 = vld [vmem:[#allocation2 + $0x28] sm:$0xf]
      %v1312 = vld [vmem:[#allocation2 + $0x30] sm:$0xf]
      %v1313 = vld [vmem:[#allocation2 + $0x34] sm:$0xf]
      %v1314 = vld [vmem:[#allocation2 + $0x3c] sm:$0xf]
      %v1315 = vld [vmem:[#allocation2 + $0x40] sm:$0xf]
      %v1316 = vld [vmem:[#allocation2 + $0x48] sm:$0xf]
      %v1317 = vld [vmem:[#allocation2 + $0x4c] sm:$0xf]
      %v1318 = vld [vmem:[#allocation2 + $0x54] sm:$0xf]
      %v1319 = vld [vmem:[#allocation2 + $0x58] sm:$0xf]
      %v1320 = vld [vmem:[#allocation2 + $0x60] sm:$0xf]
      %v1321 = vld [vmem:[#allocation2 + $0x64] sm:$0xf]
      %v1322 = vld [vmem:[#allocation2 + $0x6c] sm:$0xf]
      %v1323 = vld [vmem:[#allocation2 + $0x70] sm:$0xf]
      %v1324 = vld [vmem:[#allocation2 + $0x78] sm:$0xf]
      %v1325 = vld [vmem:[#allocation2 + $0x7c] sm:$0xf]
      %v1326 = vld [vmem:[#allocation2 + $0x84] sm:$0xf]
      %v1327 = vld [vmem:[#allocation2 + $0x88] sm:$0xf]
      %v1328 = vld [vmem:[#allocation2 + $0x90] sm:$0xf]
      %v1329 = vld [vmem:[#allocation2 + $0x94] sm:$0xf]
      %v1330 = vld [vmem:[#allocation2 + $0x9c] sm:$0xf]
      %v1331 = vld [vmem:[#allocation2 + $0xa0] sm:$0xf]
      %v1332 = vld [vmem:[#allocation2 + $0xa8] sm:$0xf]
      %v1333 = vld [vmem:[#allocation2 + $0xac] sm:$0xf]
      %v1334 = vld [vmem:[#allocation2 + $0xb4] sm:$0xf]
      %v1335 = vld [vmem:[#allocation2 + $0xb8] sm:$0xf]
      %v1336 = vld [vmem:[#allocation2 + $0x8] sm:$0x1]
      %v1337 = vld [vmem:[#allocation2 + $0x14] sm:$0x1]
      %v1338 = vld [vmem:[#allocation2 + $0x20] sm:$0x1]
      %v1339 = vld [vmem:[#allocation2 + $0x2c] sm:$0x1]
      %v1340 = vld [vmem:[#allocation2 + $0x38] sm:$0x1]
      %v1341 = vld [vmem:[#allocation2 + $0x44] sm:$0x1]
      %v1342 = vld [vmem:[#allocation2 + $0x50] sm:$0x1]
      %v1343 = vld [vmem:[#allocation2 + $0x5c] sm:$0x1]
      %v1344 = vld [vmem:[#allocation2 + $0x68] sm:$0x1]
      %v1345 = vld [vmem:[#allocation2 + $0x74] sm:$0x1]
      %v1346 = vld [vmem:[#allocation2 + $0x80] sm:$0x1]
      %v1347 = vld [vmem:[#allocation2 + $0x8c] sm:$0x1]
      %v1348 = vld [vmem:[#allocation2 + $0x98] sm:$0x1]
      %v1349 = vld [vmem:[#allocation2 + $0xa4] sm:$0x1]
      %v1350 = vld [vmem:[#allocation2 + $0xb0] sm:$0x1]
      %v1351 = vld [vmem:[#allocation2 + $0xbc] sm:$0x1]
      %v1352 = vld [vmem:[#allocation2] sm:$0xe]
      %v1353 = vld [vmem:[#allocation2 + $0xc] sm:$0xe]
      %v1354 = vld [vmem:[#allocation2 + $0x18] sm:$0xe]
      %v1355 = vld [vmem:[#allocation2 + $0x24] sm:$0xe]
      %v1356 = vld [vmem:[#allocation2 + $0x30] sm:$0xe]
      %v1357 = vld [vmem:[#allocation2 + $0x3c] sm:$0xe]
      %v1358 = vld [vmem:[#allocation2 + $0x48] sm:$0xe]
      %v1359 = vld [vmem:[#allocation2 + $0x54] sm:$0xe]
      %v1360 = vld [vmem:[#allocation2 + $0x60] sm:$0xe]
      %v1361 = vld [vmem:[#allocation2 + $0x6c] sm:$0xe]
      %v1362 = vld [vmem:[#allocation2 + $0x78] sm:$0xe]
      %v1363 = vld [vmem:[#allocation2 + $0x84] sm:$0xe]
      %v1364 = vld [vmem:[#allocation2 + $0x90] sm:$0xe]
      %v1365 = vld [vmem:[#allocation2 + $0x9c] sm:$0xe]
      %v1366 = vld [vmem:[#allocation2 + $0xa8] sm:$0xe]
      %v1367 = vld [vmem:[#allocation2 + $0xb4] sm:$0xe]
      %v1368 = vld [vmem:[%s1189] sm:$0xf]
      %v1369 = vld [vmem:[%s1189 + $0x4] sm:$0xf]
      %v1370 = vld [vmem:[%s1189 + $0xc] sm:$0xf]
      %v1371 = vld [vmem:[%s1189 + $0x10] sm:$0xf]
      %v1372 = vld [vmem:[%s1189 + $0x18] sm:$0xf]
      %v1373 = vld [vmem:[%s1189 + $0x1c] sm:$0xf]
      %v1374 = vld [vmem:[%s1189 + $0x24] sm:$0xf]
      %v1375 = vld [vmem:[%s1189 + $0x28] sm:$0xf]
      %v1376 = vld [vmem:[%s1189 + $0x30] sm:$0xf]
      %v1377 = vld [vmem:[%s1189 + $0x34] sm:$0xf]
      %v1378 = vld [vmem:[%s1189 + $0x3c] sm:$0xf]
      %v1379 = vld [vmem:[%s1189 + $0x40] sm:$0xf]
      %v1380 = vld [vmem:[%s1189 + $0x48] sm:$0xf]
      %v1381 = vld [vmem:[%s1189 + $0x4c] sm:$0xf]
      %v1382 = vld [vmem:[%s1189 + $0x54] sm:$0xf]
      %v1383 = vld [vmem:[%s1189 + $0x58] sm:$0xf]
      %v1384 = vld [vmem:[%s1189 + $0x60] sm:$0xf]
      %v1385 = vld [vmem:[%s1189 + $0x64] sm:$0xf]
      %v1386 = vld [vmem:[%s1189 + $0x6c] sm:$0xf]
      %v1387 = vld [vmem:[%s1189 + $0x70] sm:$0xf]
      %v1388 = vld [vmem:[%s1189 + $0x78] sm:$0xf]
      %v1389 = vld [vmem:[%s1189 + $0x7c] sm:$0xf]
      %v1390 = vld [vmem:[%s1189 + $0x84] sm:$0xf]
      %v1391 = vld [vmem:[%s1189 + $0x88] sm:$0xf]
      %v1392 = vld [vmem:[%s1189 + $0x90] sm:$0xf]
      %v1393 = vld [vmem:[%s1189 + $0x94] sm:$0xf]
      %v1394 = vld [vmem:[%s1189 + $0x9c] sm:$0xf]
      %v1395 = vld [vmem:[%s1189 + $0xa0] sm:$0xf]
      %v1396 = vld [vmem:[%s1189 + $0xa8] sm:$0xf]
      %v1397 = vld [vmem:[%s1189 + $0xac] sm:$0xf]
      %v1398 = vld [vmem:[%s1189 + $0xb4] sm:$0xf]
      %v1399 = vld [vmem:[%s1189 + $0xb8] sm:$0xf]
      %v1400 = vld [vmem:[%s1189 + $0x8] sm:$0x1]
      %v1401 = vld [vmem:[%s1189 + $0x14] sm:$0x1]
      %v1402 = vld [vmem:[%s1189 + $0x20] sm:$0x1]
      %v1403 = vld [vmem:[%s1189 + $0x2c] sm:$0x1]
      %v1404 = vld [vmem:[%s1189 + $0x38] sm:$0x1]
      %v1405 = vld [vmem:[%s1189 + $0x44] sm:$0x1]
      %v1406 = vld [vmem:[%s1189 + $0x50] sm:$0x1]
      %v1407 = vld [vmem:[%s1189 + $0x5c] sm:$0x1]
      %v1408 = vld [vmem:[%s1189 + $0x68] sm:$0x1]
      %v1409 = vld [vmem:[%s1189 + $0x74] sm:$0x1]
      %v1410 = vld [vmem:[%s1189 + $0x80] sm:$0x1]
      %v1411 = vld [vmem:[%s1189 + $0x8c] sm:$0x1]
      %v1412 = vld [vmem:[%s1189 + $0x98] sm:$0x1]
      %v1413 = vld [vmem:[%s1189 + $0xa4] sm:$0x1]
      %v1414 = vld [vmem:[%s1189 + $0xb0] sm:$0x1]
      %v1415 = vld [vmem:[%s1189 + $0xbc] sm:$0x1]
      %v1416 = vld [vmem:[%s1189] sm:$0xe]
      %v1417 = vld [vmem:[%s1189 + $0xc] sm:$0xe]
      %v1418 = vld [vmem:[%s1189 + $0x18] sm:$0xe]
      %v1419 = vld [vmem:[%s1189 + $0x24] sm:$0xe]
      %v1420 = vld [vmem:[%s1189 + $0x30] sm:$0xe]
      %v1421 = vld [vmem:[%s1189 + $0x3c] sm:$0xe]
      %v1422 = vld [vmem:[%s1189 + $0x48] sm:$0xe]
      %v1423 = vld [vmem:[%s1189 + $0x54] sm:$0xe]
      %v1424 = vld [vmem:[%s1189 + $0x60] sm:$0xe]
      %v1425 = vld [vmem:[%s1189 + $0x6c] sm:$0xe]
      %v1426 = vld [vmem:[%s1189 + $0x78] sm:$0xe]
      %v1427 = vld [vmem:[%s1189 + $0x84] sm:$0xe]
      %v1428 = vld [vmem:[%s1189 + $0x90] sm:$0xe]
      %v1429 = vld [vmem:[%s1189 + $0x9c] sm:$0xe]
      %v1430 = vld [vmem:[%s1189 + $0xa8] sm:$0xe]
      %v1431 = vld [vmem:[%s1189 + $0xb4] sm:$0xe]
      %s1432 = scalar_lea.vmem [#allocation2], 24
      %v1433 = vld [vmem:[%s1432] sm:$0xf]
      %v1434 = vld [vmem:[%s1432 + $0x4] sm:$0xf]
      %v1435 = vld [vmem:[%s1432 + $0xc] sm:$0xf]
      %v1436 = vld [vmem:[%s1432 + $0x10] sm:$0xf]
      %v1437 = vld [vmem:[%s1432 + $0x18] sm:$0xf]
      %v1438 = vld [vmem:[%s1432 + $0x1c] sm:$0xf]
      %v1439 = vld [vmem:[%s1432 + $0x24] sm:$0xf]
      %v1440 = vld [vmem:[%s1432 + $0x28] sm:$0xf]
      %v1441 = vld [vmem:[%s1432 + $0x30] sm:$0xf]
      %v1442 = vld [vmem:[%s1432 + $0x34] sm:$0xf]
      %v1443 = vld [vmem:[%s1432 + $0x3c] sm:$0xf]
      %v1444 = vld [vmem:[%s1432 + $0x40] sm:$0xf]
      %v1445 = vld [vmem:[%s1432 + $0x48] sm:$0xf]
      %v1446 = vld [vmem:[%s1432 + $0x4c] sm:$0xf]
      %v1447 = vld [vmem:[%s1432 + $0x54] sm:$0xf]
      %v1448 = vld [vmem:[%s1432 + $0x58] sm:$0xf]
      %v1449 = vld [vmem:[%s1432 + $0x60] sm:$0xf]
      %v1450 = vld [vmem:[%s1432 + $0x64] sm:$0xf]
      %v1451 = vld [vmem:[%s1432 + $0x6c] sm:$0xf]
      %v1452 = vld [vmem:[%s1432 + $0x70] sm:$0xf]
      %v1453 = vld [vmem:[%s1432 + $0x78] sm:$0xf]
      %v1454 = vld [vmem:[%s1432 + $0x7c] sm:$0xf]
      %v1455 = vld [vmem:[%s1432 + $0x84] sm:$0xf]
      %v1456 = vld [vmem:[%s1432 + $0x88] sm:$0xf]
      %v1457 = vld [vmem:[%s1432 + $0x90] sm:$0xf]
      %v1458 = vld [vmem:[%s1432 + $0x94] sm:$0xf]
      %v1459 = vld [vmem:[%s1432 + $0x9c] sm:$0xf]
      %v1460 = vld [vmem:[%s1432 + $0xa0] sm:$0xf]
      %v1461 = vld [vmem:[%s1432 + $0xa8] sm:$0xf]
      %v1462 = vld [vmem:[%s1432 + $0xac] sm:$0xf]
      %v1463 = vld [vmem:[%s1432 + $0xb4] sm:$0xf]
      %v1464 = vld [vmem:[%s1432 + $0xb8] sm:$0xf]
      %v1465 = vld [vmem:[%s1432 + $0x8] sm:$0x1]
      %v1466 = vld [vmem:[%s1432 + $0x14] sm:$0x1]
      %v1467 = vld [vmem:[%s1432 + $0x20] sm:$0x1]
      %v1468 = vld [vmem:[%s1432 + $0x2c] sm:$0x1]
      %v1469 = vld [vmem:[%s1432 + $0x38] sm:$0x1]
      %v1470 = vld [vmem:[%s1432 + $0x44] sm:$0x1]
      %v1471 = vld [vmem:[%s1432 + $0x50] sm:$0x1]
      %v1472 = vld [vmem:[%s1432 + $0x5c] sm:$0x1]
      %v1473 = vld [vmem:[%s1432 + $0x68] sm:$0x1]
      %v1474 = vld [vmem:[%s1432 + $0x74] sm:$0x1]
      %v1475 = vld [vmem:[%s1432 + $0x80] sm:$0x1]
      %v1476 = vld [vmem:[%s1432 + $0x8c] sm:$0x1]
      %v1477 = vld [vmem:[%s1432 + $0x98] sm:$0x1]
      %v1478 = vld [vmem:[%s1432 + $0xa4] sm:$0x1]
      %v1479 = vld [vmem:[%s1432 + $0xb0] sm:$0x1]
      %v1480 = vld [vmem:[%s1432 + $0xbc] sm:$0x1]
      %v1481 = vld [vmem:[%s1432] sm:$0xe]
      %v1482 = vld [vmem:[%s1432 + $0xc] sm:$0xe]
      %v1483 = vld [vmem:[%s1432 + $0x18] sm:$0xe]
      %v1484 = vld [vmem:[%s1432 + $0x24] sm:$0xe]
      %v1485 = vld [vmem:[%s1432 + $0x30] sm:$0xe]
      %v1486 = vld [vmem:[%s1432 + $0x3c] sm:$0xe]
      %v1487 = vld [vmem:[%s1432 + $0x48] sm:$0xe]
      %v1488 = vld [vmem:[%s1432 + $0x54] sm:$0xe]
      %v1489 = vld [vmem:[%s1432 + $0x60] sm:$0xe]
      %v1490 = vld [vmem:[%s1432 + $0x6c] sm:$0xe]
      %v1491 = vld [vmem:[%s1432 + $0x78] sm:$0xe]
      %v1492 = vld [vmem:[%s1432 + $0x84] sm:$0xe]
      %v1493 = vld [vmem:[%s1432 + $0x90] sm:$0xe]
      %v1494 = vld [vmem:[%s1432 + $0x9c] sm:$0xe]
      %v1495 = vld [vmem:[%s1432 + $0xa8] sm:$0xe]
      %v1496 = vld [vmem:[%s1432 + $0xb4] sm:$0xe]
      %v1529 = vunpack.c.l.b16 %v1304
      %v1530 = vunpack.c.l.b16 %v1305
      %v1531 = vunpack.c.l.b16 %v1306
      %v1532 = vunpack.c.l.b16 %v1307
      %v1533 = vunpack.c.l.b16 %v1308
      %v1534 = vunpack.c.l.b16 %v1309
      %v1535 = vunpack.c.l.b16 %v1310
      %v1536 = vunpack.c.l.b16 %v1311
      %v1537 = vunpack.c.l.b16 %v1312
      %v1538 = vunpack.c.l.b16 %v1313
      %v1539 = vunpack.c.l.b16 %v1314
      %v1540 = vunpack.c.l.b16 %v1315
      %v1541 = vunpack.c.l.b16 %v1316
      %v1542 = vunpack.c.l.b16 %v1317
      %v1543 = vunpack.c.l.b16 %v1318
      %v1544 = vunpack.c.l.b16 %v1319
      %v1545 = vunpack.c.l.b16 %v1320
      %v1546 = vunpack.c.l.b16 %v1321
      %v1547 = vunpack.c.l.b16 %v1322
      %v1548 = vunpack.c.l.b16 %v1323
      %v1549 = vunpack.c.l.b16 %v1324
      %v1550 = vunpack.c.l.b16 %v1325
      %v1551 = vunpack.c.l.b16 %v1326
      %v1552 = vunpack.c.l.b16 %v1327
      %v1553 = vunpack.c.l.b16 %v1328
      %v1554 = vunpack.c.l.b16 %v1329
      %v1555 = vunpack.c.l.b16 %v1330
      %v1556 = vunpack.c.l.b16 %v1331
      %v1557 = vunpack.c.l.b16 %v1332
      %v1558 = vunpack.c.l.b16 %v1333
      %v1559 = vunpack.c.l.b16 %v1334
      %v1560 = vunpack.c.l.b16 %v1335
      %v1561 = vpack.c.b16 %v1530, %v1529
      %v1562 = vpack.c.b16 %v1532, %v1531
      %v1563 = vpack.c.b16 %v1534, %v1533
      %v1564 = vpack.c.b16 %v1536, %v1535
      %v1565 = vpack.c.b16 %v1538, %v1537
      %v1566 = vpack.c.b16 %v1540, %v1539
      %v1567 = vpack.c.b16 %v1542, %v1541
      %v1568 = vpack.c.b16 %v1544, %v1543
      %v1569 = vpack.c.b16 %v1546, %v1545
      %v1570 = vpack.c.b16 %v1548, %v1547
      %v1571 = vpack.c.b16 %v1550, %v1549
      %v1572 = vpack.c.b16 %v1552, %v1551
      %v1573 = vpack.c.b16 %v1554, %v1553
      %v1574 = vpack.c.b16 %v1556, %v1555
      %v1575 = vpack.c.b16 %v1558, %v1557
      %v1576 = vpack.c.b16 %v1560, %v1559
      %v1593 = vunpack.c.l.b16 %v1336
      %v1594 = vunpack.c.l.b16 %v1337
      %v1595 = vunpack.c.l.b16 %v1338
      %v1596 = vunpack.c.l.b16 %v1339
      %v1597 = vunpack.c.l.b16 %v1340
      %v1598 = vunpack.c.l.b16 %v1341
      %v1599 = vunpack.c.l.b16 %v1342
      %v1600 = vunpack.c.l.b16 %v1343
      %v1601 = vunpack.c.l.b16 %v1344
      %v1602 = vunpack.c.l.b16 %v1345
      %v1603 = vunpack.c.l.b16 %v1346
      %v1604 = vunpack.c.l.b16 %v1347
      %v1605 = vunpack.c.l.b16 %v1348
      %v1606 = vunpack.c.l.b16 %v1349
      %v1607 = vunpack.c.l.b16 %v1350
      %v1608 = vunpack.c.l.b16 %v1351
      %v1609 = vpack.c.b16 %v1593, %v1593
      %v1610 = vpack.c.b16 %v1594, %v1594
      %v1611 = vpack.c.b16 %v1595, %v1595
      %v1612 = vpack.c.b16 %v1596, %v1596
      %v1613 = vpack.c.b16 %v1597, %v1597
      %v1614 = vpack.c.b16 %v1598, %v1598
      %v1615 = vpack.c.b16 %v1599, %v1599
      %v1616 = vpack.c.b16 %v1600, %v1600
      %v1617 = vpack.c.b16 %v1601, %v1601
      %v1618 = vpack.c.b16 %v1602, %v1602
      %v1619 = vpack.c.b16 %v1603, %v1603
      %v1620 = vpack.c.b16 %v1604, %v1604
      %v1621 = vpack.c.b16 %v1605, %v1605
      %v1622 = vpack.c.b16 %v1606, %v1606
      %v1623 = vpack.c.b16 %v1607, %v1607
      %v1624 = vpack.c.b16 %v1608, %v1608
      %vm1625 = vsmask.f32 7424
      %v1627 = vshrl.u32 %v1561, 16
      %v1629 = vshll.u32 %v1561, 16
      %v1631 = vrot.slane %v1629, 1
      %v1632 = vor.u32 %v1627, %v1631
      %v1634 = vshll.u32 %v1609, 16
      %v1636 = vrot.slane %v1634, 1
      %v1637 = vsel %vm1625, %v1632, %v1636
      %v1639 = vshrl.u32 %v1562, 16
      %v1641 = vshll.u32 %v1562, 16
      %v1643 = vrot.slane %v1641, 1
      %v1644 = vor.u32 %v1639, %v1643
      %v1646 = vshll.u32 %v1610, 16
      %v1648 = vrot.slane %v1646, 1
      %v1649 = vsel %vm1625, %v1644, %v1648
      %v1651 = vshrl.u32 %v1563, 16
      %v1653 = vshll.u32 %v1563, 16
      %v1655 = vrot.slane %v1653, 1
      %v1656 = vor.u32 %v1651, %v1655
      %v1658 = vshll.u32 %v1611, 16
      %v1660 = vrot.slane %v1658, 1
      %v1661 = vsel %vm1625, %v1656, %v1660
      %v1663 = vshrl.u32 %v1564, 16
      %v1665 = vshll.u32 %v1564, 16
      %v1667 = vrot.slane %v1665, 1
      %v1668 = vor.u32 %v1663, %v1667
      %v1670 = vshll.u32 %v1612, 16
      %v1672 = vrot.slane %v1670, 1
      %v1673 = vsel %vm1625, %v1668, %v1672
      %v1675 = vshrl.u32 %v1565, 16
      %v1677 = vshll.u32 %v1565, 16
      %v1679 = vrot.slane %v1677, 1
      %v1680 = vor.u32 %v1675, %v1679
      %v1682 = vshll.u32 %v1613, 16
      %v1684 = vrot.slane %v1682, 1
      %v1685 = vsel %vm1625, %v1680, %v1684
      %v1687 = vshrl.u32 %v1566, 16
      %v1689 = vshll.u32 %v1566, 16
      %v1691 = vrot.slane %v1689, 1
      %v1692 = vor.u32 %v1687, %v1691
      %v1694 = vshll.u32 %v1614, 16
      %v1696 = vrot.slane %v1694, 1
      %v1697 = vsel %vm1625, %v1692, %v1696
      %v1699 = vshrl.u32 %v1567, 16
      %v1701 = vshll.u32 %v1567, 16
      %v1703 = vrot.slane %v1701, 1
      %v1704 = vor.u32 %v1699, %v1703
      %v1706 = vshll.u32 %v1615, 16
      %v1708 = vrot.slane %v1706, 1
      %v1709 = vsel %vm1625, %v1704, %v1708
      %v1711 = vshrl.u32 %v1568, 16
      %v1713 = vshll.u32 %v1568, 16
      %v1715 = vrot.slane %v1713, 1
      %v1716 = vor.u32 %v1711, %v1715
      %v1718 = vshll.u32 %v1616, 16
      %v1720 = vrot.slane %v1718, 1
      %v1721 = vsel %vm1625, %v1716, %v1720
      %v1723 = vshrl.u32 %v1569, 16
      %v1725 = vshll.u32 %v1569, 16
      %v1727 = vrot.slane %v1725, 1
      %v1728 = vor.u32 %v1723, %v1727
      %v1730 = vshll.u32 %v1617, 16
      %v1732 = vrot.slane %v1730, 1
      %v1733 = vsel %vm1625, %v1728, %v1732
      %v1735 = vshrl.u32 %v1570, 16
      %v1737 = vshll.u32 %v1570, 16
      %v1739 = vrot.slane %v1737, 1
      %v1740 = vor.u32 %v1735, %v1739
      %v1742 = vshll.u32 %v1618, 16
      %v1744 = vrot.slane %v1742, 1
      %v1745 = vsel %vm1625, %v1740, %v1744
      %v1747 = vshrl.u32 %v1571, 16
      %v1749 = vshll.u32 %v1571, 16
      %v1751 = vrot.slane %v1749, 1
      %v1752 = vor.u32 %v1747, %v1751
      %v1754 = vshll.u32 %v1619, 16
      %v1756 = vrot.slane %v1754, 1
      %v1757 = vsel %vm1625, %v1752, %v1756
      %v1759 = vshrl.u32 %v1572, 16
      %v1761 = vshll.u32 %v1572, 16
      %v1763 = vrot.slane %v1761, 1
      %v1764 = vor.u32 %v1759, %v1763
      %v1766 = vshll.u32 %v1620, 16
      %v1768 = vrot.slane %v1766, 1
      %v1769 = vsel %vm1625, %v1764, %v1768
      %v1771 = vshrl.u32 %v1573, 16
      %v1773 = vshll.u32 %v1573, 16
      %v1775 = vrot.slane %v1773, 1
      %v1776 = vor.u32 %v1771, %v1775
      %v1778 = vshll.u32 %v1621, 16
      %v1780 = vrot.slane %v1778, 1
      %v1781 = vsel %vm1625, %v1776, %v1780
      %v1783 = vshrl.u32 %v1574, 16
      %v1785 = vshll.u32 %v1574, 16
      %v1787 = vrot.slane %v1785, 1
      %v1788 = vor.u32 %v1783, %v1787
      %v1790 = vshll.u32 %v1622, 16
      %v1792 = vrot.slane %v1790, 1
      %v1793 = vsel %vm1625, %v1788, %v1792
      %v1795 = vshrl.u32 %v1575, 16
      %v1797 = vshll.u32 %v1575, 16
      %v1799 = vrot.slane %v1797, 1
      %v1800 = vor.u32 %v1795, %v1799
      %v1802 = vshll.u32 %v1623, 16
      %v1804 = vrot.slane %v1802, 1
      %v1805 = vsel %vm1625, %v1800, %v1804
      %v1807 = vshrl.u32 %v1576, 16
      %v1809 = vshll.u32 %v1576, 16
      %v1811 = vrot.slane %v1809, 1
      %v1812 = vor.u32 %v1807, %v1811
      %v1814 = vshll.u32 %v1624, 16
      %v1816 = vrot.slane %v1814, 1
      %v1817 = vsel %vm1625, %v1812, %v1816
      %1818 = vrot.lane.b32.xlu0 %v1637, 16
      %v1819 = vpop.permute.xlu0 %1818
      %1820 = vrot.lane.b32.xlu0 %v1649, 16
      %v1821 = vpop.permute.xlu0 %1820
      %1822 = vrot.lane.b32.xlu0 %v1661, 16
      %v1823 = vpop.permute.xlu0 %1822
      %1824 = vrot.lane.b32.xlu0 %v1673, 16
      %v1825 = vpop.permute.xlu0 %1824
      %1826 = vrot.lane.b32.xlu0 %v1685, 16
      %v1827 = vpop.permute.xlu0 %1826
      %1828 = vrot.lane.b32.xlu0 %v1697, 16
      %v1829 = vpop.permute.xlu0 %1828
      %1830 = vrot.lane.b32.xlu0 %v1709, 16
      %v1831 = vpop.permute.xlu0 %1830
      %1832 = vrot.lane.b32.xlu0 %v1721, 16
      %v1833 = vpop.permute.xlu0 %1832
      %1834 = vrot.lane.b32.xlu0 %v1733, 16
      %v1835 = vpop.permute.xlu0 %1834
      %1836 = vrot.lane.b32.xlu0 %v1745, 16
      %v1837 = vpop.permute.xlu0 %1836
      %1838 = vrot.lane.b32.xlu0 %v1757, 16
      %v1839 = vpop.permute.xlu0 %1838
      %1840 = vrot.lane.b32.xlu0 %v1769, 16
      %v1841 = vpop.permute.xlu0 %1840
      %1842 = vrot.lane.b32.xlu0 %v1781, 16
      %v1843 = vpop.permute.xlu0 %1842
      %1844 = vrot.lane.b32.xlu0 %v1793, 16
      %v1845 = vpop.permute.xlu0 %1844
      %1846 = vrot.lane.b32.xlu0 %v1805, 16
      %v1847 = vpop.permute.xlu0 %1846
      %1848 = vrot.lane.b32.xlu0 %v1817, 16
      %v1849 = vpop.permute.xlu0 %1848
      %v1866 = vunpack.c.l.b16 %v1352
      %v1867 = vunpack.c.l.b16 %v1353
      %v1868 = vunpack.c.l.b16 %v1354
      %v1869 = vunpack.c.l.b16 %v1355
      %v1870 = vunpack.c.l.b16 %v1356
      %v1871 = vunpack.c.l.b16 %v1357
      %v1872 = vunpack.c.l.b16 %v1358
      %v1873 = vunpack.c.l.b16 %v1359
      %v1874 = vunpack.c.l.b16 %v1360
      %v1875 = vunpack.c.l.b16 %v1361
      %v1876 = vunpack.c.l.b16 %v1362
      %v1877 = vunpack.c.l.b16 %v1363
      %v1878 = vunpack.c.l.b16 %v1364
      %v1879 = vunpack.c.l.b16 %v1365
      %v1880 = vunpack.c.l.b16 %v1366
      %v1881 = vunpack.c.l.b16 %v1367
      %v1882 = vpack.c.b16 %v1530, %v1866
      %v1883 = vpack.c.b16 %v1532, %v1867
      %v1884 = vpack.c.b16 %v1534, %v1868
      %v1885 = vpack.c.b16 %v1536, %v1869
      %v1886 = vpack.c.b16 %v1538, %v1870
      %v1887 = vpack.c.b16 %v1540, %v1871
      %v1888 = vpack.c.b16 %v1542, %v1872
      %v1889 = vpack.c.b16 %v1544, %v1873
      %v1890 = vpack.c.b16 %v1546, %v1874
      %v1891 = vpack.c.b16 %v1548, %v1875
      %v1892 = vpack.c.b16 %v1550, %v1876
      %v1893 = vpack.c.b16 %v1552, %v1877
      %v1894 = vpack.c.b16 %v1554, %v1878
      %v1895 = vpack.c.b16 %v1556, %v1879
      %v1896 = vpack.c.b16 %v1558, %v1880
      %v1897 = vpack.c.b16 %v1560, %v1881
      %vm1898 = vcmask 1046528
      %v1899 = vrot.slane %v1882, 1
      %v1900 = vrot.slane %v1609, 1
      %v1901 = vsel %vm1898, %v1899, %v1900
      %v1902 = vrot.slane %v1883, 1
      %v1903 = vrot.slane %v1610, 1
      %v1904 = vsel %vm1898, %v1902, %v1903
      %v1905 = vrot.slane %v1884, 1
      %v1906 = vrot.slane %v1611, 1
      %v1907 = vsel %vm1898, %v1905, %v1906
      %v1908 = vrot.slane %v1885, 1
      %v1909 = vrot.slane %v1612, 1
      %v1910 = vsel %vm1898, %v1908, %v1909
      %v1911 = vrot.slane %v1886, 1
      %v1912 = vrot.slane %v1613, 1
      %v1913 = vsel %vm1898, %v1911, %v1912
      %v1914 = vrot.slane %v1887, 1
      %v1915 = vrot.slane %v1614, 1
      %v1916 = vsel %vm1898, %v1914, %v1915
      %v1917 = vrot.slane %v1888, 1
      %v1918 = vrot.slane %v1615, 1
      %v1919 = vsel %vm1898, %v1917, %v1918
      %v1920 = vrot.slane %v1889, 1
      %v1921 = vrot.slane %v1616, 1
      %v1922 = vsel %vm1898, %v1920, %v1921
      %v1923 = vrot.slane %v1890, 1
      %v1924 = vrot.slane %v1617, 1
      %v1925 = vsel %vm1898, %v1923, %v1924
      %v1926 = vrot.slane %v1891, 1
      %v1927 = vrot.slane %v1618, 1
      %v1928 = vsel %vm1898, %v1926, %v1927
      %v1929 = vrot.slane %v1892, 1
      %v1930 = vrot.slane %v1619, 1
      %v1931 = vsel %vm1898, %v1929, %v1930
      %v1932 = vrot.slane %v1893, 1
      %v1933 = vrot.slane %v1620, 1
      %v1934 = vsel %vm1898, %v1932, %v1933
      %v1935 = vrot.slane %v1894, 1
      %v1936 = vrot.slane %v1621, 1
      %v1937 = vsel %vm1898, %v1935, %v1936
      %v1938 = vrot.slane %v1895, 1
      %v1939 = vrot.slane %v1622, 1
      %v1940 = vsel %vm1898, %v1938, %v1939
      %v1941 = vrot.slane %v1896, 1
      %v1942 = vrot.slane %v1623, 1
      %v1943 = vsel %vm1898, %v1941, %v1942
      %v1944 = vrot.slane %v1897, 1
      %v1945 = vrot.slane %v1624, 1
      %v1946 = vsel %vm1898, %v1944, %v1945
      %1947 = vrot.lane.b32.xlu0 %v1901, 32
      %v1948 = vpop.permute.xlu0 %1947
      %1949 = vrot.lane.b32.xlu0 %v1904, 32
      %v1950 = vpop.permute.xlu0 %1949
      %1951 = vrot.lane.b32.xlu0 %v1907, 32
      %v1952 = vpop.permute.xlu0 %1951
      %1953 = vrot.lane.b32.xlu0 %v1910, 32
      %v1954 = vpop.permute.xlu0 %1953
      %1955 = vrot.lane.b32.xlu0 %v1913, 32
      %v1956 = vpop.permute.xlu0 %1955
      %1957 = vrot.lane.b32.xlu0 %v1916, 32
      %v1958 = vpop.permute.xlu0 %1957
      %1959 = vrot.lane.b32.xlu0 %v1919, 32
      %v1960 = vpop.permute.xlu0 %1959
      %1961 = vrot.lane.b32.xlu0 %v1922, 32
      %v1962 = vpop.permute.xlu0 %1961
      %1963 = vrot.lane.b32.xlu0 %v1925, 32
      %v1964 = vpop.permute.xlu0 %1963
      %1965 = vrot.lane.b32.xlu0 %v1928, 32
      %v1966 = vpop.permute.xlu0 %1965
      %1967 = vrot.lane.b32.xlu0 %v1931, 32
      %v1968 = vpop.permute.xlu0 %1967
      %1969 = vrot.lane.b32.xlu0 %v1934, 32
      %v1970 = vpop.permute.xlu0 %1969
      %1971 = vrot.lane.b32.xlu0 %v1937, 32
      %v1972 = vpop.permute.xlu0 %1971
      %1973 = vrot.lane.b32.xlu0 %v1940, 32
      %v1974 = vpop.permute.xlu0 %1973
      %1975 = vrot.lane.b32.xlu0 %v1943, 32
      %v1976 = vpop.permute.xlu0 %1975
      %1977 = vrot.lane.b32.xlu0 %v1946, 32
      %v1978 = vpop.permute.xlu0 %1977
      %v2011 = vunpack.c.l.b16 %v1368
      %v2012 = vunpack.c.l.b16 %v1369
      %v2013 = vunpack.c.l.b16 %v1370
      %v2014 = vunpack.c.l.b16 %v1371
      %v2015 = vunpack.c.l.b16 %v1372
      %v2016 = vunpack.c.l.b16 %v1373
      %v2017 = vunpack.c.l.b16 %v1374
      %v2018 = vunpack.c.l.b16 %v1375
      %v2019 = vunpack.c.l.b16 %v1376
      %v2020 = vunpack.c.l.b16 %v1377
      %v2021 = vunpack.c.l.b16 %v1378
      %v2022 = vunpack.c.l.b16 %v1379
      %v2023 = vunpack.c.l.b16 %v1380
      %v2024 = vunpack.c.l.b16 %v1381
      %v2025 = vunpack.c.l.b16 %v1382
      %v2026 = vunpack.c.l.b16 %v1383
      %v2027 = vunpack.c.l.b16 %v1384
      %v2028 = vunpack.c.l.b16 %v1385
      %v2029 = vunpack.c.l.b16 %v1386
      %v2030 = vunpack.c.l.b16 %v1387
      %v2031 = vunpack.c.l.b16 %v1388
      %v2032 = vunpack.c.l.b16 %v1389
      %v2033 = vunpack.c.l.b16 %v1390
      %v2034 = vunpack.c.l.b16 %v1391
      %v2035 = vunpack.c.l.b16 %v1392
      %v2036 = vunpack.c.l.b16 %v1393
      %v2037 = vunpack.c.l.b16 %v1394
      %v2038 = vunpack.c.l.b16 %v1395
      %v2039 = vunpack.c.l.b16 %v1396
      %v2040 = vunpack.c.l.b16 %v1397
      %v2041 = vunpack.c.l.b16 %v1398
      %v2042 = vunpack.c.l.b16 %v1399
      %v2043 = vpack.c.b16 %v2012, %v2011
      %v2044 = vpack.c.b16 %v2014, %v2013
      %v2045 = vpack.c.b16 %v2016, %v2015
      %v2046 = vpack.c.b16 %v2018, %v2017
      %v2047 = vpack.c.b16 %v2020, %v2019
      %v2048 = vpack.c.b16 %v2022, %v2021
      %v2049 = vpack.c.b16 %v2024, %v2023
      %v2050 = vpack.c.b16 %v2026, %v2025
      %v2051 = vpack.c.b16 %v2028, %v2027
      %v2052 = vpack.c.b16 %v2030, %v2029
      %v2053 = vpack.c.b16 %v2032, %v2031
      %v2054 = vpack.c.b16 %v2034, %v2033
      %v2055 = vpack.c.b16 %v2036, %v2035
      %v2056 = vpack.c.b16 %v2038, %v2037
      %v2057 = vpack.c.b16 %v2040, %v2039
      %v2058 = vpack.c.b16 %v2042, %v2041
      %2059 = vrot.lane.b32.xlu0 %v2043, 48
      %v2060 = vpop.permute.xlu0 %2059
      %2061 = vrot.lane.b32.xlu0 %v2044, 48
      %v2062 = vpop.permute.xlu0 %2061
      %2063 = vrot.lane.b32.xlu0 %v2045, 48
      %v2064 = vpop.permute.xlu0 %2063
      %2065 = vrot.lane.b32.xlu0 %v2046, 48
      %v2066 = vpop.permute.xlu0 %2065
      %2067 = vrot.lane.b32.xlu0 %v2047, 48
      %v2068 = vpop.permute.xlu0 %2067
      %2069 = vrot.lane.b32.xlu0 %v2048, 48
      %v2070 = vpop.permute.xlu0 %2069
      %2071 = vrot.lane.b32.xlu0 %v2049, 48
      %v2072 = vpop.permute.xlu0 %2071
      %2073 = vrot.lane.b32.xlu0 %v2050, 48
      %v2074 = vpop.permute.xlu0 %2073
      %2075 = vrot.lane.b32.xlu0 %v2051, 48
      %v2076 = vpop.permute.xlu0 %2075
      %2077 = vrot.lane.b32.xlu0 %v2052, 48
      %v2078 = vpop.permute.xlu0 %2077
      %2079 = vrot.lane.b32.xlu0 %v2053, 48
      %v2080 = vpop.permute.xlu0 %2079
      %2081 = vrot.lane.b32.xlu0 %v2054, 48
      %v2082 = vpop.permute.xlu0 %2081
      %2083 = vrot.lane.b32.xlu0 %v2055, 48
      %v2084 = vpop.permute.xlu0 %2083
      %2085 = vrot.lane.b32.xlu0 %v2056, 48
      %v2086 = vpop.permute.xlu0 %2085
      %2087 = vrot.lane.b32.xlu0 %v2057, 48
      %v2088 = vpop.permute.xlu0 %2087
      %2089 = vrot.lane.b32.xlu0 %v2058, 48
      %v2090 = vpop.permute.xlu0 %2089
      %v2107 = vunpack.c.l.b16 %v1400
      %v2108 = vunpack.c.l.b16 %v1401
      %v2109 = vunpack.c.l.b16 %v1402
      %v2110 = vunpack.c.l.b16 %v1403
      %v2111 = vunpack.c.l.b16 %v1404
      %v2112 = vunpack.c.l.b16 %v1405
      %v2113 = vunpack.c.l.b16 %v1406
      %v2114 = vunpack.c.l.b16 %v1407
      %v2115 = vunpack.c.l.b16 %v1408
      %v2116 = vunpack.c.l.b16 %v1409
      %v2117 = vunpack.c.l.b16 %v1410
      %v2118 = vunpack.c.l.b16 %v1411
      %v2119 = vunpack.c.l.b16 %v1412
      %v2120 = vunpack.c.l.b16 %v1413
      %v2121 = vunpack.c.l.b16 %v1414
      %v2122 = vunpack.c.l.b16 %v1415
      %v2123 = vpack.c.b16 %v2107, %v2107
      %v2124 = vpack.c.b16 %v2108, %v2108
      %v2125 = vpack.c.b16 %v2109, %v2109
      %v2126 = vpack.c.b16 %v2110, %v2110
      %v2127 = vpack.c.b16 %v2111, %v2111
      %v2128 = vpack.c.b16 %v2112, %v2112
      %v2129 = vpack.c.b16 %v2113, %v2113
      %v2130 = vpack.c.b16 %v2114, %v2114
      %v2131 = vpack.c.b16 %v2115, %v2115
      %v2132 = vpack.c.b16 %v2116, %v2116
      %v2133 = vpack.c.b16 %v2117, %v2117
      %v2134 = vpack.c.b16 %v2118, %v2118
      %v2135 = vpack.c.b16 %v2119, %v2119
      %v2136 = vpack.c.b16 %v2120, %v2120
      %v2137 = vpack.c.b16 %v2121, %v2121
      %v2138 = vpack.c.b16 %v2122, %v2122
      %v2140 = vshrl.u32 %v2043, 16
      %v2142 = vshll.u32 %v2043, 16
      %v2144 = vrot.slane %v2142, 1
      %v2145 = vor.u32 %v2140, %v2144
      %v2147 = vshll.u32 %v2123, 16
      %v2149 = vrot.slane %v2147, 1
      %v2150 = vsel %vm1625, %v2145, %v2149
      %v2152 = vshrl.u32 %v2044, 16
      %v2154 = vshll.u32 %v2044, 16
      %v2156 = vrot.slane %v2154, 1
      %v2157 = vor.u32 %v2152, %v2156
      %v2159 = vshll.u32 %v2124, 16
      %v2161 = vrot.slane %v2159, 1
      %v2162 = vsel %vm1625, %v2157, %v2161
      %v2164 = vshrl.u32 %v2045, 16
      %v2166 = vshll.u32 %v2045, 16
      %v2168 = vrot.slane %v2166, 1
      %v2169 = vor.u32 %v2164, %v2168
      %v2171 = vshll.u32 %v2125, 16
      %v2173 = vrot.slane %v2171, 1
      %v2174 = vsel %vm1625, %v2169, %v2173
      %v2176 = vshrl.u32 %v2046, 16
      %v2178 = vshll.u32 %v2046, 16
      %v2180 = vrot.slane %v2178, 1
      %v2181 = vor.u32 %v2176, %v2180
      %v2183 = vshll.u32 %v2126, 16
      %v2185 = vrot.slane %v2183, 1
      %v2186 = vsel %vm1625, %v2181, %v2185
      %v2188 = vshrl.u32 %v2047, 16
      %v2190 = vshll.u32 %v2047, 16
      %v2192 = vrot.slane %v2190, 1
      %v2193 = vor.u32 %v2188, %v2192
      %v2195 = vshll.u32 %v2127, 16
      %v2197 = vrot.slane %v2195, 1
      %v2198 = vsel %vm1625, %v2193, %v2197
      %v2200 = vshrl.u32 %v2048, 16
      %v2202 = vshll.u32 %v2048, 16
      %v2204 = vrot.slane %v2202, 1
      %v2205 = vor.u32 %v2200, %v2204
      %v2207 = vshll.u32 %v2128, 16
      %v2209 = vrot.slane %v2207, 1
      %v2210 = vsel %vm1625, %v2205, %v2209
      %v2212 = vshrl.u32 %v2049, 16
      %v2214 = vshll.u32 %v2049, 16
      %v2216 = vrot.slane %v2214, 1
      %v2217 = vor.u32 %v2212, %v2216
      %v2219 = vshll.u32 %v2129, 16
      %v2221 = vrot.slane %v2219, 1
      %v2222 = vsel %vm1625, %v2217, %v2221
      %v2224 = vshrl.u32 %v2050, 16
      %v2226 = vshll.u32 %v2050, 16
      %v2228 = vrot.slane %v2226, 1
      %v2229 = vor.u32 %v2224, %v2228
      %v2231 = vshll.u32 %v2130, 16
      %v2233 = vrot.slane %v2231, 1
      %v2234 = vsel %vm1625, %v2229, %v2233
      %v2236 = vshrl.u32 %v2051, 16
      %v2238 = vshll.u32 %v2051, 16
      %v2240 = vrot.slane %v2238, 1
      %v2241 = vor.u32 %v2236, %v2240
      %v2243 = vshll.u32 %v2131, 16
      %v2245 = vrot.slane %v2243, 1
      %v2246 = vsel %vm1625, %v2241, %v2245
      %v2248 = vshrl.u32 %v2052, 16
      %v2250 = vshll.u32 %v2052, 16
      %v2252 = vrot.slane %v2250, 1
      %v2253 = vor.u32 %v2248, %v2252
      %v2255 = vshll.u32 %v2132, 16
      %v2257 = vrot.slane %v2255, 1
      %v2258 = vsel %vm1625, %v2253, %v2257
      %v2260 = vshrl.u32 %v2053, 16
      %v2262 = vshll.u32 %v2053, 16
      %v2264 = vrot.slane %v2262, 1
      %v2265 = vor.u32 %v2260, %v2264
      %v2267 = vshll.u32 %v2133, 16
      %v2269 = vrot.slane %v2267, 1
      %v2270 = vsel %vm1625, %v2265, %v2269
      %v2272 = vshrl.u32 %v2054, 16
      %v2274 = vshll.u32 %v2054, 16
      %v2276 = vrot.slane %v2274, 1
      %v2277 = vor.u32 %v2272, %v2276
      %v2279 = vshll.u32 %v2134, 16
      %v2281 = vrot.slane %v2279, 1
      %v2282 = vsel %vm1625, %v2277, %v2281
      %v2284 = vshrl.u32 %v2055, 16
      %v2286 = vshll.u32 %v2055, 16
      %v2288 = vrot.slane %v2286, 1
      %v2289 = vor.u32 %v2284, %v2288
      %v2291 = vshll.u32 %v2135, 16
      %v2293 = vrot.slane %v2291, 1
      %v2294 = vsel %vm1625, %v2289, %v2293
      %v2296 = vshrl.u32 %v2056, 16
      %v2298 = vshll.u32 %v2056, 16
      %v2300 = vrot.slane %v2298, 1
      %v2301 = vor.u32 %v2296, %v2300
      %v2303 = vshll.u32 %v2136, 16
      %v2305 = vrot.slane %v2303, 1
      %v2306 = vsel %vm1625, %v2301, %v2305
      %v2308 = vshrl.u32 %v2057, 16
      %v2310 = vshll.u32 %v2057, 16
      %v2312 = vrot.slane %v2310, 1
      %v2313 = vor.u32 %v2308, %v2312
      %v2315 = vshll.u32 %v2137, 16
      %v2317 = vrot.slane %v2315, 1
      %v2318 = vsel %vm1625, %v2313, %v2317
      %v2320 = vshrl.u32 %v2058, 16
      %v2322 = vshll.u32 %v2058, 16
      %v2324 = vrot.slane %v2322, 1
      %v2325 = vor.u32 %v2320, %v2324
      %v2327 = vshll.u32 %v2138, 16
      %v2329 = vrot.slane %v2327, 1
      %v2330 = vsel %vm1625, %v2325, %v2329
      %2331 = vrot.lane.b32.xlu0 %v2150, 64
      %v2332 = vpop.permute.xlu0 %2331
      %2333 = vrot.lane.b32.xlu0 %v2162, 64
      %v2334 = vpop.permute.xlu0 %2333
      %2335 = vrot.lane.b32.xlu0 %v2174, 64
      %v2336 = vpop.permute.xlu0 %2335
      %2337 = vrot.lane.b32.xlu0 %v2186, 64
      %v2338 = vpop.permute.xlu0 %2337
      %2339 = vrot.lane.b32.xlu0 %v2198, 64
      %v2340 = vpop.permute.xlu0 %2339
      %2341 = vrot.lane.b32.xlu0 %v2210, 64
      %v2342 = vpop.permute.xlu0 %2341
      %2343 = vrot.lane.b32.xlu0 %v2222, 64
      %v2344 = vpop.permute.xlu0 %2343
      %2345 = vrot.lane.b32.xlu0 %v2234, 64
      %v2346 = vpop.permute.xlu0 %2345
      %2347 = vrot.lane.b32.xlu0 %v2246, 64
      %v2348 = vpop.permute.xlu0 %2347
      %2349 = vrot.lane.b32.xlu0 %v2258, 64
      %v2350 = vpop.permute.xlu0 %2349
      %2351 = vrot.lane.b32.xlu0 %v2270, 64
      %v2352 = vpop.permute.xlu0 %2351
      %2353 = vrot.lane.b32.xlu0 %v2282, 64
      %v2354 = vpop.permute.xlu0 %2353
      %2355 = vrot.lane.b32.xlu0 %v2294, 64
      %v2356 = vpop.permute.xlu0 %2355
      %2357 = vrot.lane.b32.xlu0 %v2306, 64
      %v2358 = vpop.permute.xlu0 %2357
      %2359 = vrot.lane.b32.xlu0 %v2318, 64
      %v2360 = vpop.permute.xlu0 %2359
      %2361 = vrot.lane.b32.xlu0 %v2330, 64
      %v2362 = vpop.permute.xlu0 %2361
      %v2379 = vunpack.c.l.b16 %v1416
      %v2380 = vunpack.c.l.b16 %v1417
      %v2381 = vunpack.c.l.b16 %v1418
      %v2382 = vunpack.c.l.b16 %v1419
      %v2383 = vunpack.c.l.b16 %v1420
      %v2384 = vunpack.c.l.b16 %v1421
      %v2385 = vunpack.c.l.b16 %v1422
      %v2386 = vunpack.c.l.b16 %v1423
      %v2387 = vunpack.c.l.b16 %v1424
      %v2388 = vunpack.c.l.b16 %v1425
      %v2389 = vunpack.c.l.b16 %v1426
      %v2390 = vunpack.c.l.b16 %v1427
      %v2391 = vunpack.c.l.b16 %v1428
      %v2392 = vunpack.c.l.b16 %v1429
      %v2393 = vunpack.c.l.b16 %v1430
      %v2394 = vunpack.c.l.b16 %v1431
      %v2395 = vpack.c.b16 %v2012, %v2379
      %v2396 = vpack.c.b16 %v2014, %v2380
      %v2397 = vpack.c.b16 %v2016, %v2381
      %v2398 = vpack.c.b16 %v2018, %v2382
      %v2399 = vpack.c.b16 %v2020, %v2383
      %v2400 = vpack.c.b16 %v2022, %v2384
      %v2401 = vpack.c.b16 %v2024, %v2385
      %v2402 = vpack.c.b16 %v2026, %v2386
      %v2403 = vpack.c.b16 %v2028, %v2387
      %v2404 = vpack.c.b16 %v2030, %v2388
      %v2405 = vpack.c.b16 %v2032, %v2389
      %v2406 = vpack.c.b16 %v2034, %v2390
      %v2407 = vpack.c.b16 %v2036, %v2391
      %v2408 = vpack.c.b16 %v2038, %v2392
      %v2409 = vpack.c.b16 %v2040, %v2393
      %v2410 = vpack.c.b16 %v2042, %v2394
      %v2411 = vrot.slane %v2395, 1
      %v2412 = vrot.slane %v2123, 1
      %v2413 = vsel %vm1898, %v2411, %v2412
      %v2414 = vrot.slane %v2396, 1
      %v2415 = vrot.slane %v2124, 1
      %v2416 = vsel %vm1898, %v2414, %v2415
      %v2417 = vrot.slane %v2397, 1
      %v2418 = vrot.slane %v2125, 1
      %v2419 = vsel %vm1898, %v2417, %v2418
      %v2420 = vrot.slane %v2398, 1
      %v2421 = vrot.slane %v2126, 1
      %v2422 = vsel %vm1898, %v2420, %v2421
      %v2423 = vrot.slane %v2399, 1
      %v2424 = vrot.slane %v2127, 1
      %v2425 = vsel %vm1898, %v2423, %v2424
      %v2426 = vrot.slane %v2400, 1
      %v2427 = vrot.slane %v2128, 1
      %v2428 = vsel %vm1898, %v2426, %v2427
      %v2429 = vrot.slane %v2401, 1
      %v2430 = vrot.slane %v2129, 1
      %v2431 = vsel %vm1898, %v2429, %v2430
      %v2432 = vrot.slane %v2402, 1
      %v2433 = vrot.slane %v2130, 1
      %v2434 = vsel %vm1898, %v2432, %v2433
      %v2435 = vrot.slane %v2403, 1
      %v2436 = vrot.slane %v2131, 1
      %v2437 = vsel %vm1898, %v2435, %v2436
      %v2438 = vrot.slane %v2404, 1
      %v2439 = vrot.slane %v2132, 1
      %v2440 = vsel %vm1898, %v2438, %v2439
      %v2441 = vrot.slane %v2405, 1
      %v2442 = vrot.slane %v2133, 1
      %v2443 = vsel %vm1898, %v2441, %v2442
      %v2444 = vrot.slane %v2406, 1
      %v2445 = vrot.slane %v2134, 1
      %v2446 = vsel %vm1898, %v2444, %v2445
      %v2447 = vrot.slane %v2407, 1
      %v2448 = vrot.slane %v2135, 1
      %v2449 = vsel %vm1898, %v2447, %v2448
      %v2450 = vrot.slane %v2408, 1
      %v2451 = vrot.slane %v2136, 1
      %v2452 = vsel %vm1898, %v2450, %v2451
      %v2453 = vrot.slane %v2409, 1
      %v2454 = vrot.slane %v2137, 1
      %v2455 = vsel %vm1898, %v2453, %v2454
      %v2456 = vrot.slane %v2410, 1
      %v2457 = vrot.slane %v2138, 1
      %v2458 = vsel %vm1898, %v2456, %v2457
      %2459 = vrot.lane.b32.xlu0 %v2413, 80
      %v2460 = vpop.permute.xlu0 %2459
      %2461 = vrot.lane.b32.xlu0 %v2416, 80
      %v2462 = vpop.permute.xlu0 %2461
      %2463 = vrot.lane.b32.xlu0 %v2419, 80
      %v2464 = vpop.permute.xlu0 %2463
      %2465 = vrot.lane.b32.xlu0 %v2422, 80
      %v2466 = vpop.permute.xlu0 %2465
      %2467 = vrot.lane.b32.xlu0 %v2425, 80
      %v2468 = vpop.permute.xlu0 %2467
      %2469 = vrot.lane.b32.xlu0 %v2428, 80
      %v2470 = vpop.permute.xlu0 %2469
      %2471 = vrot.lane.b32.xlu0 %v2431, 80
      %v2472 = vpop.permute.xlu0 %2471
      %2473 = vrot.lane.b32.xlu0 %v2434, 80
      %v2474 = vpop.permute.xlu0 %2473
      %2475 = vrot.lane.b32.xlu0 %v2437, 80
      %v2476 = vpop.permute.xlu0 %2475
      %2477 = vrot.lane.b32.xlu0 %v2440, 80
      %v2478 = vpop.permute.xlu0 %2477
      %2479 = vrot.lane.b32.xlu0 %v2443, 80
      %v2480 = vpop.permute.xlu0 %2479
      %2481 = vrot.lane.b32.xlu0 %v2446, 80
      %v2482 = vpop.permute.xlu0 %2481
      %2483 = vrot.lane.b32.xlu0 %v2449, 80
      %v2484 = vpop.permute.xlu0 %2483
      %2485 = vrot.lane.b32.xlu0 %v2452, 80
      %v2486 = vpop.permute.xlu0 %2485
      %2487 = vrot.lane.b32.xlu0 %v2455, 80
      %v2488 = vpop.permute.xlu0 %2487
      %2489 = vrot.lane.b32.xlu0 %v2458, 80
      %v2490 = vpop.permute.xlu0 %2489
      %v2523 = vunpack.c.l.b16 %v1433
      %v2524 = vunpack.c.l.b16 %v1434
      %v2525 = vunpack.c.l.b16 %v1435
      %v2526 = vunpack.c.l.b16 %v1436
      %v2527 = vunpack.c.l.b16 %v1437
      %v2528 = vunpack.c.l.b16 %v1438
      %v2529 = vunpack.c.l.b16 %v1439
      %v2530 = vunpack.c.l.b16 %v1440
      %v2531 = vunpack.c.l.b16 %v1441
      %v2532 = vunpack.c.l.b16 %v1442
      %v2533 = vunpack.c.l.b16 %v1443
      %v2534 = vunpack.c.l.b16 %v1444
      %v2535 = vunpack.c.l.b16 %v1445
      %v2536 = vunpack.c.l.b16 %v1446
      %v2537 = vunpack.c.l.b16 %v1447
      %v2538 = vunpack.c.l.b16 %v1448
      %v2539 = vunpack.c.l.b16 %v1449
      %v2540 = vunpack.c.l.b16 %v1450
      %v2541 = vunpack.c.l.b16 %v1451
      %v2542 = vunpack.c.l.b16 %v1452
      %v2543 = vunpack.c.l.b16 %v1453
      %v2544 = vunpack.c.l.b16 %v1454
      %v2545 = vunpack.c.l.b16 %v1455
      %v2546 = vunpack.c.l.b16 %v1456
      %v2547 = vunpack.c.l.b16 %v1457
      %v2548 = vunpack.c.l.b16 %v1458
      %v2549 = vunpack.c.l.b16 %v1459
      %v2550 = vunpack.c.l.b16 %v1460
      %v2551 = vunpack.c.l.b16 %v1461
      %v2552 = vunpack.c.l.b16 %v1462
      %v2553 = vunpack.c.l.b16 %v1463
      %v2554 = vunpack.c.l.b16 %v1464
      %v2555 = vpack.c.b16 %v2524, %v2523
      %v2556 = vpack.c.b16 %v2526, %v2525
      %v2557 = vpack.c.b16 %v2528, %v2527
      %v2558 = vpack.c.b16 %v2530, %v2529
      %v2559 = vpack.c.b16 %v2532, %v2531
      %v2560 = vpack.c.b16 %v2534, %v2533
      %v2561 = vpack.c.b16 %v2536, %v2535
      %v2562 = vpack.c.b16 %v2538, %v2537
      %v2563 = vpack.c.b16 %v2540, %v2539
      %v2564 = vpack.c.b16 %v2542, %v2541
      %v2565 = vpack.c.b16 %v2544, %v2543
      %v2566 = vpack.c.b16 %v2546, %v2545
      %v2567 = vpack.c.b16 %v2548, %v2547
      %v2568 = vpack.c.b16 %v2550, %v2549
      %v2569 = vpack.c.b16 %v2552, %v2551
      %v2570 = vpack.c.b16 %v2554, %v2553
      %2571 = vrot.lane.b32.xlu0 %v2555, 96
      %v2572 = vpop.permute.xlu0 %2571
      %2573 = vrot.lane.b32.xlu0 %v2556, 96
      %v2574 = vpop.permute.xlu0 %2573
      %2575 = vrot.lane.b32.xlu0 %v2557, 96
      %v2576 = vpop.permute.xlu0 %2575
      %2577 = vrot.lane.b32.xlu0 %v2558, 96
      %v2578 = vpop.permute.xlu0 %2577
      %2579 = vrot.lane.b32.xlu0 %v2559, 96
      %v2580 = vpop.permute.xlu0 %2579
      %2581 = vrot.lane.b32.xlu0 %v2560, 96
      %v2582 = vpop.permute.xlu0 %2581
      %2583 = vrot.lane.b32.xlu0 %v2561, 96
      %v2584 = vpop.permute.xlu0 %2583
      %2585 = vrot.lane.b32.xlu0 %v2562, 96
      %v2586 = vpop.permute.xlu0 %2585
      %2587 = vrot.lane.b32.xlu0 %v2563, 96
      %v2588 = vpop.permute.xlu0 %2587
      %2589 = vrot.lane.b32.xlu0 %v2564, 96
      %v2590 = vpop.permute.xlu0 %2589
      %2591 = vrot.lane.b32.xlu0 %v2565, 96
      %v2592 = vpop.permute.xlu0 %2591
      %2593 = vrot.lane.b32.xlu0 %v2566, 96
      %v2594 = vpop.permute.xlu0 %2593
      %2595 = vrot.lane.b32.xlu0 %v2567, 96
      %v2596 = vpop.permute.xlu0 %2595
      %2597 = vrot.lane.b32.xlu0 %v2568, 96
      %v2598 = vpop.permute.xlu0 %2597
      %2599 = vrot.lane.b32.xlu0 %v2569, 96
      %v2600 = vpop.permute.xlu0 %2599
      %2601 = vrot.lane.b32.xlu0 %v2570, 96
      %v2602 = vpop.permute.xlu0 %2601
      %v2619 = vunpack.c.l.b16 %v1465
      %v2620 = vunpack.c.l.b16 %v1466
      %v2621 = vunpack.c.l.b16 %v1467
      %v2622 = vunpack.c.l.b16 %v1468
      %v2623 = vunpack.c.l.b16 %v1469
      %v2624 = vunpack.c.l.b16 %v1470
      %v2625 = vunpack.c.l.b16 %v1471
      %v2626 = vunpack.c.l.b16 %v1472
      %v2627 = vunpack.c.l.b16 %v1473
      %v2628 = vunpack.c.l.b16 %v1474
      %v2629 = vunpack.c.l.b16 %v1475
      %v2630 = vunpack.c.l.b16 %v1476
      %v2631 = vunpack.c.l.b16 %v1477
      %v2632 = vunpack.c.l.b16 %v1478
      %v2633 = vunpack.c.l.b16 %v1479
      %v2634 = vunpack.c.l.b16 %v1480
      %v2635 = vpack.c.b16 %v2619, %v2619
      %v2636 = vpack.c.b16 %v2620, %v2620
      %v2637 = vpack.c.b16 %v2621, %v2621
      %v2638 = vpack.c.b16 %v2622, %v2622
      %v2639 = vpack.c.b16 %v2623, %v2623
      %v2640 = vpack.c.b16 %v2624, %v2624
      %v2641 = vpack.c.b16 %v2625, %v2625
      %v2642 = vpack.c.b16 %v2626, %v2626
      %v2643 = vpack.c.b16 %v2627, %v2627
      %v2644 = vpack.c.b16 %v2628, %v2628
      %v2645 = vpack.c.b16 %v2629, %v2629
      %v2646 = vpack.c.b16 %v2630, %v2630
      %v2647 = vpack.c.b16 %v2631, %v2631
      %v2648 = vpack.c.b16 %v2632, %v2632
      %v2649 = vpack.c.b16 %v2633, %v2633
      %v2650 = vpack.c.b16 %v2634, %v2634
      %v2652 = vshrl.u32 %v2555, 16
      %v2654 = vshll.u32 %v2555, 16
      %v2656 = vrot.slane %v2654, 1
      %v2657 = vor.u32 %v2652, %v2656
      %v2659 = vshll.u32 %v2635, 16
      %v2661 = vrot.slane %v2659, 1
      %v2662 = vsel %vm1625, %v2657, %v2661
      %v2664 = vshrl.u32 %v2556, 16
      %v2666 = vshll.u32 %v2556, 16
      %v2668 = vrot.slane %v2666, 1
      %v2669 = vor.u32 %v2664, %v2668
      %v2671 = vshll.u32 %v2636, 16
      %v2673 = vrot.slane %v2671, 1
      %v2674 = vsel %vm1625, %v2669, %v2673
      %v2676 = vshrl.u32 %v2557, 16
      %v2678 = vshll.u32 %v2557, 16
      %v2680 = vrot.slane %v2678, 1
      %v2681 = vor.u32 %v2676, %v2680
      %v2683 = vshll.u32 %v2637, 16
      %v2685 = vrot.slane %v2683, 1
      %v2686 = vsel %vm1625, %v2681, %v2685
      %v2688 = vshrl.u32 %v2558, 16
      %v2690 = vshll.u32 %v2558, 16
      %v2692 = vrot.slane %v2690, 1
      %v2693 = vor.u32 %v2688, %v2692
      %v2695 = vshll.u32 %v2638, 16
      %v2697 = vrot.slane %v2695, 1
      %v2698 = vsel %vm1625, %v2693, %v2697
      %v2700 = vshrl.u32 %v2559, 16
      %v2702 = vshll.u32 %v2559, 16
      %v2704 = vrot.slane %v2702, 1
      %v2705 = vor.u32 %v2700, %v2704
      %v2707 = vshll.u32 %v2639, 16
      %v2709 = vrot.slane %v2707, 1
      %v2710 = vsel %vm1625, %v2705, %v2709
      %v2712 = vshrl.u32 %v2560, 16
      %v2714 = vshll.u32 %v2560, 16
      %v2716 = vrot.slane %v2714, 1
      %v2717 = vor.u32 %v2712, %v2716
      %v2719 = vshll.u32 %v2640, 16
      %v2721 = vrot.slane %v2719, 1
      %v2722 = vsel %vm1625, %v2717, %v2721
      %v2724 = vshrl.u32 %v2561, 16
      %v2726 = vshll.u32 %v2561, 16
      %v2728 = vrot.slane %v2726, 1
      %v2729 = vor.u32 %v2724, %v2728
      %v2731 = vshll.u32 %v2641, 16
      %v2733 = vrot.slane %v2731, 1
      %v2734 = vsel %vm1625, %v2729, %v2733
      %v2736 = vshrl.u32 %v2562, 16
      %v2738 = vshll.u32 %v2562, 16
      %v2740 = vrot.slane %v2738, 1
      %v2741 = vor.u32 %v2736, %v2740
      %v2743 = vshll.u32 %v2642, 16
      %v2745 = vrot.slane %v2743, 1
      %v2746 = vsel %vm1625, %v2741, %v2745
      %v2748 = vshrl.u32 %v2563, 16
      %v2750 = vshll.u32 %v2563, 16
      %v2752 = vrot.slane %v2750, 1
      %v2753 = vor.u32 %v2748, %v2752
      %v2755 = vshll.u32 %v2643, 16
      %v2757 = vrot.slane %v2755, 1
      %v2758 = vsel %vm1625, %v2753, %v2757
      %v2760 = vshrl.u32 %v2564, 16
      %v2762 = vshll.u32 %v2564, 16
      %v2764 = vrot.slane %v2762, 1
      %v2765 = vor.u32 %v2760, %v2764
      %v2767 = vshll.u32 %v2644, 16
      %v2769 = vrot.slane %v2767, 1
      %v2770 = vsel %vm1625, %v2765, %v2769
      %v2772 = vshrl.u32 %v2565, 16
      %v2774 = vshll.u32 %v2565, 16
      %v2776 = vrot.slane %v2774, 1
      %v2777 = vor.u32 %v2772, %v2776
      %v2779 = vshll.u32 %v2645, 16
      %v2781 = vrot.slane %v2779, 1
      %v2782 = vsel %vm1625, %v2777, %v2781
      %v2784 = vshrl.u32 %v2566, 16
      %v2786 = vshll.u32 %v2566, 16
      %v2788 = vrot.slane %v2786, 1
      %v2789 = vor.u32 %v2784, %v2788
      %v2791 = vshll.u32 %v2646, 16
      %v2793 = vrot.slane %v2791, 1
      %v2794 = vsel %vm1625, %v2789, %v2793
      %v2796 = vshrl.u32 %v2567, 16
      %v2798 = vshll.u32 %v2567, 16
      %v2800 = vrot.slane %v2798, 1
      %v2801 = vor.u32 %v2796, %v2800
      %v2803 = vshll.u32 %v2647, 16
      %v2805 = vrot.slane %v2803, 1
      %v2806 = vsel %vm1625, %v2801, %v2805
      %v2808 = vshrl.u32 %v2568, 16
      %v2810 = vshll.u32 %v2568, 16
      %v2812 = vrot.slane %v2810, 1
      %v2813 = vor.u32 %v2808, %v2812
      %v2815 = vshll.u32 %v2648, 16
      %v2817 = vrot.slane %v2815, 1
      %v2818 = vsel %vm1625, %v2813, %v2817
      %v2820 = vshrl.u32 %v2569, 16
      %v2822 = vshll.u32 %v2569, 16
      %v2824 = vrot.slane %v2822, 1
      %v2825 = vor.u32 %v2820, %v2824
      %v2827 = vshll.u32 %v2649, 16
      %v2829 = vrot.slane %v2827, 1
      %v2830 = vsel %vm1625, %v2825, %v2829
      %v2832 = vshrl.u32 %v2570, 16
      %v2834 = vshll.u32 %v2570, 16
      %v2836 = vrot.slane %v2834, 1
      %v2837 = vor.u32 %v2832, %v2836
      %v2839 = vshll.u32 %v2650, 16
      %v2841 = vrot.slane %v2839, 1
      %v2842 = vsel %vm1625, %v2837, %v2841
      %2843 = vrot.lane.b32.xlu0 %v2662, 112
      %v2844 = vpop.permute.xlu0 %2843
      %2845 = vrot.lane.b32.xlu0 %v2674, 112
      %v2846 = vpop.permute.xlu0 %2845
      %2847 = vrot.lane.b32.xlu0 %v2686, 112
      %v2848 = vpop.permute.xlu0 %2847
      %2849 = vrot.lane.b32.xlu0 %v2698, 112
      %v2850 = vpop.permute.xlu0 %2849
      %2851 = vrot.lane.b32.xlu0 %v2710, 112
      %v2852 = vpop.permute.xlu0 %2851
      %2853 = vrot.lane.b32.xlu0 %v2722, 112
      %v2854 = vpop.permute.xlu0 %2853
      %2855 = vrot.lane.b32.xlu0 %v2734, 112
      %v2856 = vpop.permute.xlu0 %2855
      %2857 = vrot.lane.b32.xlu0 %v2746, 112
      %v2858 = vpop.permute.xlu0 %2857
      %2859 = vrot.lane.b32.xlu0 %v2758, 112
      %v2860 = vpop.permute.xlu0 %2859
      %2861 = vrot.lane.b32.xlu0 %v2770, 112
      %v2862 = vpop.permute.xlu0 %2861
      %2863 = vrot.lane.b32.xlu0 %v2782, 112
      %v2864 = vpop.permute.xlu0 %2863
      %2865 = vrot.lane.b32.xlu0 %v2794, 112
      %v2866 = vpop.permute.xlu0 %2865
      %2867 = vrot.lane.b32.xlu0 %v2806, 112
      %v2868 = vpop.permute.xlu0 %2867
      %2869 = vrot.lane.b32.xlu0 %v2818, 112
      %v2870 = vpop.permute.xlu0 %2869
      %2871 = vrot.lane.b32.xlu0 %v2830, 112
      %v2872 = vpop.permute.xlu0 %2871
      %2873 = vrot.lane.b32.xlu0 %v2842, 112
      %v2874 = vpop.permute.xlu0 %2873
      %v2891 = vunpack.c.l.b16 %v1481
      %v2892 = vunpack.c.l.b16 %v1482
      %v2893 = vunpack.c.l.b16 %v1483
      %v2894 = vunpack.c.l.b16 %v1484
      %v2895 = vunpack.c.l.b16 %v1485
      %v2896 = vunpack.c.l.b16 %v1486
      %v2897 = vunpack.c.l.b16 %v1487
      %v2898 = vunpack.c.l.b16 %v1488
      %v2899 = vunpack.c.l.b16 %v1489
      %v2900 = vunpack.c.l.b16 %v1490
      %v2901 = vunpack.c.l.b16 %v1491
      %v2902 = vunpack.c.l.b16 %v1492
      %v2903 = vunpack.c.l.b16 %v1493
      %v2904 = vunpack.c.l.b16 %v1494
      %v2905 = vunpack.c.l.b16 %v1495
      %v2906 = vunpack.c.l.b16 %v1496
      %v2907 = vpack.c.b16 %v2524, %v2891
      %v2908 = vpack.c.b16 %v2526, %v2892
      %v2909 = vpack.c.b16 %v2528, %v2893
      %v2910 = vpack.c.b16 %v2530, %v2894
      %v2911 = vpack.c.b16 %v2532, %v2895
      %v2912 = vpack.c.b16 %v2534, %v2896
      %v2913 = vpack.c.b16 %v2536, %v2897
      %v2914 = vpack.c.b16 %v2538, %v2898
      %v2915 = vpack.c.b16 %v2540, %v2899
      %v2916 = vpack.c.b16 %v2542, %v2900
      %v2917 = vpack.c.b16 %v2544, %v2901
      %v2918 = vpack.c.b16 %v2546, %v2902
      %v2919 = vpack.c.b16 %v2548, %v2903
      %v2920 = vpack.c.b16 %v2550, %v2904
      %v2921 = vpack.c.b16 %v2552, %v2905
      %v2922 = vpack.c.b16 %v2554, %v2906
      %v2923 = vrot.slane %v2907, 1
      %v2924 = vrot.slane %v2635, 1
      %v2925 = vsel %vm1898, %v2923, %v2924
      %v2926 = vrot.slane %v2908, 1
      %v2927 = vrot.slane %v2636, 1
      %v2928 = vsel %vm1898, %v2926, %v2927
      %v2929 = vrot.slane %v2909, 1
      %v2930 = vrot.slane %v2637, 1
      %v2931 = vsel %vm1898, %v2929, %v2930
      %v2932 = vrot.slane %v2910, 1
      %v2933 = vrot.slane %v2638, 1
      %v2934 = vsel %vm1898, %v2932, %v2933
      %v2935 = vrot.slane %v2911, 1
      %v2936 = vrot.slane %v2639, 1
      %v2937 = vsel %vm1898, %v2935, %v2936
      %v2938 = vrot.slane %v2912, 1
      %v2939 = vrot.slane %v2640, 1
      %v2940 = vsel %vm1898, %v2938, %v2939
      %v2941 = vrot.slane %v2913, 1
      %v2942 = vrot.slane %v2641, 1
      %v2943 = vsel %vm1898, %v2941, %v2942
      %v2944 = vrot.slane %v2914, 1
      %v2945 = vrot.slane %v2642, 1
      %v2946 = vsel %vm1898, %v2944, %v2945
      %v2947 = vrot.slane %v2915, 1
      %v2948 = vrot.slane %v2643, 1
      %v2949 = vsel %vm1898, %v2947, %v2948
      %v2950 = vrot.slane %v2916, 1
      %v2951 = vrot.slane %v2644, 1
      %v2952 = vsel %vm1898, %v2950, %v2951
      %v2953 = vrot.slane %v2917, 1
      %v2954 = vrot.slane %v2645, 1
      %v2955 = vsel %vm1898, %v2953, %v2954
      %v2956 = vrot.slane %v2918, 1
      %v2957 = vrot.slane %v2646, 1
      %v2958 = vsel %vm1898, %v2956, %v2957
      %v2959 = vrot.slane %v2919, 1
      %v2960 = vrot.slane %v2647, 1
      %v2961 = vsel %vm1898, %v2959, %v2960
      %v2962 = vrot.slane %v2920, 1
      %v2963 = vrot.slane %v2648, 1
      %v2964 = vsel %vm1898, %v2962, %v2963
      %v2965 = vrot.slane %v2921, 1
      %v2966 = vrot.slane %v2649, 1
      %v2967 = vsel %vm1898, %v2965, %v2966
      %v2968 = vrot.slane %v2922, 1
      %v2969 = vrot.slane %v2650, 1
      %v2970 = vsel %vm1898, %v2968, %v2969
      %v2972 = vsel %vm355, %v1561, %v1819
      %v2974 = vsel %vm355, %v1562, %v1821
      %v2976 = vsel %vm355, %v1563, %v1823
      %v2978 = vsel %vm355, %v1564, %v1825
      %v2980 = vsel %vm355, %v1565, %v1827
      %v2982 = vsel %vm355, %v1566, %v1829
      %v2984 = vsel %vm355, %v1567, %v1831
      %v2986 = vsel %vm355, %v1568, %v1833
      %v2988 = vsel %vm355, %v1569, %v1835
      %v2990 = vsel %vm355, %v1570, %v1837
      %v2992 = vsel %vm355, %v1571, %v1839
      %v2994 = vsel %vm355, %v1572, %v1841
      %v2996 = vsel %vm355, %v1573, %v1843
      %v2998 = vsel %vm355, %v1574, %v1845
      %v3000 = vsel %vm355, %v1575, %v1847
      %v3002 = vsel %vm355, %v1576, %v1849
      %vm3003 = vcmask 261120
      %v3005 = vsel %vm3003, %v2972, %v1948
      %v3007 = vsel %vm3003, %v2974, %v1950
      %v3009 = vsel %vm3003, %v2976, %v1952
      %v3011 = vsel %vm3003, %v2978, %v1954
      %v3013 = vsel %vm3003, %v2980, %v1956
      %v3015 = vsel %vm3003, %v2982, %v1958
      %v3017 = vsel %vm3003, %v2984, %v1960
      %v3019 = vsel %vm3003, %v2986, %v1962
      %v3021 = vsel %vm3003, %v2988, %v1964
      %v3023 = vsel %vm3003, %v2990, %v1966
      %v3025 = vsel %vm3003, %v2992, %v1968
      %v3027 = vsel %vm3003, %v2994, %v1970
      %v3029 = vsel %vm3003, %v2996, %v1972
      %v3031 = vsel %vm3003, %v2998, %v1974
      %v3033 = vsel %vm3003, %v3000, %v1976
      %v3035 = vsel %vm3003, %v3002, %v1978
      %vm3036 = vcmask 392192
      %v3038 = vsel %vm3036, %v3005, %v2060
      %v3040 = vsel %vm3036, %v3007, %v2062
      %v3042 = vsel %vm3036, %v3009, %v2064
      %v3044 = vsel %vm3036, %v3011, %v2066
      %v3046 = vsel %vm3036, %v3013, %v2068
      %v3048 = vsel %vm3036, %v3015, %v2070
      %v3050 = vsel %vm3036, %v3017, %v2072
      %v3052 = vsel %vm3036, %v3019, %v2074
      %v3054 = vsel %vm3036, %v3021, %v2076
      %v3056 = vsel %vm3036, %v3023, %v2078
      %v3058 = vsel %vm3036, %v3025, %v2080
      %v3060 = vsel %vm3036, %v3027, %v2082
      %v3062 = vsel %vm3036, %v3029, %v2084
      %v3064 = vsel %vm3036, %v3031, %v2086
      %v3066 = vsel %vm3036, %v3033, %v2088
      %v3068 = vsel %vm3036, %v3035, %v2090
      %vm3069 = vcmask 523264
      %v3071 = vsel %vm3069, %v3038, %v2332
      %v3073 = vsel %vm3069, %v3040, %v2334
      %v3075 = vsel %vm3069, %v3042, %v2336
      %v3077 = vsel %vm3069, %v3044, %v2338
      %v3079 = vsel %vm3069, %v3046, %v2340
      %v3081 = vsel %vm3069, %v3048, %v2342
      %v3083 = vsel %vm3069, %v3050, %v2344
      %v3085 = vsel %vm3069, %v3052, %v2346
      %v3087 = vsel %vm3069, %v3054, %v2348
      %v3089 = vsel %vm3069, %v3056, %v2350
      %v3091 = vsel %vm3069, %v3058, %v2352
      %v3093 = vsel %vm3069, %v3060, %v2354
      %v3095 = vsel %vm3069, %v3062, %v2356
      %v3097 = vsel %vm3069, %v3064, %v2358
      %v3099 = vsel %vm3069, %v3066, %v2360
      %v3101 = vsel %vm3069, %v3068, %v2362
      %vm3102 = vcmask 654336
      %v3104 = vsel %vm3102, %v3071, %v2460
      %v3106 = vsel %vm3102, %v3073, %v2462
      %v3108 = vsel %vm3102, %v3075, %v2464
      %v3110 = vsel %vm3102, %v3077, %v2466
      %v3112 = vsel %vm3102, %v3079, %v2468
      %v3114 = vsel %vm3102, %v3081, %v2470
      %v3116 = vsel %vm3102, %v3083, %v2472
      %v3118 = vsel %vm3102, %v3085, %v2474
      %v3120 = vsel %vm3102, %v3087, %v2476
      %v3122 = vsel %vm3102, %v3089, %v2478
      %v3124 = vsel %vm3102, %v3091, %v2480
      %v3126 = vsel %vm3102, %v3093, %v2482
      %v3128 = vsel %vm3102, %v3095, %v2484
      %v3130 = vsel %vm3102, %v3097, %v2486
      %v3132 = vsel %vm3102, %v3099, %v2488
      %v3134 = vsel %vm3102, %v3101, %v2490
      %vm3135 = vcmask 785408
      %v3137 = vsel %vm3135, %v3104, %v2572
      %v3139 = vsel %vm3135, %v3106, %v2574
      %v3141 = vsel %vm3135, %v3108, %v2576
      %v3143 = vsel %vm3135, %v3110, %v2578
      %v3145 = vsel %vm3135, %v3112, %v2580
      %v3147 = vsel %vm3135, %v3114, %v2582
      %v3149 = vsel %vm3135, %v3116, %v2584
      %v3151 = vsel %vm3135, %v3118, %v2586
      %v3153 = vsel %vm3135, %v3120, %v2588
      %v3155 = vsel %vm3135, %v3122, %v2590
      %v3157 = vsel %vm3135, %v3124, %v2592
      %v3159 = vsel %vm3135, %v3126, %v2594
      %v3161 = vsel %vm3135, %v3128, %v2596
      %v3163 = vsel %vm3135, %v3130, %v2598
      %v3165 = vsel %vm3135, %v3132, %v2600
      %v3167 = vsel %vm3135, %v3134, %v2602
      %vm3168 = vcmask 916480
      %v3170 = vsel %vm3168, %v3137, %v2844
      %v3173 = vsel %vm3168, %v3139, %v2846
      %v3176 = vsel %vm3168, %v3141, %v2848
      %v3179 = vsel %vm3168, %v3143, %v2850
      %v3182 = vsel %vm3168, %v3145, %v2852
      %v3185 = vsel %vm3168, %v3147, %v2854
      %v3188 = vsel %vm3168, %v3149, %v2856
      %v3191 = vsel %vm3168, %v3151, %v2858
      %v3194 = vsel %vm3168, %v3153, %v2860
      %v3197 = vsel %vm3168, %v3155, %v2862
      %v3200 = vsel %vm3168, %v3157, %v2864
      %v3203 = vsel %vm3168, %v3159, %v2866
      %v3206 = vsel %vm3168, %v3161, %v2868
      %v3209 = vsel %vm3168, %v3163, %v2870
      %v3212 = vsel %vm3168, %v3165, %v2872
      %v3215 = vsel %vm3168, %v3167, %v2874
      %v3217 = vld [vmem:[%s5] sm:$0xf]
      %v3218 = vld [vmem:[%s5 + $0x4] sm:$0xf]
      %v3219 = vld [vmem:[%s5 + $0x8] sm:$0xf]
      %v3220 = vld [vmem:[%s5 + $0xc] sm:$0xf]
      %v3221 = vld [vmem:[%s5 + $0x10] sm:$0xf]
      %v3222 = vld [vmem:[%s5 + $0x14] sm:$0xf]
      %v3223 = vld [vmem:[%s5 + $0x18] sm:$0xf]
      %v3224 = vld [vmem:[%s5 + $0x1c] sm:$0xf]
      %v3225 = vld [vmem:[%s5 + $0x20] sm:$0xf]
      %v3226 = vld [vmem:[%s5 + $0x24] sm:$0xf]
      %v3227 = vld [vmem:[%s5 + $0x28] sm:$0xf]
      %v3228 = vld [vmem:[%s5 + $0x2c] sm:$0xf]
      %v3229 = vld [vmem:[%s5 + $0x30] sm:$0xf]
      %v3230 = vld [vmem:[%s5 + $0x34] sm:$0xf]
      %v3231 = vld [vmem:[%s5 + $0x38] sm:$0xf]
      %v3232 = vld [vmem:[%s5 + $0x3c] sm:$0xf]
      %v3233 = vld [vmem:[%s5 + $0x40] sm:$0xf]
      %v3234 = vld [vmem:[%s5 + $0x44] sm:$0xf]
      %v3253 = vunpack.c.l.b16 %v3217
      %v3254 = vunpack.c.l.b16 %v3218
      %v3255 = vunpack.c.l.b16 %v3219
      %v3256 = vunpack.c.l.b16 %v3220
      %v3257 = vunpack.c.l.b16 %v3221
      %v3258 = vunpack.c.l.b16 %v3222
      %v3259 = vunpack.c.l.b16 %v3223
      %v3260 = vunpack.c.l.b16 %v3224
      %v3261 = vunpack.c.l.b16 %v3225
      %v3262 = vunpack.c.l.b16 %v3226
      %v3263 = vunpack.c.l.b16 %v3227
      %v3264 = vunpack.c.l.b16 %v3228
      %v3265 = vunpack.c.l.b16 %v3229
      %v3266 = vunpack.c.l.b16 %v3230
      %v3267 = vunpack.c.l.b16 %v3231
      %v3268 = vunpack.c.l.b16 %v3232
      %v3269 = vunpack.c.l.b16 %v3233
      %v3270 = vunpack.c.l.b16 %v3234
      %v3271 = vpack.c.b16 %v3254, %v3253
      %v3272 = vpack.c.b16 %v3256, %v3255
      %v3273 = vpack.c.b16 %v3258, %v3257
      %v3274 = vpack.c.b16 %v3260, %v3259
      %v3275 = vpack.c.b16 %v3262, %v3261
      %v3276 = vpack.c.b16 %v3264, %v3263
      %v3277 = vpack.c.b16 %v3266, %v3265
      %v3278 = vpack.c.b16 %v3268, %v3267
      %v3279 = vpack.c.b16 %v3270, %v3269
      %v3290 = vsel %vm355, %v2925, 0
      %v3293 = vsel %vm355, %v2928, 0
      %v3296 = vsel %vm355, %v2931, 0
      %v3299 = vsel %vm355, %v2934, 0
      %v3302 = vsel %vm355, %v2937, 0
      %v3305 = vsel %vm355, %v2940, 0
      %v3308 = vsel %vm355, %v2943, 0
      %v3311 = vsel %vm355, %v2946, 0
      %v3314 = vsel %vm355, %v2949, 0
      %v3317 = vsel %vm355, %v2952, 0
      %v3320 = vsel %vm355, %v2955, 0
      %v3323 = vsel %vm355, %v2958, 0
      %v3326 = vsel %vm355, %v2961, 0
      %v3329 = vsel %vm355, %v2964, 0
      %v3332 = vsel %vm355, %v2967, 0
      %v3335 = vsel %vm355, %v2970, 0
      %3337 = vmatprep.subr.bf16.mxu0 0
      %3338 = vmatpush1.bf16.msra.mxu0 %v3271
      %3339 = vmatprep.subr.bf16.mxu0 0
      %3340 = vmatpush1.bf16.msra.mxu0 %v3272
      %3341 = vmatprep.subr.bf16.mxu0 0
      %3342 = vmatpush1.bf16.msra.mxu0 %v3273
      %3343 = vmatprep.subr.bf16.mxu0 0
      %3344 = vmatpush1.bf16.msra.mxu0 %v3274
      %3345 = vmatprep.subr.bf16.mxu0 0
      %3346 = vmatpush1.bf16.msra.mxu0 %v3275
      %3347 = vmatprep.subr.bf16.mxu0 0
      %3348 = vmatpush1.bf16.msra.mxu0 %v3276
      %3349 = vmatprep.subr.bf16.mxu0 0
      %3350 = vmatpush1.bf16.msra.mxu0 %v3277
      %3351 = vmatprep.subr.bf16.mxu0 0
      %3352 = vmatpush1.bf16.msra.mxu0 %v3278
      %3353 = vmatprep.subr.bf16.mxu0 0
      %3354 = vmatpush1.bf16.msra.mxu0 %v3279
      %3355 = vmatprep.subr.bf16.mxu0 0
      %3356 = vmatpush1.bf16.msra.mxu0 0
      %3357 = vmatprep.subr.bf16.mxu0 0
      %3358 = vmatpush1.bf16.msra.mxu0 0
      %3359 = vmatprep.subr.bf16.mxu0 0
      %3360 = vmatpush1.bf16.msra.mxu0 0
      %3361 = vmatprep.subr.bf16.mxu0 0
      %3362 = vmatpush1.bf16.msra.mxu0 0
      %3363 = vmatprep.subr.bf16.mxu0 0
      %3364 = vmatpush1.bf16.msra.mxu0 0
      %3365 = vmatprep.subr.bf16.mxu0 0
      %3366 = vmatpush1.bf16.msra.mxu0 0
      %3367 = vmatprep.subr.bf16.mxu0 0
      %3368 = vmatpush1.bf16.msra.mxu0 0
      %3369 = vmatprep.mubr.bf16.mxu0 %v3290
      %3370 = vmatmul.mubr.bf16.gmra.mrb[0].mxu0 %v3170
      %v3371 = vpop.f32.mrb[0].mxu0
      %v3372 = vadd.f32 0.0, %v3371
      %v3373 = vpop.f32.mrb[0].mxu0
      %v3374 = vpop.f32.mrb[0].mxu0
      %v3375 = vadd.f32 0.0, %v3374
      %v3376 = vpop.f32.mrb[0].mxu0
      %3377 = vmatprep.mubr.bf16.mxu0 %v3293
      %3378 = vmatmul.mubr.bf16.gmra.mrb[0].mxu0 %v3173
      %v3379 = vpop.f32.mrb[0].mxu0
      %v3380 = vadd.f32 0.0, %v3379
      %v3381 = vpop.f32.mrb[0].mxu0
      %v3382 = vpop.f32.mrb[0].mxu0
      %v3383 = vadd.f32 0.0, %v3382
      %v3384 = vpop.f32.mrb[0].mxu0
      %3385 = vmatprep.mubr.bf16.mxu0 %v3296
      %3386 = vmatmul.mubr.bf16.gmra.mrb[0].mxu0 %v3176
      %v3387 = vpop.f32.mrb[0].mxu0
      %v3388 = vadd.f32 0.0, %v3387
      %v3389 = vpop.f32.mrb[0].mxu0
      %v3390 = vpop.f32.mrb[0].mxu0
      %v3391 = vadd.f32 0.0, %v3390
      %v3392 = vpop.f32.mrb[0].mxu0
      %3393 = vmatprep.mubr.bf16.mxu0 %v3299
      %3394 = vmatmul.mubr.bf16.gmra.mrb[0].mxu0 %v3179
      %v3395 = vpop.f32.mrb[0].mxu0
      %v3396 = vadd.f32 0.0, %v3395
      %v3397 = vpop.f32.mrb[0].mxu0
      %v3398 = vpop.f32.mrb[0].mxu0
      %v3399 = vadd.f32 0.0, %v3398
      %v3400 = vpop.f32.mrb[0].mxu0
      %3401 = vmatprep.mubr.bf16.mxu0 %v3302
      %3402 = vmatmul.mubr.bf16.gmra.mrb[0].mxu0 %v3182
      %v3403 = vpop.f32.mrb[0].mxu0
      %v3404 = vadd.f32 0.0, %v3403
      %v3405 = vpop.f32.mrb[0].mxu0
      %v3406 = vpop.f32.mrb[0].mxu0
      %v3407 = vadd.f32 0.0, %v3406
      %v3408 = vpop.f32.mrb[0].mxu0
      %3409 = vmatprep.mubr.bf16.mxu0 %v3305
      %3410 = vmatmul.mubr.bf16.gmra.mrb[0].mxu0 %v3185
      %v3411 = vpop.f32.mrb[0].mxu0
      %v3412 = vadd.f32 0.0, %v3411
      %v3413 = vpop.f32.mrb[0].mxu0
      %v3414 = vpop.f32.mrb[0].mxu0
      %v3415 = vadd.f32 0.0, %v3414
      %v3416 = vpop.f32.mrb[0].mxu0
      %3417 = vmatprep.mubr.bf16.mxu0 %v3308
      %3418 = vmatmul.mubr.bf16.gmra.mrb[0].mxu0 %v3188
      %v3419 = vpop.f32.mrb[0].mxu0
      %v3420 = vadd.f32 0.0, %v3419
      %v3421 = vpop.f32.mrb[0].mxu0
      %v3422 = vpop.f32.mrb[0].mxu0
      %v3423 = vadd.f32 0.0, %v3422
      %v3424 = vpop.f32.mrb[0].mxu0
      %3425 = vmatprep.mubr.bf16.mxu0 %v3311
      %3426 = vmatmul.mubr.bf16.gmra.mrb[0].mxu0 %v3191
      %v3427 = vpop.f32.mrb[0].mxu0
      %v3428 = vadd.f32 0.0, %v3427
      %v3429 = vpop.f32.mrb[0].mxu0
      %v3430 = vpop.f32.mrb[0].mxu0
      %v3431 = vadd.f32 0.0, %v3430
      %v3432 = vpop.f32.mrb[0].mxu0
      %3433 = vmatprep.mubr.bf16.mxu0 %v3314
      %3434 = vmatmul.mubr.bf16.gmra.mrb[0].mxu0 %v3194
      %v3435 = vpop.f32.mrb[0].mxu0
      %v3436 = vadd.f32 0.0, %v3435
      %v3437 = vpop.f32.mrb[0].mxu0
      %v3438 = vpop.f32.mrb[0].mxu0
      %v3439 = vadd.f32 0.0, %v3438
      %v3440 = vpop.f32.mrb[0].mxu0
      %3441 = vmatprep.mubr.bf16.mxu0 %v3317
      %3442 = vmatmul.mubr.bf16.gmra.mrb[0].mxu0 %v3197
      %v3443 = vpop.f32.mrb[0].mxu0
      %v3444 = vadd.f32 0.0, %v3443
      %v3445 = vpop.f32.mrb[0].mxu0
      %v3446 = vpop.f32.mrb[0].mxu0
      %v3447 = vadd.f32 0.0, %v3446
      %v3448 = vpop.f32.mrb[0].mxu0
      %3449 = vmatprep.mubr.bf16.mxu0 %v3320
      %3450 = vmatmul.mubr.bf16.gmra.mrb[0].mxu0 %v3200
      %v3451 = vpop.f32.mrb[0].mxu0
      %v3452 = vadd.f32 0.0, %v3451
      %v3453 = vpop.f32.mrb[0].mxu0
      %v3454 = vpop.f32.mrb[0].mxu0
      %v3455 = vadd.f32 0.0, %v3454
      %v3456 = vpop.f32.mrb[0].mxu0
      %3457 = vmatprep.mubr.bf16.mxu0 %v3323
      %3458 = vmatmul.mubr.bf16.gmra.mrb[0].mxu0 %v3203
      %v3459 = vpop.f32.mrb[0].mxu0
      %v3460 = vadd.f32 0.0, %v3459
      %v3461 = vpop.f32.mrb[0].mxu0
      %v3462 = vpop.f32.mrb[0].mxu0
      %v3463 = vadd.f32 0.0, %v3462
      %v3464 = vpop.f32.mrb[0].mxu0
      %3465 = vmatprep.mubr.bf16.mxu0 %v3326
      %3466 = vmatmul.mubr.bf16.gmra.mrb[0].mxu0 %v3206
      %v3467 = vpop.f32.mrb[0].mxu0
      %v3468 = vadd.f32 0.0, %v3467
      %v3469 = vpop.f32.mrb[0].mxu0
      %v3470 = vpop.f32.mrb[0].mxu0
      %v3471 = vadd.f32 0.0, %v3470
      %v3472 = vpop.f32.mrb[0].mxu0
      %3473 = vmatprep.mubr.bf16.mxu0 %v3329
      %3474 = vmatmul.mubr.bf16.gmra.mrb[0].mxu0 %v3209
      %v3475 = vpop.f32.mrb[0].mxu0
      %v3476 = vadd.f32 0.0, %v3475
      %v3477 = vpop.f32.mrb[0].mxu0
      %v3478 = vpop.f32.mrb[0].mxu0
      %v3479 = vadd.f32 0.0, %v3478
      %v3480 = vpop.f32.mrb[0].mxu0
      %3481 = vmatprep.mubr.bf16.mxu0 %v3332
      %3482 = vmatmul.mubr.bf16.gmra.mrb[0].mxu0 %v3212
      %v3483 = vpop.f32.mrb[0].mxu0
      %v3484 = vadd.f32 0.0, %v3483
      %v3485 = vpop.f32.mrb[0].mxu0
      %v3486 = vpop.f32.mrb[0].mxu0
      %v3487 = vadd.f32 0.0, %v3486
      %v3488 = vpop.f32.mrb[0].mxu0
      %3489 = vmatprep.mubr.bf16.mxu0 %v3335
      %3490 = vmatmul.mubr.bf16.gmra.mrb[0].mxu0 %v3215
      %v3491 = vpop.f32.mrb[0].mxu0
      %v3492 = vadd.f32 0.0, %v3491
      %v3493 = vpop.f32.mrb[0].mxu0
      %v3494 = vpop.f32.mrb[0].mxu0
      %v3495 = vadd.f32 0.0, %v3494
      %v3496 = vpop.f32.mrb[0].mxu0
      %3497 = vdwg.mxu0
      %v3498 = vpack.c.bf16 %v3375, %v3372
      %v3499 = vpack.c.bf16 %v3383, %v3380
      %v3500 = vpack.c.bf16 %v3391, %v3388
      %v3501 = vpack.c.bf16 %v3399, %v3396
      %v3502 = vpack.c.bf16 %v3407, %v3404
      %v3503 = vpack.c.bf16 %v3415, %v3412
      %v3504 = vpack.c.bf16 %v3423, %v3420
      %v3505 = vpack.c.bf16 %v3431, %v3428
      %v3506 = vpack.c.bf16 %v3439, %v3436
      %v3507 = vpack.c.bf16 %v3447, %v3444
      %v3508 = vpack.c.bf16 %v3455, %v3452
      %v3509 = vpack.c.bf16 %v3463, %v3460
      %v3510 = vpack.c.bf16 %v3471, %v3468
      %v3511 = vpack.c.bf16 %v3479, %v3476
      %v3512 = vpack.c.bf16 %v3487, %v3484
      %v3513 = vpack.c.bf16 %v3495, %v3492
      %v3530 = vunpack.c.l.b16 %v3498
      %v3531 = vunpack.c.h.b16 %v3498
      %v3532 = vunpack.c.l.b16 %v3499
      %v3533 = vunpack.c.h.b16 %v3499
      %v3534 = vunpack.c.l.b16 %v3500
      %v3535 = vunpack.c.h.b16 %v3500
      %v3536 = vunpack.c.l.b16 %v3501
      %v3537 = vunpack.c.h.b16 %v3501
      %v3538 = vunpack.c.l.b16 %v3502
      %v3539 = vunpack.c.h.b16 %v3502
      %v3540 = vunpack.c.l.b16 %v3503
      %v3541 = vunpack.c.h.b16 %v3503
      %v3542 = vunpack.c.l.b16 %v3504
      %v3543 = vunpack.c.h.b16 %v3504
      %v3544 = vunpack.c.l.b16 %v3505
      %v3545 = vunpack.c.h.b16 %v3505
      %v3546 = vunpack.c.l.b16 %v3506
      %v3547 = vunpack.c.h.b16 %v3506
      %v3548 = vunpack.c.l.b16 %v3507
      %v3549 = vunpack.c.h.b16 %v3507
      %v3550 = vunpack.c.l.b16 %v3508
      %v3551 = vunpack.c.h.b16 %v3508
      %v3552 = vunpack.c.l.b16 %v3509
      %v3553 = vunpack.c.h.b16 %v3509
      %v3554 = vunpack.c.l.b16 %v3510
      %v3555 = vunpack.c.h.b16 %v3510
      %v3556 = vunpack.c.l.b16 %v3511
      %v3557 = vunpack.c.h.b16 %v3511
      %v3558 = vunpack.c.l.b16 %v3512
      %v3559 = vunpack.c.h.b16 %v3512
      %v3560 = vunpack.c.l.b16 %v3513
      %v3561 = vunpack.c.h.b16 %v3513
      %v3562 = vpack.c.b16 %v3530, %v3530
      %v3563 = vpack.c.b16 %v3531, %v3531
      %v3564 = vpack.c.b16 %v3532, %v3532
      %v3565 = vpack.c.b16 %v3533, %v3533
      %v3566 = vpack.c.b16 %v3534, %v3534
      %v3567 = vpack.c.b16 %v3535, %v3535
      %v3568 = vpack.c.b16 %v3536, %v3536
      %v3569 = vpack.c.b16 %v3537, %v3537
      %v3570 = vpack.c.b16 %v3538, %v3538
      %v3571 = vpack.c.b16 %v3539, %v3539
      %v3572 = vpack.c.b16 %v3540, %v3540
      %v3573 = vpack.c.b16 %v3541, %v3541
      %v3574 = vpack.c.b16 %v3542, %v3542
      %v3575 = vpack.c.b16 %v3543, %v3543
      %v3576 = vpack.c.b16 %v3544, %v3544
      %v3577 = vpack.c.b16 %v3545, %v3545
      %v3578 = vpack.c.b16 %v3546, %v3546
      %v3579 = vpack.c.b16 %v3547, %v3547
      %v3580 = vpack.c.b16 %v3548, %v3548
      %v3581 = vpack.c.b16 %v3549, %v3549
      %v3582 = vpack.c.b16 %v3550, %v3550
      %v3583 = vpack.c.b16 %v3551, %v3551
      %v3584 = vpack.c.b16 %v3552, %v3552
      %v3585 = vpack.c.b16 %v3553, %v3553
      %v3586 = vpack.c.b16 %v3554, %v3554
      %v3587 = vpack.c.b16 %v3555, %v3555
      %v3588 = vpack.c.b16 %v3556, %v3556
      %v3589 = vpack.c.b16 %v3557, %v3557
      %v3590 = vpack.c.b16 %v3558, %v3558
      %v3591 = vpack.c.b16 %v3559, %v3559
      %v3592 = vpack.c.b16 %v3560, %v3560
      %v3593 = vpack.c.b16 %v3561, %v3561
      %3626 = vst.msk [vmem:[%s285] sm:$0xf] %vm665, %v3562
      %3627 = vst.msk [vmem:[%s285 + $0x4] sm:$0xf] %vm665, %v3563
      %3628 = vst.msk [vmem:[%s285 + $0x8] sm:$0xf] %vm665, %v3564
      %3629 = vst.msk [vmem:[%s285 + $0xc] sm:$0xf] %vm665, %v3565
      %3630 = vst.msk [vmem:[%s285 + $0x10] sm:$0xf] %vm665, %v3566
      %3631 = vst.msk [vmem:[%s285 + $0x14] sm:$0xf] %vm665, %v3567
      %3632 = vst.msk [vmem:[%s285 + $0x18] sm:$0xf] %vm665, %v3568
      %3633 = vst.msk [vmem:[%s285 + $0x1c] sm:$0xf] %vm665, %v3569
      %3634 = vst.msk [vmem:[%s285 + $0x20] sm:$0xf] %vm665, %v3570
      %3635 = vst.msk [vmem:[%s285 + $0x24] sm:$0xf] %vm665, %v3571
      %3636 = vst.msk [vmem:[%s285 + $0x28] sm:$0xf] %vm665, %v3572
      %3637 = vst.msk [vmem:[%s285 + $0x2c] sm:$0xf] %vm665, %v3573
      %3638 = vst.msk [vmem:[%s285 + $0x30] sm:$0xf] %vm665, %v3574
      %3639 = vst.msk [vmem:[%s285 + $0x34] sm:$0xf] %vm665, %v3575
      %3640 = vst.msk [vmem:[%s285 + $0x38] sm:$0xf] %vm665, %v3576
      %3641 = vst.msk [vmem:[%s285 + $0x3c] sm:$0xf] %vm665, %v3577
      %3642 = vst.msk [vmem:[%s285 + $0x40] sm:$0xf] %vm665, %v3578
      %3643 = vst.msk [vmem:[%s285 + $0x44] sm:$0xf] %vm665, %v3579
      %3644 = vst.msk [vmem:[%s285 + $0x48] sm:$0xf] %vm665, %v3580
      %3645 = vst.msk [vmem:[%s285 + $0x4c] sm:$0xf] %vm665, %v3581
      %3646 = vst.msk [vmem:[%s285 + $0x50] sm:$0xf] %vm665, %v3582
      %3647 = vst.msk [vmem:[%s285 + $0x54] sm:$0xf] %vm665, %v3583
      %3648 = vst.msk [vmem:[%s285 + $0x58] sm:$0xf] %vm665, %v3584
      %3649 = vst.msk [vmem:[%s285 + $0x5c] sm:$0xf] %vm665, %v3585
      %3650 = vst.msk [vmem:[%s285 + $0x60] sm:$0xf] %vm665, %v3586
      %3651 = vst.msk [vmem:[%s285 + $0x64] sm:$0xf] %vm665, %v3587
      %3652 = vst.msk [vmem:[%s285 + $0x68] sm:$0xf] %vm665, %v3588
      %3653 = vst.msk [vmem:[%s285 + $0x6c] sm:$0xf] %vm665, %v3589
      %3654 = vst.msk [vmem:[%s285 + $0x70] sm:$0xf] %vm665, %v3590
      %3655 = vst.msk [vmem:[%s285 + $0x74] sm:$0xf] %vm665, %v3591
      %3656 = vst.msk [vmem:[%s285 + $0x78] sm:$0xf] %vm665, %v3592
      %3657 = vst.msk [vmem:[%s285 + $0x7c] sm:$0xf] %vm665, %v3593
      %v3658 = vsel %vm355, %v3372, 0.0
      %v3659 = vsel %vm355, %v3375, 0.0
      %v3660 = vadd.f32 %v3658, %v3659
      %v3661 = vsel %vm355, %v3380, 0.0
      %v3662 = vadd.f32 %v3660, %v3661
      %v3663 = vsel %vm355, %v3383, 0.0
      %v3664 = vadd.f32 %v3662, %v3663
      %v3665 = vsel %vm355, %v3388, 0.0
      %v3666 = vadd.f32 %v3664, %v3665
      %v3667 = vsel %vm355, %v3391, 0.0
      %v3668 = vadd.f32 %v3666, %v3667
      %v3669 = vsel %vm355, %v3396, 0.0
      %v3670 = vadd.f32 %v3668, %v3669
      %v3671 = vsel %vm355, %v3399, 0.0
      %v3672 = vadd.f32 %v3670, %v3671
      %v3673 = vsel %vm355, %v3404, 0.0
      %v3674 = vadd.f32 %v3672, %v3673
      %v3675 = vsel %vm355, %v3407, 0.0
      %v3676 = vadd.f32 %v3674, %v3675
      %v3677 = vsel %vm355, %v3412, 0.0
      %v3678 = vadd.f32 %v3676, %v3677
      %v3679 = vsel %vm355, %v3415, 0.0
      %v3680 = vadd.f32 %v3678, %v3679
      %v3681 = vsel %vm355, %v3420, 0.0
      %v3682 = vadd.f32 %v3680, %v3681
      %v3683 = vsel %vm355, %v3423, 0.0
      %v3684 = vadd.f32 %v3682, %v3683
      %v3685 = vsel %vm355, %v3428, 0.0
      %v3686 = vadd.f32 %v3684, %v3685
      %v3687 = vsel %vm355, %v3431, 0.0
      %v3688 = vadd.f32 %v3686, %v3687
      %v3689 = vsel %vm355, %v3436, 0.0
      %v3690 = vadd.f32 %v3688, %v3689
      %v3691 = vsel %vm355, %v3439, 0.0
      %v3692 = vadd.f32 %v3690, %v3691
      %v3693 = vsel %vm355, %v3444, 0.0
      %v3694 = vadd.f32 %v3692, %v3693
      %v3695 = vsel %vm355, %v3447, 0.0
      %v3696 = vadd.f32 %v3694, %v3695
      %v3697 = vsel %vm355, %v3452, 0.0
      %v3698 = vadd.f32 %v3696, %v3697
      %v3699 = vsel %vm355, %v3455, 0.0
      %v3700 = vadd.f32 %v3698, %v3699
      %v3701 = vsel %vm355, %v3460, 0.0
      %v3702 = vadd.f32 %v3700, %v3701
      %v3703 = vsel %vm355, %v3463, 0.0
      %v3704 = vadd.f32 %v3702, %v3703
      %v3705 = vsel %vm355, %v3468, 0.0
      %v3706 = vadd.f32 %v3704, %v3705
      %v3707 = vsel %vm355, %v3471, 0.0
      %v3708 = vadd.f32 %v3706, %v3707
      %v3709 = vsel %vm355, %v3476, 0.0
      %v3710 = vadd.f32 %v3708, %v3709
      %v3711 = vsel %vm355, %v3479, 0.0
      %v3712 = vadd.f32 %v3710, %v3711
      %v3713 = vsel %vm355, %v3484, 0.0
      %v3714 = vadd.f32 %v3712, %v3713
      %v3715 = vsel %vm355, %v3487, 0.0
      %v3716 = vadd.f32 %v3714, %v3715
      %v3717 = vsel %vm355, %v3492, 0.0
      %v3718 = vadd.f32 %v3716, %v3717
      %v3719 = vsel %vm355, %v3495, 0.0
      %v3720 = vadd.f32 %v3718, %v3719
      %v3721 = vrot.slane %v3720, 4
      %v3722 = vadd.f32 %v3720, %v3721
      %v3723 = vrot.slane %v3722, 2
      %v3724 = vadd.f32 %v3722, %v3723
      %v3725 = vrot.slane %v3724, 1
      %v3726 = vadd.f32 %v3724, %v3725
      %v3727 = vmul.f32 %v3372, %v3372
      %v3728 = vmul.f32 %v3375, %v3375
      %v3729 = vmul.f32 %v3380, %v3380
      %v3730 = vmul.f32 %v3383, %v3383
      %v3731 = vmul.f32 %v3388, %v3388
      %v3732 = vmul.f32 %v3391, %v3391
      %v3733 = vmul.f32 %v3396, %v3396
      %v3734 = vmul.f32 %v3399, %v3399
      %v3735 = vmul.f32 %v3404, %v3404
      %v3736 = vmul.f32 %v3407, %v3407
      %v3737 = vmul.f32 %v3412, %v3412
      %v3738 = vmul.f32 %v3415, %v3415
      %v3739 = vmul.f32 %v3420, %v3420
      %v3740 = vmul.f32 %v3423, %v3423
      %v3741 = vmul.f32 %v3428, %v3428
      %v3742 = vmul.f32 %v3431, %v3431
      %v3743 = vmul.f32 %v3436, %v3436
      %v3744 = vmul.f32 %v3439, %v3439
      %v3745 = vmul.f32 %v3444, %v3444
      %v3746 = vmul.f32 %v3447, %v3447
      %v3747 = vmul.f32 %v3452, %v3452
      %v3748 = vmul.f32 %v3455, %v3455
      %v3749 = vmul.f32 %v3460, %v3460
      %v3750 = vmul.f32 %v3463, %v3463
      %v3751 = vmul.f32 %v3468, %v3468
      %v3752 = vmul.f32 %v3471, %v3471
      %v3753 = vmul.f32 %v3476, %v3476
      %v3754 = vmul.f32 %v3479, %v3479
      %v3755 = vmul.f32 %v3484, %v3484
      %v3756 = vmul.f32 %v3487, %v3487
      %v3757 = vmul.f32 %v3492, %v3492
      %v3758 = vmul.f32 %v3495, %v3495
      %v3759 = vsel %vm355, %v3727, 0.0
      %v3760 = vsel %vm355, %v3728, 0.0
      %v3761 = vadd.f32 %v3759, %v3760
      %v3762 = vsel %vm355, %v3729, 0.0
      %v3763 = vadd.f32 %v3761, %v3762
      %v3764 = vsel %vm355, %v3730, 0.0
      %v3765 = vadd.f32 %v3763, %v3764
      %v3766 = vsel %vm355, %v3731, 0.0
      %v3767 = vadd.f32 %v3765, %v3766
      %v3768 = vsel %vm355, %v3732, 0.0
      %v3769 = vadd.f32 %v3767, %v3768
      %v3770 = vsel %vm355, %v3733, 0.0
      %v3771 = vadd.f32 %v3769, %v3770
      %v3772 = vsel %vm355, %v3734, 0.0
      %v3773 = vadd.f32 %v3771, %v3772
      %v3774 = vsel %vm355, %v3735, 0.0
      %v3775 = vadd.f32 %v3773, %v3774
      %v3776 = vsel %vm355, %v3736, 0.0
      %v3777 = vadd.f32 %v3775, %v3776
      %v3778 = vsel %vm355, %v3737, 0.0
      %v3779 = vadd.f32 %v3777, %v3778
      %v3780 = vsel %vm355, %v3738, 0.0
      %v3781 = vadd.f32 %v3779, %v3780
      %v3782 = vsel %vm355, %v3739, 0.0
      %v3783 = vadd.f32 %v3781, %v3782
      %v3784 = vsel %vm355, %v3740, 0.0
      %v3785 = vadd.f32 %v3783, %v3784
      %v3786 = vsel %vm355, %v3741, 0.0
      %v3787 = vadd.f32 %v3785, %v3786
      %v3788 = vsel %vm355, %v3742, 0.0
      %v3789 = vadd.f32 %v3787, %v3788
      %v3790 = vsel %vm355, %v3743, 0.0
      %v3791 = vadd.f32 %v3789, %v3790
      %v3792 = vsel %vm355, %v3744, 0.0
      %v3793 = vadd.f32 %v3791, %v3792
      %v3794 = vsel %vm355, %v3745, 0.0
      %v3795 = vadd.f32 %v3793, %v3794
      %v3796 = vsel %vm355, %v3746, 0.0
      %v3797 = vadd.f32 %v3795, %v3796
      %v3798 = vsel %vm355, %v3747, 0.0
      %v3799 = vadd.f32 %v3797, %v3798
      %v3800 = vsel %vm355, %v3748, 0.0
      %v3801 = vadd.f32 %v3799, %v3800
      %v3802 = vsel %vm355, %v3749, 0.0
      %v3803 = vadd.f32 %v3801, %v3802
      %v3804 = vsel %vm355, %v3750, 0.0
      %v3805 = vadd.f32 %v3803, %v3804
      %v3806 = vsel %vm355, %v3751, 0.0
      %v3807 = vadd.f32 %v3805, %v3806
      %v3808 = vsel %vm355, %v3752, 0.0
      %v3809 = vadd.f32 %v3807, %v3808
      %v3810 = vsel %vm355, %v3753, 0.0
      %v3811 = vadd.f32 %v3809, %v3810
      %v3812 = vsel %vm355, %v3754, 0.0
      %v3813 = vadd.f32 %v3811, %v3812
      %v3814 = vsel %vm355, %v3755, 0.0
      %v3815 = vadd.f32 %v3813, %v3814
      %v3816 = vsel %vm355, %v3756, 0.0
      %v3817 = vadd.f32 %v3815, %v3816
      %v3818 = vsel %vm355, %v3757, 0.0
      %v3819 = vadd.f32 %v3817, %v3818
      %v3820 = vsel %vm355, %v3758, 0.0
      %v3821 = vadd.f32 %v3819, %v3820
      %v3822 = vrot.slane %v3821, 4
      %v3823 = vadd.f32 %v3821, %v3822
      %v3824 = vrot.slane %v3823, 2
      %v3825 = vadd.f32 %v3823, %v3824
      %v3826 = vrot.slane %v3825, 1
      %v3827 = vadd.f32 %v3825, %v3826
      %vm3828 = vcmask 1040384
      %v3829 = vsel %vm3828, %v3726, %v3827
      %vm3830 = vcmask 123904
      %3831 = vst.msk [vmem:[%s289] sm:$0x3] %vm3830, %v3829
      %p3832 = scmp.lt.s32.totalorder %s19, 1
      %s3833 = scalar_select %p3832, %s19, 1
      %s3834 = smul.addr %s3833, 32
      %s3835 = smul.addr %s3834, 4
      %s3836 = scalar_lea.vmem %s6, %s3835
      %p3837 = scmp.lt.s32.totalorder %s19, 1
      %s3838 = scalar_select %p3837, %s19, 1
      %s3839 = smul.addr %s3838, 2
      %s3840 = scalar_lea.vmem %s7, %s3839
      // Predicated region
      $region45: #{bottleneck_ibn_nhwc.5} parent=43 // pred_check
        %p3841 = pneg %p168
      $region46: #{bottleneck_ibn_nhwc.5} parent=43 // pred_check_branch
        %3843 = sbr.rel (%p3841) target = $region48
      $region47: #{bottleneck_ibn_nhwc.5} parent=43 // pred_region
        _
      $region48: #{bottleneck_ibn_nhwc.5} parent=43 // pred_fallthru
        _
      // Predicated region
      $region49: #{bottleneck_ibn_nhwc.5} parent=43 // pred_check
        %p3844 = pneg %p194
      $region50: #{bottleneck_ibn_nhwc.5} parent=43 // pred_check_branch
        %3846 = sbr.rel (%p3844) target = $region52
      $region51: #{bottleneck_ibn_nhwc.5} parent=43 // pred_region
        _
      $region52: #{bottleneck_ibn_nhwc.5} parent=43 // pred_fallthru
        _
    $region44: #{bottleneck_ibn_nhwc.5} parent=5 // pred_fallthru
      _
    %p3847 = scmp.le.s32.totalorder 2, %s14
    // Predicated region
    $region53: #{bottleneck_ibn_nhwc.5} parent=5 // pred_check
      %p3848 = pneg %p3847
    $region54: #{bottleneck_ibn_nhwc.5} parent=5 // pred_check_branch
      %3850 = sbr.rel (%p3848) target = $region56
    $region55: #{bottleneck_ibn_nhwc.5} parent=5 // pred_region
      %s3851 = ssub.s32 %s14, 2
      // Predicated region
      $region57: #{bottleneck_ibn_nhwc.5} parent=55 // pred_check
        %p3852 = pneg %p174
      $region58: #{bottleneck_ibn_nhwc.5} parent=55 // pred_check_branch
        %3854 = sbr.rel (%p3852) target = $region60
      $region59: #{bottleneck_ibn_nhwc.5} parent=55 // pred_region
        %p3855 = scmp.lt.s32.totalorder %s20, 1
        %s3856 = scalar_select %p3855, %s20, 1
        %s3857 = smul.addr %s3856, 32
        %s3858 = smul.addr %s3857, 4
        %s3859 = scalar_lea.vmem %s6, %s3858
      $region60: #{bottleneck_ibn_nhwc.5} parent=55 // pred_fallthru
        _
      // Predicated region
      $region61: #{bottleneck_ibn_nhwc.5} parent=55 // pred_check
        %p3860 = pneg %p200
      $region62: #{bottleneck_ibn_nhwc.5} parent=55 // pred_check_branch
        %3862 = sbr.rel (%p3860) target = $region64
      $region63: #{bottleneck_ibn_nhwc.5} parent=55 // pred_region
        %p3863 = scmp.lt.s32.totalorder %s20, 1
        %s3864 = scalar_select %p3863, %s20, 1
        %s3865 = smul.addr %s3864, 2
        %s3866 = scalar_lea.vmem %s7, %s3865
      $region64: #{bottleneck_ibn_nhwc.5} parent=55 // pred_fallthru
        _
    $region56: #{bottleneck_ibn_nhwc.5} parent=5 // pred_fallthru
      _
  $region6: #{bottleneck_ibn_nhwc.5} parent=0 // loop_footer
    %s18 = sadd.s32 1, %s14
  $region7: #{bottleneck_ibn_nhwc.5} parent=0 // loop_footer_branch
    %13 = sbr.rel target = $region3
  $region8: #{bottleneck_ibn_nhwc.5} parent=0 // loop_exit
    _

</llo_original>
